<compile_context>
chip_gen: v5e
topology: v5e:2x2
jax: 0.10.0
libtpu: 0.0.40
codegen_flags: <defaults>
</compile_context>

<pallas_src>
import functools
import math

import jax
import jax.numpy as jnp
from jax.experimental import pallas as pl
from jax.experimental.pallas import tpu as pltpu


# --------------------------------------------------------------------------- #
# Kernel
# --------------------------------------------------------------------------- #
def _layernorm_f32(x, g, b, eps=1e-5):
    mu = jnp.mean(x, axis=-1, keepdims=True)
    var = jnp.mean((x - mu) ** 2, axis=-1, keepdims=True)
    return (x - mu) * jax.lax.rsqrt(var + eps) * g + b


def _rab_kernel(x_ref, ln1g_ref, ln1b_ref, wqkv_ref, bqkv_ref,
                wout_ref, bout_ref, ln2g_ref, ln2b_ref,
                wfc_ref, bfc_ref, wproj_ref, bproj_ref, o_ref,
                *, num_heads, n_true, mlp_bf16):
    bt_tile, n_pad, d = x_ref.shape
    hd = d // num_heads
    m_rows = bt_tile * n_pad
    bh = bt_tile * num_heads

    # Rows ordered (batch, seq); flatten is layout-clean because n_pad % 8 == 0.
    x = x_ref[...].astype(jnp.float32).reshape(m_rows, d)

    # -------- attention branch: x + out_proj(MHA(ln_1(x))) --------
    h = _layernorm_f32(x, ln1g_ref[...], ln1b_ref[...])
    # wqkv_ref is pre-transposed (d, 3d) bf16 with 1/sqrt(hd) folded into q cols.
    qkv = jnp.dot(h.astype(jnp.bfloat16), wqkv_ref[...],
                  preferred_element_type=jnp.float32) + bqkv_ref[...]   # (M, 3d) f32
    qkv_b = qkv.astype(jnp.bfloat16)

    def split_heads(t2d):
        # (M, d) -> (bt*H, n, hd), using only minor-2-dim swaps and
        # sublane-aligned reshapes (hd % 8 == 0 keeps them cheap).
        t = t2d.reshape(bt_tile, n_pad, d)
        t = jnp.swapaxes(t, 1, 2)                       # (bt, d, n)
        t = t.reshape(bh, hd, n_pad)                    # (bt*H, hd, n)
        return jnp.swapaxes(t, 1, 2)                    # (bt*H, n, hd)

    q = split_heads(qkv_b[:, :d])            # softmax scale already folded in
    k = split_heads(qkv_b[:, d:2 * d])
    v = split_heads(qkv_b[:, 2 * d:])

    s = jnp.einsum('bqe,bke->bqk', q, k,
                   preferred_element_type=jnp.float32)  # (bt*H, n, n)
    if n_pad != n_true:                                  # mask padded key columns
        kmask = jax.lax.broadcasted_iota(jnp.int32, (1, 1, n_pad), 2) < n_true
        s = jnp.where(kmask, s, -1e30)
    s = s - jnp.max(s, axis=-1, keepdims=True)
    p = jnp.exp(s)
    p = p * pl.reciprocal(jnp.sum(p, axis=-1, keepdims=True), approx=True)
    o = jnp.einsum('bqk,bke->bqe', p.astype(jnp.bfloat16), v,
                   preferred_element_type=jnp.float32)  # (bt*H, n, hd)

    # Merge heads back to (M, d) rows ordered (batch, seq).
    o = jnp.swapaxes(o.astype(jnp.bfloat16), 1, 2)      # (bt*H, hd, n)
    o = o.reshape(bt_tile, d, n_pad)                    # merge (H, hd) -> d
    o = jnp.swapaxes(o, 1, 2).reshape(m_rows, d)        # (M, d) bf16

    attn_out = jnp.dot(o, wout_ref[...],
                       preferred_element_type=jnp.float32) + bout_ref[...]
    x = x + attn_out                                    # residual in f32

    # -------- MLP branch: x + c_proj(QuickGELU(c_fc(ln_2(x)))) --------
    h2 = _layernorm_f32(x, ln2g_ref[...], ln2b_ref[...])
    mhid = jnp.dot(h2.astype(jnp.bfloat16), wfc_ref[...],
                   preferred_element_type=jnp.float32) + bfc_ref[...]   # (M, 4d) f32
    if mlp_bf16:
        mb = mhid.astype(jnp.bfloat16)
        mb = mb * jax.nn.sigmoid(1.702 * mb)            # QuickGELU in bf16 (v6e/v7x)
    else:
        mb = (mhid * jax.nn.sigmoid(1.702 * mhid)).astype(jnp.bfloat16)
    mlp_out = jnp.dot(mb, wproj_ref[...],
                      preferred_element_type=jnp.float32) + bproj_ref[...]
    x = x + mlp_out

    o_ref[...] = x.reshape(bt_tile, n_pad, d).astype(o_ref.dtype)


# --------------------------------------------------------------------------- #
# Wrapper helpers
# --------------------------------------------------------------------------- #
def _device_kind():
    try:
        return jax.devices()[0].device_kind.lower()
    except Exception:
        return ""


def _vmem_capacity_bytes():
    try:
        cap = int(pltpu.get_tpu_info().vmem_capacity_bytes)
        if cap > 0:
            return cap
    except Exception:
        pass
    return 128 << 20


def _step_temp_bytes(bt_tile, n_pad, d, num_heads):
    """Rough upper bound on in-kernel temporaries for one grid step."""
    m = bt_tile * n_pad
    f32, bf16 = 4, 2
    b = 4 * m * d * f32                                   # x, ln out, attn/mlp out
    b += m * 3 * d * (f32 + 2 * bf16)                     # qkv f32 + bf16 + head split
    b += 2 * bt_tile * num_heads * n_pad * n_pad * f32    # scores + probs
    b += m * d * (f32 + 2 * bf16)                         # head merge copies
    b += m * 4 * d * (f32 + bf16)                         # mlp hidden f32 + bf16
    return b


def _pick_bt_tile(bt, n_pad, d, num_heads, x_itemsize, weight_bytes, budget, num_tc):
    """Largest batch tile that fits the VMEM budget; on multi-TC chips prefer a
    grid that splits evenly across the TensorCores."""
    divs = sorted((t for t in range(1, bt + 1) if bt % t == 0), reverse=True)

    def fits(t):
        need = (weight_bytes + 4 * t * n_pad * d * x_itemsize
                + _step_temp_bytes(t, n_pad, d, num_heads))
        return need <= budget

    fitting = [t for t in divs if fits(t)] or [1]
    if num_tc > 1:
        for t in fitting:
            g = bt // t
            if g >= num_tc and g % num_tc == 0:
                return t
    return fitting[0]


def preprocess_params(params, num_heads):
    """One-time per-layer weight preprocessing (cache this in a real model):
    fold 1/sqrt(head_dim) into Wq/bq, transpose, cast matmul weights to bf16."""
    d = params["ln1_g"].shape[0]
    hd = d // num_heads
    scale = 1.0 / math.sqrt(hd)
    f32, bf16 = jnp.float32, jnp.bfloat16
    wqkv = params["wqkv"].astype(f32).at[:d].multiply(scale)   # (3d, d), q rows scaled
    bqkv = params["bqkv"].astype(f32).at[:d].multiply(scale)   # (3d,)
    return {
        "ln1_g": params["ln1_g"].astype(f32).reshape(1, d),
        "ln1_b": params["ln1_b"].astype(f32).reshape(1, d),
        "wqkv_t": wqkv.T.astype(bf16),                         # (d, 3d)
        "bqkv": bqkv.reshape(1, 3 * d),
        "wout_t": params["wout"].T.astype(bf16),               # (d, d)
        "bout": params["bout"].astype(f32).reshape(1, d),
        "ln2_g": params["ln2_g"].astype(f32).reshape(1, d),
        "ln2_b": params["ln2_b"].astype(f32).reshape(1, d),
        "wfc_t": params["wfc"].T.astype(bf16),                 # (d, 4d)
        "bfc": params["bfc"].astype(f32).reshape(1, 4 * d),
        "wproj_t": params["wproj"].T.astype(bf16),             # (4d, d)
        "bproj": params["bproj"].astype(f32).reshape(1, d),
    }


def residual_attention_block(x, params, num_heads, *, bt_tile=None, prepped=None):
    """x: (n, bt, d) -> (n, bt, d)  (PyTorch nn.MultiheadAttention layout)."""
    n, bt, d = x.shape
    assert d % num_heads == 0
    if prepped is None:
        prepped = preprocess_params(params, num_heads)   # cache per layer in real use

    kind = _device_kind()
    num_tc = 2 if "v7" in kind else 1                    # v7x: 2 TensorCores / chip
    mlp_bf16 = not any(v in kind for v in ("v2", "v3", "v4", "v5"))

    # Pad seq_len to a multiple of 8 so the (bt_tile, n, d) -> (M, d) flatten and
    # the head split stay sublane-aligned (no per-step relayout copies).
    n_pad = -(-n // 8) * 8

    # TODO(synk): the (n,bt,d)<->(bt,n,d) transposes cost extra HBM passes; in a
    # full model, produce/consume the (bt, n, d) layout directly around this block.
    xb = jnp.transpose(x, (1, 0, 2))                     # (bt, n, d)
    if n_pad != n:
        xb = jnp.pad(xb, ((0, 0), (0, n_pad - n), (0, 0)))

    const_args = (prepped["ln1_g"], prepped["ln1_b"],
                  prepped["wqkv_t"], prepped["bqkv"],
                  prepped["wout_t"], prepped["bout"],
                  prepped["ln2_g"], prepped["ln2_b"],
                  prepped["wfc_t"], prepped["bfc"],
                  prepped["wproj_t"], prepped["bproj"])
    weight_bytes = sum(int(a.size) * a.dtype.itemsize for a in const_args)

    cap = _vmem_capacity_bytes()
    budget = cap - (8 << 20)                             # leave headroom under capacity

    if bt_tile is None:
        bt_tile = _pick_bt_tile(bt, n_pad, d, num_heads, x.dtype.itemsize,
                                weight_bytes, budget, num_tc)
    assert bt % bt_tile == 0
    grid_b = bt // bt_tile

    need = (weight_bytes + 4 * bt_tile * n_pad * d * x.dtype.itemsize
            + _step_temp_bytes(bt_tile, n_pad, d, num_heads) + (4 << 20))
    vmem_limit = int(max(min(max(need, 64 << 20), budget), 16 << 20))

    m_tot = bt * n
    cost = pl.CostEstimate(
        flops=int(24 * m_tot * d * d + 4 * bt * n * n * d),
        transcendentals=int(bt * num_heads * n * n + 4 * m_tot * d),
        bytes_accessed=int(2 * m_tot * d * x.dtype.itemsize + weight_bytes),
    )

    kernel = functools.partial(_rab_kernel, num_heads=num_heads, n_true=n,
                               mlp_bf16=mlp_bf16)
    data_spec = pl.BlockSpec((bt_tile, n_pad, d), lambda b: (b, 0, 0))

    def run(single_buffer_weights):
        def const_spec(shape):
            idx = lambda b: (0,) * len(shape)
            if single_buffer_weights:
                # Constant index_map => no pipelining benefit from 2 buffers;
                # single-buffering halves the resident weight footprint (v7x).
                return pl.BlockSpec(shape, idx, pipeline_mode=pl.Buffered(1))
            return pl.BlockSpec(shape, idx)

        return pl.pallas_call(
            kernel,
            out_shape=jax.ShapeDtypeStruct((bt, n_pad, d), x.dtype),
            grid=(grid_b,),
            in_specs=[data_spec] + [const_spec(a.shape) for a in const_args],
            out_specs=data_spec,
            compiler_params=pltpu.CompilerParams(
                dimension_semantics=("parallel",),
                vmem_limit_bytes=vmem_limit),
            cost_estimate=cost,
        )(xb, *const_args)

    try:
        out = run(True)          # weights single-buffered
    except Exception:            # pipeline_mode / Buffered(1) unsupported -> default
        out = run(False)

    if n_pad != n:
        out = out[:, :n, :]
    return jnp.transpose(out, (1, 0, 2))                 # back to (n, bt, d)


# --------------------------------------------------------------------------- #
# Pure-JAX reference + test
# --------------------------------------------------------------------------- #
def _reference_forward(x, params, num_heads):
    n, bt, d = x.shape
    hd = d // num_heads

    def ln(t, g, b):
        mu = t.mean(-1, keepdims=True)
        var = ((t - mu) ** 2).mean(-1, keepdims=True)
        return (t - mu) / jnp.sqrt(var + 1e-5) * g + b

    h = ln(x, params["ln1_g"], params["ln1_b"])
    qkv = h @ params["wqkv"].T + params["bqkv"]
    q, k, v = jnp.split(qkv, 3, axis=-1)

    def to_heads(t):                                     # (n, bt, d) -> (bt, H, n, hd)
        return jnp.transpose(t.reshape(n, bt, num_heads, hd), (1, 2, 0, 3))

    qh, kh, vh = to_heads(q), to_heads(k), to_heads(v)
    s = jnp.einsum('bhqe,bhke->bhqk', qh / math.sqrt(hd), kh)
    p = jax.nn.softmax(s, axis=-1)
    o = jnp.einsum('bhqk,bhke->bhqe', p, vh)
    o = jnp.transpose(o, (2, 0, 1, 3)).reshape(n, bt, d)
    o = o @ params["wout"].T + params["bout"]
    x = x + o

    h2 = ln(x, params["ln2_g"], params["ln2_b"])
    m = h2 @ params["wfc"].T + params["bfc"]
    m = m * jax.nn.sigmoid(1.702 * m)
    m = m @ params["wproj"].T + params["bproj"]
    return x + m


def _init_params(key, d):
    ks = jax.random.split(key, 6)
    s = 0.02
    return {
        "ln1_g": jnp.ones((d,), jnp.float32),
        "ln1_b": jnp.zeros((d,), jnp.float32),
        "wqkv": s * jax.random.normal(ks[0], (3 * d, d), jnp.float32),
        "bqkv": s * jax.random.normal(ks[1], (3 * d,), jnp.float32),
        "wout": s * jax.random.normal(ks[2], (d, d), jnp.float32),
        "bout": jnp.zeros((d,), jnp.float32),
        "ln2_g": jnp.ones((d,), jnp.float32),
        "ln2_b": jnp.zeros((d,), jnp.float32),
        "wfc": s * jax.random.normal(ks[3], (4 * d, d), jnp.float32),
        "bfc": s * jax.random.normal(ks[4], (4 * d,), jnp.float32),
        "wproj": s * jax.random.normal(ks[5], (d, 4 * d), jnp.float32),
        "bproj": jnp.zeros((d,), jnp.float32),
    }


if __name__ == "__main__":
    # Small shapes: seq n=8, batch*time bt=2, d_model=32, 4 heads (head_dim=8).
    n, bt, d, num_heads = 8, 2, 32, 4
    key = jax.random.PRNGKey(0)
    kx, kp = jax.random.split(key)
    x = jax.random.normal(kx, (n, bt, d), jnp.float32)
    params = _init_params(kp, d)

    prepped = preprocess_params(params, num_heads)       # cached per layer
    out = residual_attention_block(x, params, num_heads, prepped=prepped)
    out = jax.block_until_ready(out)

    ref = _reference_forward(x, params, num_heads)
    assert out.shape == (n, bt, d)
    # bf16 matmul operands (fp32 accumulation) + approx reciprocal => looser tol.
    assert jnp.allclose(out, ref, rtol=1e-2, atol=1e-2), "mismatch vs reference"

    print("KERNEL_OK")
</pallas_src>

<mosaic_0001>
module attributes {stable_mosaic.version = 11 : i64} {
  func.func @_rab_kernel(%arg0: i32, %arg1: memref<2x8x32xf32, #tpu.memory_space<vmem>>, %arg2: memref<1x32xf32, #tpu.memory_space<vmem>>, %arg3: memref<1x32xf32, #tpu.memory_space<vmem>>, %arg4: memref<32x96xbf16, #tpu.memory_space<vmem>>, %arg5: memref<1x96xf32, #tpu.memory_space<vmem>>, %arg6: memref<32x32xbf16, #tpu.memory_space<vmem>>, %arg7: memref<1x32xf32, #tpu.memory_space<vmem>>, %arg8: memref<1x32xf32, #tpu.memory_space<vmem>>, %arg9: memref<1x32xf32, #tpu.memory_space<vmem>>, %arg10: memref<32x128xbf16, #tpu.memory_space<vmem>>, %arg11: memref<1x128xf32, #tpu.memory_space<vmem>>, %arg12: memref<128x32xbf16, #tpu.memory_space<vmem>>, %arg13: memref<1x32xf32, #tpu.memory_space<vmem>>, %arg14: memref<2x8x32xf32, #tpu.memory_space<vmem>>) attributes {dimension_semantics = [#tpu.dimension_semantics<parallel>], iteration_bounds = array<i64: 1>, scalar_prefetch = 0 : i64, scratch_operands = 0 : i64, tpu.core_type = #tpu.core_type<tc>, window_params = [{transform_indices = @transform_0, window_bounds = array<i64: 2, 8, 32>}, {pipeline_mode = #tpu.pipeline_mode<synchronous>, transform_indices = @transform_1, window_bounds = array<i64: 1, 32>}, {pipeline_mode = #tpu.pipeline_mode<synchronous>, transform_indices = @transform_2, window_bounds = array<i64: 1, 32>}, {pipeline_mode = #tpu.pipeline_mode<synchronous>, transform_indices = @transform_3, window_bounds = array<i64: 32, 96>}, {pipeline_mode = #tpu.pipeline_mode<synchronous>, transform_indices = @transform_4, window_bounds = array<i64: 1, 96>}, {pipeline_mode = #tpu.pipeline_mode<synchronous>, transform_indices = @transform_5, window_bounds = array<i64: 32, 32>}, {pipeline_mode = #tpu.pipeline_mode<synchronous>, transform_indices = @transform_6, window_bounds = array<i64: 1, 32>}, {pipeline_mode = #tpu.pipeline_mode<synchronous>, transform_indices = @transform_7, window_bounds = array<i64: 1, 32>}, {pipeline_mode = #tpu.pipeline_mode<synchronous>, transform_indices = @transform_8, window_bounds = array<i64: 1, 32>}, {pipeline_mode = #tpu.pipeline_mode<synchronous>, transform_indices = @transform_9, window_bounds = array<i64: 32, 128>}, {pipeline_mode = #tpu.pipeline_mode<synchronous>, transform_indices = @transform_10, window_bounds = array<i64: 1, 128>}, {pipeline_mode = #tpu.pipeline_mode<synchronous>, transform_indices = @transform_11, window_bounds = array<i64: 128, 32>}, {pipeline_mode = #tpu.pipeline_mode<synchronous>, transform_indices = @transform_12, window_bounds = array<i64: 1, 32>}, {transform_indices = @transform_13, window_bounds = array<i64: 2, 8, 32>}]} {
    %c0 = arith.constant 0 : index
    %c0_0 = arith.constant 0 : index
    %c0_1 = arith.constant 0 : index
    %0 = vector.load %arg1[%c0, %c0_0, %c0_1] : memref<2x8x32xf32, #tpu.memory_space<vmem>>, vector<2x8x32xf32>
    %1 = vector.shape_cast %0 : vector<2x8x32xf32> to vector<16x32xf32>
    %c0_2 = arith.constant 0 : index
    %c0_3 = arith.constant 0 : index
    %2 = vector.load %arg2[%c0_2, %c0_3] : memref<1x32xf32, #tpu.memory_space<vmem>>, vector<1x32xf32>
    %c0_4 = arith.constant 0 : index
    %c0_5 = arith.constant 0 : index
    %3 = vector.load %arg3[%c0_4, %c0_5] : memref<1x32xf32, #tpu.memory_space<vmem>>, vector<1x32xf32>
    %cst = arith.constant dense<0.000000e+00> : vector<16xf32>
    %4 = vector.multi_reduction <add>, %1, %cst [1] : vector<16x32xf32> to vector<16xf32>
    %5 = vector.shape_cast %4 : vector<16xf32> to vector<16x1xf32>
    %cst_6 = arith.constant 3.200000e+01 : f32
    %6 = vector.broadcast %cst_6 : f32 to vector<16x1xf32>
    %7 = arith.divf %5, %6 : vector<16x1xf32>
    %8 = vector.broadcast %7 : vector<16x1xf32> to vector<16x32xf32>
    %9 = arith.subf %1, %8 : vector<16x32xf32>
    %10 = arith.mulf %9, %9 : vector<16x32xf32>
    %cst_7 = arith.constant dense<0.000000e+00> : vector<16xf32>
    %11 = vector.multi_reduction <add>, %10, %cst_7 [1] : vector<16x32xf32> to vector<16xf32>
    %12 = vector.shape_cast %11 : vector<16xf32> to vector<16x1xf32>
    %cst_8 = arith.constant 3.200000e+01 : f32
    %13 = vector.broadcast %cst_8 : f32 to vector<16x1xf32>
    %14 = arith.divf %12, %13 : vector<16x1xf32>
    %15 = vector.broadcast %7 : vector<16x1xf32> to vector<16x32xf32>
    %16 = arith.subf %1, %15 : vector<16x32xf32>
    %cst_9 = arith.constant 9.99999974E-6 : f32
    %17 = vector.broadcast %cst_9 : f32 to vector<16x1xf32>
    %18 = arith.addf %14, %17 : vector<16x1xf32>
    %19 = math.rsqrt %18 : vector<16x1xf32>
    %20 = vector.broadcast %19 : vector<16x1xf32> to vector<16x32xf32>
    %21 = arith.mulf %16, %20 : vector<16x32xf32>
    %22 = vector.broadcast %2 : vector<1x32xf32> to vector<16x32xf32>
    %23 = arith.mulf %21, %22 : vector<16x32xf32>
    %24 = vector.broadcast %3 : vector<1x32xf32> to vector<16x32xf32>
    %25 = arith.addf %23, %24 : vector<16x32xf32>
    %26 = arith.truncf %25 : vector<16x32xf32> to vector<16x32xbf16>
    %c0_10 = arith.constant 0 : index
    %c0_11 = arith.constant 0 : index
    %27 = vector.load %arg4[%c0_10, %c0_11] : memref<32x96xbf16, #tpu.memory_space<vmem>>, vector<32x96xbf16>
    %cst_12 = arith.constant dense<0.000000e+00> : vector<16x96xf32>
    %28 = tpu.matmul %26, %27, %cst_12 {dimension_numbers = #tpu.dot_dimension_numbers<[1], [0], [0], [1], [0, 0, 1, 1], [], []>} : vector<16x32xbf16>, vector<32x96xbf16>, vector<16x96xf32> -> vector<16x96xf32>
    %c0_13 = arith.constant 0 : index
    %c0_14 = arith.constant 0 : index
    %29 = vector.load %arg5[%c0_13, %c0_14] : memref<1x96xf32, #tpu.memory_space<vmem>>, vector<1x96xf32>
    %30 = vector.broadcast %29 : vector<1x96xf32> to vector<16x96xf32>
    %31 = arith.addf %28, %30 : vector<16x96xf32>
    %32 = arith.truncf %31 : vector<16x96xf32> to vector<16x96xbf16>
    %33 = vector.extract_strided_slice %32 {offsets = [0, 0], sizes = [16, 32], strides = [1, 1]} : vector<16x96xbf16> to vector<16x32xbf16>
    %34 = vector.shape_cast %33 : vector<16x32xbf16> to vector<2x8x32xbf16>
    %35 = tpu.transpose %34, [0, 2, 1] : vector<2x8x32xbf16> -> vector<2x32x8xbf16>
    %36 = vector.shape_cast %35 : vector<2x32x8xbf16> to vector<8x8x8xbf16>
    %37 = tpu.transpose %36, [0, 2, 1] : vector<8x8x8xbf16> -> vector<8x8x8xbf16>
    %38 = vector.extract_strided_slice %32 {offsets = [0, 32], sizes = [16, 32], strides = [1, 1]} : vector<16x96xbf16> to vector<16x32xbf16>
    %39 = vector.shape_cast %38 : vector<16x32xbf16> to vector<2x8x32xbf16>
    %40 = tpu.transpose %39, [0, 2, 1] : vector<2x8x32xbf16> -> vector<2x32x8xbf16>
    %41 = vector.shape_cast %40 : vector<2x32x8xbf16> to vector<8x8x8xbf16>
    %42 = tpu.transpose %41, [0, 2, 1] : vector<8x8x8xbf16> -> vector<8x8x8xbf16>
    %43 = vector.extract_strided_slice %32 {offsets = [0, 64], sizes = [16, 32], strides = [1, 1]} : vector<16x96xbf16> to vector<16x32xbf16>
    %44 = vector.shape_cast %43 : vector<16x32xbf16> to vector<2x8x32xbf16>
    %45 = tpu.transpose %44, [0, 2, 1] : vector<2x8x32xbf16> -> vector<2x32x8xbf16>
    %46 = vector.shape_cast %45 : vector<2x32x8xbf16> to vector<8x8x8xbf16>
    %47 = tpu.transpose %46, [0, 2, 1] : vector<8x8x8xbf16> -> vector<8x8x8xbf16>
    "tpu.trace_start"() <{level = 10 : i32, message = "bqe,bke->bqk"}> : () -> ()
    %cst_15 = arith.constant dense<0.000000e+00> : vector<8x8x8xf32>
    %48 = tpu.matmul %37, %42, %cst_15 {dimension_numbers = #tpu.dot_dimension_numbers<[2], [2], [1], [1], [0, 0, 0, 1, 1, 1], [0], [0]>} : vector<8x8x8xbf16>, vector<8x8x8xbf16>, vector<8x8x8xf32> -> vector<8x8x8xf32>
    "tpu.trace_stop"() : () -> ()
    %cst_16 = arith.constant dense<0xFF800000> : vector<8x8xf32>
    %49 = vector.multi_reduction <maximumf>, %48, %cst_16 [2] : vector<8x8x8xf32> to vector<8x8xf32>
    %50 = vector.shape_cast %49 : vector<8x8xf32> to vector<8x8x1xf32>
    %51 = vector.broadcast %50 : vector<8x8x1xf32> to vector<8x8x8xf32>
    %52 = arith.subf %48, %51 : vector<8x8x8xf32>
    %53 = math.exp %52 : vector<8x8x8xf32>
    %cst_17 = arith.constant dense<0.000000e+00> : vector<8x8xf32>
    %54 = vector.multi_reduction <add>, %53, %cst_17 [2] : vector<8x8x8xf32> to vector<8x8xf32>
    %55 = vector.shape_cast %54 : vector<8x8xf32> to vector<8x8x1xf32>
    %56 = tpu.reciprocal %55 {approx = true} : vector<8x8x1xf32> -> vector<8x8x1xf32>
    %57 = vector.broadcast %56 : vector<8x8x1xf32> to vector<8x8x8xf32>
    %58 = arith.mulf %53, %57 : vector<8x8x8xf32>
    %59 = arith.truncf %58 : vector<8x8x8xf32> to vector<8x8x8xbf16>
    "tpu.trace_start"() <{level = 10 : i32, message = "bqk,bke->bqe"}> : () -> ()
    %cst_18 = arith.constant dense<0.000000e+00> : vector<8x8x8xf32>
    %60 = tpu.matmul %59, %47, %cst_18 {dimension_numbers = #tpu.dot_dimension_numbers<[2], [1], [1], [2], [0, 0, 0, 1, 1, 2], [0], [0]>} : vector<8x8x8xbf16>, vector<8x8x8xbf16>, vector<8x8x8xf32> -> vector<8x8x8xf32>
    "tpu.trace_stop"() : () -> ()
    %61 = arith.truncf %60 : vector<8x8x8xf32> to vector<8x8x8xbf16>
    %62 = tpu.transpose %61, [0, 2, 1] : vector<8x8x8xbf16> -> vector<8x8x8xbf16>
    %63 = vector.shape_cast %62 : vector<8x8x8xbf16> to vector<2x32x8xbf16>
    %64 = tpu.transpose %63, [0, 2, 1] : vector<2x32x8xbf16> -> vector<2x8x32xbf16>
    %65 = vector.shape_cast %64 : vector<2x8x32xbf16> to vector<16x32xbf16>
    %c0_19 = arith.constant 0 : index
    %c0_20 = arith.constant 0 : index
    %66 = vector.load %arg6[%c0_19, %c0_20] : memref<32x32xbf16, #tpu.memory_space<vmem>>, vector<32x32xbf16>
    %cst_21 = arith.constant dense<0.000000e+00> : vector<16x32xf32>
    %67 = tpu.matmul %65, %66, %cst_21 {dimension_numbers = #tpu.dot_dimension_numbers<[1], [0], [0], [1], [0, 0, 1, 1], [], []>} : vector<16x32xbf16>, vector<32x32xbf16>, vector<16x32xf32> -> vector<16x32xf32>
    %c0_22 = arith.constant 0 : index
    %c0_23 = arith.constant 0 : index
    %68 = vector.load %arg7[%c0_22, %c0_23] : memref<1x32xf32, #tpu.memory_space<vmem>>, vector<1x32xf32>
    %69 = vector.broadcast %68 : vector<1x32xf32> to vector<16x32xf32>
    %70 = arith.addf %67, %69 : vector<16x32xf32>
    %71 = arith.addf %1, %70 : vector<16x32xf32>
    %c0_24 = arith.constant 0 : index
    %c0_25 = arith.constant 0 : index
    %72 = vector.load %arg8[%c0_24, %c0_25] : memref<1x32xf32, #tpu.memory_space<vmem>>, vector<1x32xf32>
    %c0_26 = arith.constant 0 : index
    %c0_27 = arith.constant 0 : index
    %73 = vector.load %arg9[%c0_26, %c0_27] : memref<1x32xf32, #tpu.memory_space<vmem>>, vector<1x32xf32>
    %cst_28 = arith.constant dense<0.000000e+00> : vector<16xf32>
    %74 = vector.multi_reduction <add>, %71, %cst_28 [1] : vector<16x32xf32> to vector<16xf32>
    %75 = vector.shape_cast %74 : vector<16xf32> to vector<16x1xf32>
    %cst_29 = arith.constant 3.200000e+01 : f32
    %76 = vector.broadcast %cst_29 : f32 to vector<16x1xf32>
    %77 = arith.divf %75, %76 : vector<16x1xf32>
    %78 = vector.broadcast %77 : vector<16x1xf32> to vector<16x32xf32>
    %79 = arith.subf %71, %78 : vector<16x32xf32>
    %80 = arith.mulf %79, %79 : vector<16x32xf32>
    %cst_30 = arith.constant dense<0.000000e+00> : vector<16xf32>
    %81 = vector.multi_reduction <add>, %80, %cst_30 [1] : vector<16x32xf32> to vector<16xf32>
    %82 = vector.shape_cast %81 : vector<16xf32> to vector<16x1xf32>
    %cst_31 = arith.constant 3.200000e+01 : f32
    %83 = vector.broadcast %cst_31 : f32 to vector<16x1xf32>
    %84 = arith.divf %82, %83 : vector<16x1xf32>
    %85 = vector.broadcast %77 : vector<16x1xf32> to vector<16x32xf32>
    %86 = arith.subf %71, %85 : vector<16x32xf32>
    %cst_32 = arith.constant 9.99999974E-6 : f32
    %87 = vector.broadcast %cst_32 : f32 to vector<16x1xf32>
    %88 = arith.addf %84, %87 : vector<16x1xf32>
    %89 = math.rsqrt %88 : vector<16x1xf32>
    %90 = vector.broadcast %89 : vector<16x1xf32> to vector<16x32xf32>
    %91 = arith.mulf %86, %90 : vector<16x32xf32>
    %92 = vector.broadcast %72 : vector<1x32xf32> to vector<16x32xf32>
    %93 = arith.mulf %91, %92 : vector<16x32xf32>
    %94 = vector.broadcast %73 : vector<1x32xf32> to vector<16x32xf32>
    %95 = arith.addf %93, %94 : vector<16x32xf32>
    %96 = arith.truncf %95 : vector<16x32xf32> to vector<16x32xbf16>
    %c0_33 = arith.constant 0 : index
    %c0_34 = arith.constant 0 : index
    %97 = vector.load %arg10[%c0_33, %c0_34] : memref<32x128xbf16, #tpu.memory_space<vmem>>, vector<32x128xbf16>
    %cst_35 = arith.constant dense<0.000000e+00> : vector<16x128xf32>
    %98 = tpu.matmul %96, %97, %cst_35 {dimension_numbers = #tpu.dot_dimension_numbers<[1], [0], [0], [1], [0, 0, 1, 1], [], []>} : vector<16x32xbf16>, vector<32x128xbf16>, vector<16x128xf32> -> vector<16x128xf32>
    %c0_36 = arith.constant 0 : index
    %c0_37 = arith.constant 0 : index
    %99 = vector.load %arg11[%c0_36, %c0_37] : memref<1x128xf32, #tpu.memory_space<vmem>>, vector<1x128xf32>
    %100 = vector.broadcast %99 : vector<1x128xf32> to vector<16x128xf32>
    %101 = arith.addf %98, %100 : vector<16x128xf32>
    %102 = arith.truncf %101 : vector<16x128xf32> to vector<16x128xbf16>
    %cst_38 = arith.constant 1.703130e+00 : bf16
    %103 = vector.broadcast %cst_38 : bf16 to vector<16x128xbf16>
    %104 = arith.mulf %103, %102 : vector<16x128xbf16>
    %105 = arith.negf %104 : vector<16x128xbf16>
    %106 = math.exp %105 : vector<16x128xbf16>
    %cst_39 = arith.constant 1.000000e+00 : bf16
    %107 = vector.broadcast %cst_39 : bf16 to vector<16x128xbf16>
    %108 = arith.addf %107, %106 : vector<16x128xbf16>
    %109 = arith.divf %107, %108 : vector<16x128xbf16>
    %110 = arith.mulf %102, %109 : vector<16x128xbf16>
    %c0_40 = arith.constant 0 : index
    %c0_41 = arith.constant 0 : index
    %111 = vector.load %arg12[%c0_40, %c0_41] : memref<128x32xbf16, #tpu.memory_space<vmem>>, vector<128x32xbf16>
    %cst_42 = arith.constant dense<0.000000e+00> : vector<16x32xf32>
    %112 = tpu.matmul %110, %111, %cst_42 {dimension_numbers = #tpu.dot_dimension_numbers<[1], [0], [0], [1], [0, 0, 1, 1], [], []>} : vector<16x128xbf16>, vector<128x32xbf16>, vector<16x32xf32> -> vector<16x32xf32>
    %c0_43 = arith.constant 0 : index
    %c0_44 = arith.constant 0 : index
    %113 = vector.load %arg13[%c0_43, %c0_44] : memref<1x32xf32, #tpu.memory_space<vmem>>, vector<1x32xf32>
    %114 = vector.broadcast %113 : vector<1x32xf32> to vector<16x32xf32>
    %115 = arith.addf %112, %114 : vector<16x32xf32>
    %116 = arith.addf %71, %115 : vector<16x32xf32>
    %117 = vector.shape_cast %116 : vector<16x32xf32> to vector<2x8x32xf32>
    %c0_45 = arith.constant 0 : index
    %c0_46 = arith.constant 0 : index
    %c0_47 = arith.constant 0 : index
    %118 = vector.load %arg14[%c0_45, %c0_46, %c0_47] : memref<2x8x32xf32, #tpu.memory_space<vmem>>, vector<2x8x32xf32>
    tpu.vector_store %arg14[%c0_45, %c0_46, %c0_47], %117 {strides = array<i32>} : memref<2x8x32xf32, #tpu.memory_space<vmem>>, vector<2x8x32xf32>,
    return
  }
  func.func @transform_0(%arg0: i32) -> (i32, i32, i32) {
    %c0_i32 = arith.constant 0 : i32
    %c0_i32_0 = arith.constant 0 : i32
    %c0_i32_1 = arith.constant 0 : i32
    return %arg0, %c0_i32, %c0_i32_0 : i32, i32, i32
  }
  func.func @transform_1(%arg0: i32) -> (i32, i32) {
    %c0_i32 = arith.constant 0 : i32
    %c0_i32_0 = arith.constant 0 : i32
    %c0_i32_1 = arith.constant 0 : i32
    return %c0_i32, %c0_i32_0 : i32, i32
  }
  func.func @transform_2(%arg0: i32) -> (i32, i32) {
    %c0_i32 = arith.constant 0 : i32
    %c0_i32_0 = arith.constant 0 : i32
    %c0_i32_1 = arith.constant 0 : i32
    return %c0_i32, %c0_i32_0 : i32, i32
  }
  func.func @transform_3(%arg0: i32) -> (i32, i32) {
    %c0_i32 = arith.constant 0 : i32
    %c0_i32_0 = arith.constant 0 : i32
    %c0_i32_1 = arith.constant 0 : i32
    return %c0_i32, %c0_i32_0 : i32, i32
  }
  func.func @transform_4(%arg0: i32) -> (i32, i32) {
    %c0_i32 = arith.constant 0 : i32
    %c0_i32_0 = arith.constant 0 : i32
    %c0_i32_1 = arith.constant 0 : i32
    return %c0_i32, %c0_i32_0 : i32, i32
  }
  func.func @transform_5(%arg0: i32) -> (i32, i32) {
    %c0_i32 = arith.constant 0 : i32
    %c0_i32_0 = arith.constant 0 : i32
    %c0_i32_1 = arith.constant 0 : i32
    return %c0_i32, %c0_i32_0 : i32, i32
  }
  func.func @transform_6(%arg0: i32) -> (i32, i32) {
    %c0_i32 = arith.constant 0 : i32
    %c0_i32_0 = arith.constant 0 : i32
    %c0_i32_1 = arith.constant 0 : i32
    return %c0_i32, %c0_i32_0 : i32, i32
  }
  func.func @transform_7(%arg0: i32) -> (i32, i32) {
    %c0_i32 = arith.constant 0 : i32
    %c0_i32_0 = arith.constant 0 : i32
    %c0_i32_1 = arith.constant 0 : i32
    return %c0_i32, %c0_i32_0 : i32, i32
  }
  func.func @transform_8(%arg0: i32) -> (i32, i32) {
    %c0_i32 = arith.constant 0 : i32
    %c0_i32_0 = arith.constant 0 : i32
    %c0_i32_1 = arith.constant 0 : i32
    return %c0_i32, %c0_i32_0 : i32, i32
  }
  func.func @transform_9(%arg0: i32) -> (i32, i32) {
    %c0_i32 = arith.constant 0 : i32
    %c0_i32_0 = arith.constant 0 : i32
    %c0_i32_1 = arith.constant 0 : i32
    return %c0_i32, %c0_i32_0 : i32, i32
  }
  func.func @transform_10(%arg0: i32) -> (i32, i32) {
    %c0_i32 = arith.constant 0 : i32
    %c0_i32_0 = arith.constant 0 : i32
    %c0_i32_1 = arith.constant 0 : i32
    return %c0_i32, %c0_i32_0 : i32, i32
  }
  func.func @transform_11(%arg0: i32) -> (i32, i32) {
    %c0_i32 = arith.constant 0 : i32
    %c0_i32_0 = arith.constant 0 : i32
    %c0_i32_1 = arith.constant 0 : i32
    return %c0_i32, %c0_i32_0 : i32, i32
  }
  func.func @transform_12(%arg0: i32) -> (i32, i32) {
    %c0_i32 = arith.constant 0 : i32
    %c0_i32_0 = arith.constant 0 : i32
    %c0_i32_1 = arith.constant 0 : i32
    return %c0_i32, %c0_i32_0 : i32, i32
  }
  func.func @transform_13(%arg0: i32) -> (i32, i32, i32) {
    %c0_i32 = arith.constant 0 : i32
    %c0_i32_0 = arith.constant 0 : i32
    %c0_i32_1 = arith.constant 0 : i32
    return %arg0, %c0_i32, %c0_i32_0 : i32, i32, i32
  }
}

module attributes {stable_mosaic.version = 11 : i64} {
  func.func @_rab_kernel(%arg0: i32, %arg1: memref<2x8x32xf32, #tpu.memory_space<vmem>>, %arg2: memref<1x32xf32, #tpu.memory_space<vmem>>, %arg3: memref<1x32xf32, #tpu.memory_space<vmem>>, %arg4: memref<32x96xbf16, #tpu.memory_space<vmem>>, %arg5: memref<1x96xf32, #tpu.memory_space<vmem>>, %arg6: memref<32x32xbf16, #tpu.memory_space<vmem>>, %arg7: memref<1x32xf32, #tpu.memory_space<vmem>>, %arg8: memref<1x32xf32, #tpu.memory_space<vmem>>, %arg9: memref<1x32xf32, #tpu.memory_space<vmem>>, %arg10: memref<32x128xbf16, #tpu.memory_space<vmem>>, %arg11: memref<1x128xf32, #tpu.memory_space<vmem>>, %arg12: memref<128x32xbf16, #tpu.memory_space<vmem>>, %arg13: memref<1x32xf32, #tpu.memory_space<vmem>>, %arg14: memref<2x8x32xf32, #tpu.memory_space<vmem>>) attributes {dimension_semantics = [#tpu.dimension_semantics<parallel>], iteration_bounds = array<i64: 1>, scalar_prefetch = 0 : i64, scratch_operands = 0 : i64, tpu.core_type = #tpu.core_type<tc>, window_params = [{transform_indices = @transform_0, window_bounds = array<i64: 2, 8, 32>}, {pipeline_mode = #tpu.pipeline_mode<synchronous>, transform_indices = @transform_1, window_bounds = array<i64: 1, 32>}, {pipeline_mode = #tpu.pipeline_mode<synchronous>, transform_indices = @transform_2, window_bounds = array<i64: 1, 32>}, {pipeline_mode = #tpu.pipeline_mode<synchronous>, transform_indices = @transform_3, window_bounds = array<i64: 32, 96>}, {pipeline_mode = #tpu.pipeline_mode<synchronous>, transform_indices = @transform_4, window_bounds = array<i64: 1, 96>}, {pipeline_mode = #tpu.pipeline_mode<synchronous>, transform_indices = @transform_5, window_bounds = array<i64: 32, 32>}, {pipeline_mode = #tpu.pipeline_mode<synchronous>, transform_indices = @transform_6, window_bounds = array<i64: 1, 32>}, {pipeline_mode = #tpu.pipeline_mode<synchronous>, transform_indices = @transform_7, window_bounds = array<i64: 1, 32>}, {pipeline_mode = #tpu.pipeline_mode<synchronous>, transform_indices = @transform_8, window_bounds = array<i64: 1, 32>}, {pipeline_mode = #tpu.pipeline_mode<synchronous>, transform_indices = @transform_9, window_bounds = array<i64: 32, 128>}, {pipeline_mode = #tpu.pipeline_mode<synchronous>, transform_indices = @transform_10, window_bounds = array<i64: 1, 128>}, {pipeline_mode = #tpu.pipeline_mode<synchronous>, transform_indices = @transform_11, window_bounds = array<i64: 128, 32>}, {pipeline_mode = #tpu.pipeline_mode<synchronous>, transform_indices = @transform_12, window_bounds = array<i64: 1, 32>}, {transform_indices = @transform_13, window_bounds = array<i64: 2, 8, 32>}]} {
    %c0 = arith.constant 0 : index
    %c0_0 = arith.constant 0 : index
    %c0_1 = arith.constant 0 : index
    %0 = vector.load %arg1[%c0, %c0_0, %c0_1] : memref<2x8x32xf32, #tpu.memory_space<vmem>>, vector<2x8x32xf32>
    %1 = vector.shape_cast %0 : vector<2x8x32xf32> to vector<16x32xf32>
    %c0_2 = arith.constant 0 : index
    %c0_3 = arith.constant 0 : index
    %2 = vector.load %arg2[%c0_2, %c0_3] : memref<1x32xf32, #tpu.memory_space<vmem>>, vector<1x32xf32>
    %c0_4 = arith.constant 0 : index
    %c0_5 = arith.constant 0 : index
    %3 = vector.load %arg3[%c0_4, %c0_5] : memref<1x32xf32, #tpu.memory_space<vmem>>, vector<1x32xf32>
    %cst = arith.constant dense<0.000000e+00> : vector<16xf32>
    %4 = vector.multi_reduction <add>, %1, %cst [1] : vector<16x32xf32> to vector<16xf32>
    %5 = vector.shape_cast %4 : vector<16xf32> to vector<16x1xf32>
    %cst_6 = arith.constant 3.200000e+01 : f32
    %6 = vector.broadcast %cst_6 : f32 to vector<16x1xf32>
    %7 = arith.divf %5, %6 : vector<16x1xf32>
    %8 = vector.broadcast %7 : vector<16x1xf32> to vector<16x32xf32>
    %9 = arith.subf %1, %8 : vector<16x32xf32>
    %10 = arith.mulf %9, %9 : vector<16x32xf32>
    %cst_7 = arith.constant dense<0.000000e+00> : vector<16xf32>
    %11 = vector.multi_reduction <add>, %10, %cst_7 [1] : vector<16x32xf32> to vector<16xf32>
    %12 = vector.shape_cast %11 : vector<16xf32> to vector<16x1xf32>
    %cst_8 = arith.constant 3.200000e+01 : f32
    %13 = vector.broadcast %cst_8 : f32 to vector<16x1xf32>
    %14 = arith.divf %12, %13 : vector<16x1xf32>
    %15 = vector.broadcast %7 : vector<16x1xf32> to vector<16x32xf32>
    %16 = arith.subf %1, %15 : vector<16x32xf32>
    %cst_9 = arith.constant 9.99999974E-6 : f32
    %17 = vector.broadcast %cst_9 : f32 to vector<16x1xf32>
    %18 = arith.addf %14, %17 : vector<16x1xf32>
    %19 = math.rsqrt %18 : vector<16x1xf32>
    %20 = vector.broadcast %19 : vector<16x1xf32> to vector<16x32xf32>
    %21 = arith.mulf %16, %20 : vector<16x32xf32>
    %22 = vector.broadcast %2 : vector<1x32xf32> to vector<16x32xf32>
    %23 = arith.mulf %21, %22 : vector<16x32xf32>
    %24 = vector.broadcast %3 : vector<1x32xf32> to vector<16x32xf32>
    %25 = arith.addf %23, %24 : vector<16x32xf32>
    %26 = arith.truncf %25 : vector<16x32xf32> to vector<16x32xbf16>
    %c0_10 = arith.constant 0 : index
    %c0_11 = arith.constant 0 : index
    %27 = vector.load %arg4[%c0_10, %c0_11] : memref<32x96xbf16, #tpu.memory_space<vmem>>, vector<32x96xbf16>
    %cst_12 = arith.constant dense<0.000000e+00> : vector<16x96xf32>
    %28 = tpu.matmul %26, %27, %cst_12 {dimension_numbers = #tpu.dot_dimension_numbers<[1], [0], [0], [1], [0, 0, 1, 1], [], []>} : vector<16x32xbf16>, vector<32x96xbf16>, vector<16x96xf32> -> vector<16x96xf32>
    %c0_13 = arith.constant 0 : index
    %c0_14 = arith.constant 0 : index
    %29 = vector.load %arg5[%c0_13, %c0_14] : memref<1x96xf32, #tpu.memory_space<vmem>>, vector<1x96xf32>
    %30 = vector.broadcast %29 : vector<1x96xf32> to vector<16x96xf32>
    %31 = arith.addf %28, %30 : vector<16x96xf32>
    %32 = arith.truncf %31 : vector<16x96xf32> to vector<16x96xbf16>
    %33 = vector.extract_strided_slice %32 {offsets = [0, 0], sizes = [16, 32], strides = [1, 1]} : vector<16x96xbf16> to vector<16x32xbf16>
    %34 = vector.shape_cast %33 : vector<16x32xbf16> to vector<2x8x32xbf16>
    %35 = tpu.transpose %34, [0, 2, 1] : vector<2x8x32xbf16> -> vector<2x32x8xbf16>
    %36 = vector.shape_cast %35 : vector<2x32x8xbf16> to vector<8x8x8xbf16>
    %37 = tpu.transpose %36, [0, 2, 1] : vector<8x8x8xbf16> -> vector<8x8x8xbf16>
    %38 = vector.extract_strided_slice %32 {offsets = [0, 32], sizes = [16, 32], strides = [1, 1]} : vector<16x96xbf16> to vector<16x32xbf16>
    %39 = vector.shape_cast %38 : vector<16x32xbf16> to vector<2x8x32xbf16>
    %40 = tpu.transpose %39, [0, 2, 1] : vector<2x8x32xbf16> -> vector<2x32x8xbf16>
    %41 = vector.shape_cast %40 : vector<2x32x8xbf16> to vector<8x8x8xbf16>
    %42 = tpu.transpose %41, [0, 2, 1] : vector<8x8x8xbf16> -> vector<8x8x8xbf16>
    %43 = vector.extract_strided_slice %32 {offsets = [0, 64], sizes = [16, 32], strides = [1, 1]} : vector<16x96xbf16> to vector<16x32xbf16>
    %44 = vector.shape_cast %43 : vector<16x32xbf16> to vector<2x8x32xbf16>
    %45 = tpu.transpose %44, [0, 2, 1] : vector<2x8x32xbf16> -> vector<2x32x8xbf16>
    %46 = vector.shape_cast %45 : vector<2x32x8xbf16> to vector<8x8x8xbf16>
    %47 = tpu.transpose %46, [0, 2, 1] : vector<8x8x8xbf16> -> vector<8x8x8xbf16>
    "tpu.trace_start"() <{level = 10 : i32, message = "bqe,bke->bqk"}> : () -> ()
    %cst_15 = arith.constant dense<0.000000e+00> : vector<8x8x8xf32>
    %48 = tpu.matmul %37, %42, %cst_15 {dimension_numbers = #tpu.dot_dimension_numbers<[2], [2], [1], [1], [0, 0, 0, 1, 1, 1], [0], [0]>} : vector<8x8x8xbf16>, vector<8x8x8xbf16>, vector<8x8x8xf32> -> vector<8x8x8xf32>
    "tpu.trace_stop"() : () -> ()
    %cst_16 = arith.constant dense<0xFF800000> : vector<8x8xf32>
    %49 = vector.multi_reduction <maximumf>, %48, %cst_16 [2] : vector<8x8x8xf32> to vector<8x8xf32>
    %50 = vector.shape_cast %49 : vector<8x8xf32> to vector<8x8x1xf32>
    %51 = vector.broadcast %50 : vector<8x8x1xf32> to vector<8x8x8xf32>
    %52 = arith.subf %48, %51 : vector<8x8x8xf32>
    %53 = math.exp %52 : vector<8x8x8xf32>
    %cst_17 = arith.constant dense<0.000000e+00> : vector<8x8xf32>
    %54 = vector.multi_reduction <add>, %53, %cst_17 [2] : vector<8x8x8xf32> to vector<8x8xf32>
    %55 = vector.shape_cast %54 : vector<8x8xf32> to vector<8x8x1xf32>
    %56 = tpu.reciprocal %55 {approx = true} : vector<8x8x1xf32> -> vector<8x8x1xf32>
    %57 = vector.broadcast %56 : vector<8x8x1xf32> to vector<8x8x8xf32>
    %58 = arith.mulf %53, %57 : vector<8x8x8xf32>
    %59 = arith.truncf %58 : vector<8x8x8xf32> to vector<8x8x8xbf16>
    "tpu.trace_start"() <{level = 10 : i32, message = "bqk,bke->bqe"}> : () -> ()
    %cst_18 = arith.constant dense<0.000000e+00> : vector<8x8x8xf32>
    %60 = tpu.matmul %59, %47, %cst_18 {dimension_numbers = #tpu.dot_dimension_numbers<[2], [1], [1], [2], [0, 0, 0, 1, 1, 2], [0], [0]>} : vector<8x8x8xbf16>, vector<8x8x8xbf16>, vector<8x8x8xf32> -> vector<8x8x8xf32>
    "tpu.trace_stop"() : () -> ()
    %61 = arith.truncf %60 : vector<8x8x8xf32> to vector<8x8x8xbf16>
    %62 = tpu.transpose %61, [0, 2, 1] : vector<8x8x8xbf16> -> vector<8x8x8xbf16>
    %63 = vector.shape_cast %62 : vector<8x8x8xbf16> to vector<2x32x8xbf16>
    %64 = tpu.transpose %63, [0, 2, 1] : vector<2x32x8xbf16> -> vector<2x8x32xbf16>
    %65 = vector.shape_cast %64 : vector<2x8x32xbf16> to vector<16x32xbf16>
    %c0_19 = arith.constant 0 : index
    %c0_20 = arith.constant 0 : index
    %66 = vector.load %arg6[%c0_19, %c0_20] : memref<32x32xbf16, #tpu.memory_space<vmem>>, vector<32x32xbf16>
    %cst_21 = arith.constant dense<0.000000e+00> : vector<16x32xf32>
    %67 = tpu.matmul %65, %66, %cst_21 {dimension_numbers = #tpu.dot_dimension_numbers<[1], [0], [0], [1], [0, 0, 1, 1], [], []>} : vector<16x32xbf16>, vector<32x32xbf16>, vector<16x32xf32> -> vector<16x32xf32>
    %c0_22 = arith.constant 0 : index
    %c0_23 = arith.constant 0 : index
    %68 = vector.load %arg7[%c0_22, %c0_23] : memref<1x32xf32, #tpu.memory_space<vmem>>, vector<1x32xf32>
    %69 = vector.broadcast %68 : vector<1x32xf32> to vector<16x32xf32>
    %70 = arith.addf %67, %69 : vector<16x32xf32>
    %71 = arith.addf %1, %70 : vector<16x32xf32>
    %c0_24 = arith.constant 0 : index
    %c0_25 = arith.constant 0 : index
    %72 = vector.load %arg8[%c0_24, %c0_25] : memref<1x32xf32, #tpu.memory_space<vmem>>, vector<1x32xf32>
    %c0_26 = arith.constant 0 : index
    %c0_27 = arith.constant 0 : index
    %73 = vector.load %arg9[%c0_26, %c0_27] : memref<1x32xf32, #tpu.memory_space<vmem>>, vector<1x32xf32>
    %cst_28 = arith.constant dense<0.000000e+00> : vector<16xf32>
    %74 = vector.multi_reduction <add>, %71, %cst_28 [1] : vector<16x32xf32> to vector<16xf32>
    %75 = vector.shape_cast %74 : vector<16xf32> to vector<16x1xf32>
    %cst_29 = arith.constant 3.200000e+01 : f32
    %76 = vector.broadcast %cst_29 : f32 to vector<16x1xf32>
    %77 = arith.divf %75, %76 : vector<16x1xf32>
    %78 = vector.broadcast %77 : vector<16x1xf32> to vector<16x32xf32>
    %79 = arith.subf %71, %78 : vector<16x32xf32>
    %80 = arith.mulf %79, %79 : vector<16x32xf32>
    %cst_30 = arith.constant dense<0.000000e+00> : vector<16xf32>
    %81 = vector.multi_reduction <add>, %80, %cst_30 [1] : vector<16x32xf32> to vector<16xf32>
    %82 = vector.shape_cast %81 : vector<16xf32> to vector<16x1xf32>
    %cst_31 = arith.constant 3.200000e+01 : f32
    %83 = vector.broadcast %cst_31 : f32 to vector<16x1xf32>
    %84 = arith.divf %82, %83 : vector<16x1xf32>
    %85 = vector.broadcast %77 : vector<16x1xf32> to vector<16x32xf32>
    %86 = arith.subf %71, %85 : vector<16x32xf32>
    %cst_32 = arith.constant 9.99999974E-6 : f32
    %87 = vector.broadcast %cst_32 : f32 to vector<16x1xf32>
    %88 = arith.addf %84, %87 : vector<16x1xf32>
    %89 = math.rsqrt %88 : vector<16x1xf32>
    %90 = vector.broadcast %89 : vector<16x1xf32> to vector<16x32xf32>
    %91 = arith.mulf %86, %90 : vector<16x32xf32>
    %92 = vector.broadcast %72 : vector<1x32xf32> to vector<16x32xf32>
    %93 = arith.mulf %91, %92 : vector<16x32xf32>
    %94 = vector.broadcast %73 : vector<1x32xf32> to vector<16x32xf32>
    %95 = arith.addf %93, %94 : vector<16x32xf32>
    %96 = arith.truncf %95 : vector<16x32xf32> to vector<16x32xbf16>
    %c0_33 = arith.constant 0 : index
    %c0_34 = arith.constant 0 : index
    %97 = vector.load %arg10[%c0_33, %c0_34] : memref<32x128xbf16, #tpu.memory_space<vmem>>, vector<32x128xbf16>
    %cst_35 = arith.constant dense<0.000000e+00> : vector<16x128xf32>
    %98 = tpu.matmul %96, %97, %cst_35 {dimension_numbers = #tpu.dot_dimension_numbers<[1], [0], [0], [1], [0, 0, 1, 1], [], []>} : vector<16x32xbf16>, vector<32x128xbf16>, vector<16x128xf32> -> vector<16x128xf32>
    %c0_36 = arith.constant 0 : index
    %c0_37 = arith.constant 0 : index
    %99 = vector.load %arg11[%c0_36, %c0_37] : memref<1x128xf32, #tpu.memory_space<vmem>>, vector<1x128xf32>
    %100 = vector.broadcast %99 : vector<1x128xf32> to vector<16x128xf32>
    %101 = arith.addf %98, %100 : vector<16x128xf32>
    %102 = arith.truncf %101 : vector<16x128xf32> to vector<16x128xbf16>
    %cst_38 = arith.constant 1.703130e+00 : bf16
    %103 = vector.broadcast %cst_38 : bf16 to vector<16x128xbf16>
    %104 = arith.mulf %103, %102 : vector<16x128xbf16>
    %105 = arith.negf %104 : vector<16x128xbf16>
    %106 = math.exp %105 : vector<16x128xbf16>
    %cst_39 = arith.constant 1.000000e+00 : bf16
    %107 = vector.broadcast %cst_39 : bf16 to vector<16x128xbf16>
    %108 = arith.addf %107, %106 : vector<16x128xbf16>
    %109 = arith.divf %107, %108 : vector<16x128xbf16>
    %110 = arith.mulf %102, %109 : vector<16x128xbf16>
    %c0_40 = arith.constant 0 : index
    %c0_41 = arith.constant 0 : index
    %111 = vector.load %arg12[%c0_40, %c0_41] : memref<128x32xbf16, #tpu.memory_space<vmem>>, vector<128x32xbf16>
    %cst_42 = arith.constant dense<0.000000e+00> : vector<16x32xf32>
    %112 = tpu.matmul %110, %111, %cst_42 {dimension_numbers = #tpu.dot_dimension_numbers<[1], [0], [0], [1], [0, 0, 1, 1], [], []>} : vector<16x128xbf16>, vector<128x32xbf16>, vector<16x32xf32> -> vector<16x32xf32>
    %c0_43 = arith.constant 0 : index
    %c0_44 = arith.constant 0 : index
    %113 = vector.load %arg13[%c0_43, %c0_44] : memref<1x32xf32, #tpu.memory_space<vmem>>, vector<1x32xf32>
    %114 = vector.broadcast %113 : vector<1x32xf32> to vector<16x32xf32>
    %115 = arith.addf %112, %114 : vector<16x32xf32>
    %116 = arith.addf %71, %115 : vector<16x32xf32>
    %117 = vector.shape_cast %116 : vector<16x32xf32> to vector<2x8x32xf32>
    %c0_45 = arith.constant 0 : index
    %c0_46 = arith.constant 0 : index
    %c0_47 = arith.constant 0 : index
    %118 = vector.load %arg14[%c0_45, %c0_46, %c0_47] : memref<2x8x32xf32, #tpu.memory_space<vmem>>, vector<2x8x32xf32>
    tpu.vector_store %arg14[%c0_45, %c0_46, %c0_47], %117 {strides = array<i32>} : memref<2x8x32xf32, #tpu.memory_space<vmem>>, vector<2x8x32xf32>,
    return
  }
  func.func @transform_0(%arg0: i32) -> (i32, i32, i32) {
    %c0_i32 = arith.constant 0 : i32
    %c0_i32_0 = arith.constant 0 : i32
    %c0_i32_1 = arith.constant 0 : i32
    return %arg0, %c0_i32, %c0_i32_0 : i32, i32, i32
  }
  func.func @transform_1(%arg0: i32) -> (i32, i32) {
    %c0_i32 = arith.constant 0 : i32
    %c0_i32_0 = arith.constant 0 : i32
    %c0_i32_1 = arith.constant 0 : i32
    return %c0_i32, %c0_i32_0 : i32, i32
  }
  func.func @transform_2(%arg0: i32) -> (i32, i32) {
    %c0_i32 = arith.constant 0 : i32
    %c0_i32_0 = arith.constant 0 : i32
    %c0_i32_1 = arith.constant 0 : i32
    return %c0_i32, %c0_i32_0 : i32, i32
  }
  func.func @transform_3(%arg0: i32) -> (i32, i32) {
    %c0_i32 = arith.constant 0 : i32
    %c0_i32_0 = arith.constant 0 : i32
    %c0_i32_1 = arith.constant 0 : i32
    return %c0_i32, %c0_i32_0 : i32, i32
  }
  func.func @transform_4(%arg0: i32) -> (i32, i32) {
    %c0_i32 = arith.constant 0 : i32
    %c0_i32_0 = arith.constant 0 : i32
    %c0_i32_1 = arith.constant 0 : i32
    return %c0_i32, %c0_i32_0 : i32, i32
  }
  func.func @transform_5(%arg0: i32) -> (i32, i32) {
    %c0_i32 = arith.constant 0 : i32
    %c0_i32_0 = arith.constant 0 : i32
    %c0_i32_1 = arith.constant 0 : i32
    return %c0_i32, %c0_i32_0 : i32, i32
  }
  func.func @transform_6(%arg0: i32) -> (i32, i32) {
    %c0_i32 = arith.constant 0 : i32
    %c0_i32_0 = arith.constant 0 : i32
    %c0_i32_1 = arith.constant 0 : i32
    return %c0_i32, %c0_i32_0 : i32, i32
  }
  func.func @transform_7(%arg0: i32) -> (i32, i32) {
    %c0_i32 = arith.constant 0 : i32
    %c0_i32_0 = arith.constant 0 : i32
    %c0_i32_1 = arith.constant 0 : i32
    return %c0_i32, %c0_i32_0 : i32, i32
  }
  func.func @transform_8(%arg0: i32) -> (i32, i32) {
    %c0_i32 = arith.constant 0 : i32
    %c0_i32_0 = arith.constant 0 : i32
    %c0_i32_1 = arith.constant 0 : i32
    return %c0_i32, %c0_i32_0 : i32, i32
  }
  func.func @transform_9(%arg0: i32) -> (i32, i32) {
    %c0_i32 = arith.constant 0 : i32
    %c0_i32_0 = arith.constant 0 : i32
    %c0_i32_1 = arith.constant 0 : i32
    return %c0_i32, %c0_i32_0 : i32, i32
  }
  func.func @transform_10(%arg0: i32) -> (i32, i32) {
    %c0_i32 = arith.constant 0 : i32
    %c0_i32_0 = arith.constant 0 : i32
    %c0_i32_1 = arith.constant 0 : i32
    return %c0_i32, %c0_i32_0 : i32, i32
  }
  func.func @transform_11(%arg0: i32) -> (i32, i32) {
    %c0_i32 = arith.constant 0 : i32
    %c0_i32_0 = arith.constant 0 : i32
    %c0_i32_1 = arith.constant 0 : i32
    return %c0_i32, %c0_i32_0 : i32, i32
  }
  func.func @transform_12(%arg0: i32) -> (i32, i32) {
    %c0_i32 = arith.constant 0 : i32
    %c0_i32_0 = arith.constant 0 : i32
    %c0_i32_1 = arith.constant 0 : i32
    return %c0_i32, %c0_i32_0 : i32, i32
  }
  func.func @transform_13(%arg0: i32) -> (i32, i32, i32) {
    %c0_i32 = arith.constant 0 : i32
    %c0_i32_0 = arith.constant 0 : i32
    %c0_i32_1 = arith.constant 0 : i32
    return %arg0, %c0_i32, %c0_i32_0 : i32, i32, i32
  }
}

</mosaic_0001>

<llo_original>
// kernel: tpu_custom_call.1
$region0: #{tpu_custom_call.1}
  #allocation0 [shape = 'u32[]', space=smem, size = 0x4, offset = 0x4, fixed_abs, tag = 'smem constant byte address 0x4 - core index']
  #allocation1 [shape = 'u32[72,128]{1,0:T(1,128)}', space=vmem, size = 0x9000, scoped, tag = 'internal scratch']
  %s0 = inlined_call_operand.vmem [shape: f32[2,8,32], index: 0, kind: input, shape index: {}]
  %s1 = inlined_call_operand.vmem [shape: f32[1,32], index: 1, kind: input, shape index: {}]
  %s2 = inlined_call_operand.vmem [shape: f32[1,32], index: 2, kind: input, shape index: {}]
  %s3 = inlined_call_operand.vmem [shape: bf16[32,96], index: 3, kind: input, shape index: {}]
  %s4 = inlined_call_operand.vmem [shape: f32[1,96], index: 4, kind: input, shape index: {}]
  %s5 = inlined_call_operand.vmem [shape: bf16[32,32], index: 5, kind: input, shape index: {}]
  %s6 = inlined_call_operand.vmem [shape: f32[1,32], index: 6, kind: input, shape index: {}]
  %s7 = inlined_call_operand.vmem [shape: f32[1,32], index: 7, kind: input, shape index: {}]
  %s8 = inlined_call_operand.vmem [shape: f32[1,32], index: 8, kind: input, shape index: {}]
  %s9 = inlined_call_operand.vmem [shape: bf16[32,128], index: 9, kind: input, shape index: {}]
  %s10 = inlined_call_operand.vmem [shape: f32[1,128], index: 10, kind: input, shape index: {}]
  %s11 = inlined_call_operand.vmem [shape: bf16[128,32], index: 11, kind: input, shape index: {}]
  %s12 = inlined_call_operand.vmem [shape: f32[1,32], index: 12, kind: input, shape index: {}]
  %s13 = inlined_call_operand.hbm [shape: f32[2,8,32], index: 13, kind: output, shape index: {}]
  %s14 = sld [smem:[#allocation0]]
  $region62: #{tpu_custom_call.1} parent=0
    _
  %s16 = ssub.s32 1, %s14
  %s17 = scalar_select 0, %s16, %s14
  $region1: #{tpu_custom_call.1} parent=0
    #allocation2 [shape = 'u8[8192]{0}', space=vmem, size = 0x2000, scoped, tag = 'output window, operand 0, single buffered']
    #allocation3 [shape = 's32[1]{0}', space=sflag, size = 0x4, scoped, tag = 'scoped memory for tpu_custom_call.1']
    %18 = vsyncpa [#allocation3], 0
    // Predicated region
    $region2: #{tpu_custom_call.1} parent=1 // pred_check
      _
    $region3: #{tpu_custom_call.1} parent=1 // pred_check_branch
      %20 = sbr.rel (0) target = $region5
    $region4: #{tpu_custom_call.1} parent=1 // pred_region
      _
    $region5: #{tpu_custom_call.1} parent=1 // pred_fallthru
      _
    // Predicated region
    $region6: #{tpu_custom_call.1} parent=1 // pred_check
      _
    $region7: #{tpu_custom_call.1} parent=1 // pred_check_branch
      %22 = sbr.rel (0) target = $region9
    $region8: #{tpu_custom_call.1} parent=1 // pred_region
      _
    $region9: #{tpu_custom_call.1} parent=1 // pred_fallthru
      _
    // Predicated region
    $region10: #{tpu_custom_call.1} parent=1 // pred_check
      _
    $region11: #{tpu_custom_call.1} parent=1 // pred_check_branch
      %24 = sbr.rel (0) target = $region13
    $region12: #{tpu_custom_call.1} parent=1 // pred_region
      _
    $region13: #{tpu_custom_call.1} parent=1 // pred_fallthru
      _
    // Predicated region
    $region14: #{tpu_custom_call.1} parent=1 // pred_check
      _
    $region15: #{tpu_custom_call.1} parent=1 // pred_check_branch
      %26 = sbr.rel (0) target = $region17
    $region16: #{tpu_custom_call.1} parent=1 // pred_region
      _
    $region17: #{tpu_custom_call.1} parent=1 // pred_fallthru
      _
    // Predicated region
    $region18: #{tpu_custom_call.1} parent=1 // pred_check
      _
    $region19: #{tpu_custom_call.1} parent=1 // pred_check_branch
      %28 = sbr.rel (0) target = $region21
    $region20: #{tpu_custom_call.1} parent=1 // pred_region
      _
    $region21: #{tpu_custom_call.1} parent=1 // pred_fallthru
      _
    // Predicated region
    $region22: #{tpu_custom_call.1} parent=1 // pred_check
      _
    $region23: #{tpu_custom_call.1} parent=1 // pred_check_branch
      %30 = sbr.rel (0) target = $region25
    $region24: #{tpu_custom_call.1} parent=1 // pred_region
      _
    $region25: #{tpu_custom_call.1} parent=1 // pred_fallthru
      _
    // Predicated region
    $region26: #{tpu_custom_call.1} parent=1 // pred_check
      _
    $region27: #{tpu_custom_call.1} parent=1 // pred_check_branch
      %32 = sbr.rel (0) target = $region29
    $region28: #{tpu_custom_call.1} parent=1 // pred_region
      _
    $region29: #{tpu_custom_call.1} parent=1 // pred_fallthru
      _
    // Predicated region
    $region30: #{tpu_custom_call.1} parent=1 // pred_check
      _
    $region31: #{tpu_custom_call.1} parent=1 // pred_check_branch
      %34 = sbr.rel (0) target = $region33
    $region32: #{tpu_custom_call.1} parent=1 // pred_region
      _
    $region33: #{tpu_custom_call.1} parent=1 // pred_fallthru
      _
    // Predicated region
    $region34: #{tpu_custom_call.1} parent=1 // pred_check
      _
    $region35: #{tpu_custom_call.1} parent=1 // pred_check_branch
      %36 = sbr.rel (0) target = $region37
    $region36: #{tpu_custom_call.1} parent=1 // pred_region
      _
    $region37: #{tpu_custom_call.1} parent=1 // pred_fallthru
      _
    // Predicated region
    $region38: #{tpu_custom_call.1} parent=1 // pred_check
      _
    $region39: #{tpu_custom_call.1} parent=1 // pred_check_branch
      %38 = sbr.rel (0) target = $region41
    $region40: #{tpu_custom_call.1} parent=1 // pred_region
      _
    $region41: #{tpu_custom_call.1} parent=1 // pred_fallthru
      _
    // Predicated region
    $region42: #{tpu_custom_call.1} parent=1 // pred_check
      _
    $region43: #{tpu_custom_call.1} parent=1 // pred_check_branch
      %40 = sbr.rel (0) target = $region45
    $region44: #{tpu_custom_call.1} parent=1 // pred_region
      _
    $region45: #{tpu_custom_call.1} parent=1 // pred_fallthru
      _
    // Predicated region
    $region46: #{tpu_custom_call.1} parent=1 // pred_check
      _
    $region47: #{tpu_custom_call.1} parent=1 // pred_check_branch
      %42 = sbr.rel (0) target = $region49
    $region48: #{tpu_custom_call.1} parent=1 // pred_region
      _
    $region49: #{tpu_custom_call.1} parent=1 // pred_fallthru
      _
    // Predicated region
    $region50: #{tpu_custom_call.1} parent=1 // pred_check
      _
    $region51: #{tpu_custom_call.1} parent=1 // pred_check_branch
      %44 = sbr.rel (0) target = $region53
    $region52: #{tpu_custom_call.1} parent=1 // pred_region
      _
    $region53: #{tpu_custom_call.1} parent=1 // pred_fallthru
      _
    %v47 = vld [vmem:[%s0] sm:$0xff]
    %v48 = vld [vmem:[%s0 + $0x8] sm:$0xff]
    %v49 = vld [vmem:[%s1] sm:$0x1]
    %v50 = vld [vmem:[%s2] sm:$0x1]
    %vm51 = vcmask 261120
    %v52 = vsel %vm51, %v47, 0.0
    %53 = vadd.xlane.f32.xlu0 %v52
    %v54 = vpop.xlane.xlu0 %53
    %v55 = vsel %vm51, %v48, 0.0
    %56 = vadd.xlane.f32.xlu0 %v55
    %v57 = vpop.xlane.xlu0 %56
    %v58 = vrcp.pop 32.0
    %v59 = vmul.f32 32.0, %v58
    %v60 = vsub.f32 1.0, %v59
    %v61 = vmul.f32 %v58, %v60
    %v62 = vadd.f32 %v58, %v61
    %vm63 = vweird.f32 %v58
    %v64 = vsel %vm63, %v58, %v62
    %v65 = vmul.f32 %v54, %v64
    %v66 = vmul.f32 %v57, %v64
    %v67 = vsub.f32 %v47, %v65
    %v68 = vsub.f32 %v48, %v66
    %v69 = vmul.f32 %v67, %v67
    %v70 = vmul.f32 %v68, %v68
    %v71 = vsel %vm51, %v69, 0.0
    %72 = vadd.xlane.f32.xlu0 %v71
    %v73 = vpop.xlane.xlu0 %72
    %v74 = vsel %vm51, %v70, 0.0
    %75 = vadd.xlane.f32.xlu0 %v74
    %v76 = vpop.xlane.xlu0 %75
    %v77 = vmul.f32 %v73, %v64
    %v78 = vmul.f32 %v76, %v64
    %v79 = vadd.f32 %v77, 1e-05
    %v80 = vadd.f32 %v78, 1e-05
    %v81 = vrsqrt.pop %v79
    %v82 = vmul.f32 %v81, %v79
    %v83 = vmul.f32 %v82, %v81
    %v84 = vmul.f32 0.5, %v83
    %v85 = vsub.f32 1.5, %v84
    %v86 = vmul.f32 %v81, %v85
    %vm87 = vweird.f32 %v79
    %vm88 = vweird.f32 %v81
    %vm89 = vmor %vm87, %vm88
    %v90 = vsel %vm89, %v81, %v86
    %v91 = vrsqrt.pop %v80
    %v92 = vmul.f32 %v91, %v80
    %v93 = vmul.f32 %v92, %v91
    %v94 = vmul.f32 0.5, %v93
    %v95 = vsub.f32 1.5, %v94
    %v96 = vmul.f32 %v91, %v95
    %vm97 = vweird.f32 %v80
    %vm98 = vweird.f32 %v91
    %vm99 = vmor %vm97, %vm98
    %v100 = vsel %vm99, %v91, %v96
    %v101 = vmul.f32 %v67, %v90
    %v102 = vmul.f32 %v68, %v100
    %v104 = vperm.slane %v49, 0
    %v106 = vmul.f32 %v101, %v104
    %v107 = vmul.f32 %v102, %v104
    %v109 = vperm.slane %v50, 0
    %v111 = vadd.f32 %v106, %v109
    %v112 = vadd.f32 %v107, %v109
    %v113 = vpack.c.bf16 %v112, %v111
    %v114 = vld [vmem:[%s3] sm:$0xf]
    %v115 = vld [vmem:[%s3 + $0x4] sm:$0xf]
    %v116 = vld [vmem:[%s3 + $0x8] sm:$0xf]
    %v117 = vld [vmem:[%s3 + $0xc] sm:$0xf]
    %v118 = vld [vmem:[%s4] sm:$0x1]
    %v120 = vperm.slane %v118, 0
    %v126 = vunpack.c.l.b16 %v114
    %v127 = vunpack.c.l.b16 %v115
    %v128 = vunpack.c.l.b16 %v116
    %v129 = vunpack.c.l.b16 %v117
    %v130 = vpack.c.b16 %v127, %v126
    %v131 = vpack.c.b16 %v129, %v128
    %v135 = vsel %vm51, %v113, 0
    %137 = vmatpush.bf16.msra.mxu0 0
    %138 = vmatpush.bf16.msra.mxu0 0
    %139 = vmatpush.bf16.msra.mxu0 0
    %140 = vmatpush.bf16.msra.mxu0 0
    %141 = vmatpush.bf16.msra.mxu0 0
    %142 = vmatpush.bf16.msra.mxu0 0
    %143 = vmatpush.bf16.msra.mxu0 %v131
    %144 = vmatpush.bf16.msra.mxu0 %v130
    %145 = vmatmul.bf16.gmra.mxu0 %v135
    %v146 = vpop.f32.mrf.mxu0
    %v147 = vadd.f32 %v120, %v146
    %v148 = vpop.f32.mrf.mxu0
    %v149 = vadd.f32 %v120, %v148
    %150 = vdwg.mxu0
    %v151 = vpack.c.bf16 %v147, %v147
    %v152 = vpack.c.bf16 %v149, %v149
    %153 = vxpose.xlu0.c.b16.start [1/8] %v151, 128
    %154 = vxpose.xlu0.c.b16.cont [2/8] 0, 128
    %155 = vxpose.xlu0.c.b16.cont [3/8] 0, 128
    %156 = vxpose.xlu0.c.b16.cont [4/8] 0, 128
    %157 = vxpose.xlu0.c.b16.cont [5/8] 0, 128
    %158 = vxpose.xlu0.c.b16.cont [6/8] 0, 128
    %159 = vxpose.xlu0.c.b16.cont [7/8] 0, 128
    %160 = vxpose.xlu0.c.b16.end [8/8] 0, 128
    %v161 = vpop.trf.xlu0
    %v162 = vpop.trf.xlu0
    %v163 = vpop.trf.xlu0
    %v164 = vpop.trf.xlu0
    %v165 = vpop.trf.xlu0
    %v166 = vpop.trf.xlu0
    %v167 = vpop.trf.xlu0
    %v168 = vpop.trf.xlu0
    %169 = vxpose.xlu0.c.b16.start [1/8] %v152, 128
    %170 = vxpose.xlu0.c.b16.cont [2/8] 0, 128
    %171 = vxpose.xlu0.c.b16.cont [3/8] 0, 128
    %172 = vxpose.xlu0.c.b16.cont [4/8] 0, 128
    %173 = vxpose.xlu0.c.b16.cont [5/8] 0, 128
    %174 = vxpose.xlu0.c.b16.cont [6/8] 0, 128
    %175 = vxpose.xlu0.c.b16.cont [7/8] 0, 128
    %176 = vxpose.xlu0.c.b16.end [8/8] 0, 128
    %v177 = vpop.trf.xlu0
    %v178 = vpop.trf.xlu0
    %v179 = vpop.trf.xlu0
    %v180 = vpop.trf.xlu0
    %v181 = vpop.trf.xlu0
    %v182 = vpop.trf.xlu0
    %v183 = vpop.trf.xlu0
    %v184 = vpop.trf.xlu0
    %v189 = vunpack.c.l.b16 %v161
    %v190 = vunpack.c.h.b16 %v161
    %v191 = vunpack.c.l.b16 %v162
    %v192 = vunpack.c.h.b16 %v162
    %v193 = vunpack.c.l.b16 %v177
    %v194 = vunpack.c.h.b16 %v177
    %v195 = vunpack.c.l.b16 %v178
    %v196 = vunpack.c.h.b16 %v178
    %v197 = vpack.c.b16 %v189, %v189
    %v198 = vpack.c.b16 %v190, %v190
    %v199 = vpack.c.b16 %v191, %v191
    %v200 = vpack.c.b16 %v192, %v192
    %v201 = vpack.c.b16 %v193, %v193
    %v202 = vpack.c.b16 %v194, %v194
    %v203 = vpack.c.b16 %v195, %v195
    %v204 = vpack.c.b16 %v196, %v196
    %213 = vxpose.xlu0.c.b16.start [1/8] %v197, 128
    %214 = vxpose.xlu0.c.b16.cont [2/8] 0, 128
    %215 = vxpose.xlu0.c.b16.cont [3/8] 0, 128
    %216 = vxpose.xlu0.c.b16.cont [4/8] 0, 128
    %217 = vxpose.xlu0.c.b16.cont [5/8] 0, 128
    %218 = vxpose.xlu0.c.b16.cont [6/8] 0, 128
    %219 = vxpose.xlu0.c.b16.cont [7/8] 0, 128
    %220 = vxpose.xlu0.c.b16.end [8/8] 0, 128
    %v221 = vpop.trf.xlu0
    %v222 = vpop.trf.xlu0
    %v223 = vpop.trf.xlu0
    %v224 = vpop.trf.xlu0
    %v225 = vpop.trf.xlu0
    %v226 = vpop.trf.xlu0
    %v227 = vpop.trf.xlu0
    %v228 = vpop.trf.xlu0
    %229 = vxpose.xlu0.c.b16.start [1/8] %v198, 128
    %230 = vxpose.xlu0.c.b16.cont [2/8] 0, 128
    %231 = vxpose.xlu0.c.b16.cont [3/8] 0, 128
    %232 = vxpose.xlu0.c.b16.cont [4/8] 0, 128
    %233 = vxpose.xlu0.c.b16.cont [5/8] 0, 128
    %234 = vxpose.xlu0.c.b16.cont [6/8] 0, 128
    %235 = vxpose.xlu0.c.b16.cont [7/8] 0, 128
    %236 = vxpose.xlu0.c.b16.end [8/8] 0, 128
    %v237 = vpop.trf.xlu0
    %v238 = vpop.trf.xlu0
    %v239 = vpop.trf.xlu0
    %v240 = vpop.trf.xlu0
    %v241 = vpop.trf.xlu0
    %v242 = vpop.trf.xlu0
    %v243 = vpop.trf.xlu0
    %v244 = vpop.trf.xlu0
    %245 = vxpose.xlu0.c.b16.start [1/8] %v199, 128
    %246 = vxpose.xlu0.c.b16.cont [2/8] 0, 128
    %247 = vxpose.xlu0.c.b16.cont [3/8] 0, 128
    %248 = vxpose.xlu0.c.b16.cont [4/8] 0, 128
    %249 = vxpose.xlu0.c.b16.cont [5/8] 0, 128
    %250 = vxpose.xlu0.c.b16.cont [6/8] 0, 128
    %251 = vxpose.xlu0.c.b16.cont [7/8] 0, 128
    %252 = vxpose.xlu0.c.b16.end [8/8] 0, 128
    %v253 = vpop.trf.xlu0
    %v254 = vpop.trf.xlu0
    %v255 = vpop.trf.xlu0
    %v256 = vpop.trf.xlu0
    %v257 = vpop.trf.xlu0
    %v258 = vpop.trf.xlu0
    %v259 = vpop.trf.xlu0
    %v260 = vpop.trf.xlu0
    %261 = vxpose.xlu0.c.b16.start [1/8] %v200, 128
    %262 = vxpose.xlu0.c.b16.cont [2/8] 0, 128
    %263 = vxpose.xlu0.c.b16.cont [3/8] 0, 128
    %264 = vxpose.xlu0.c.b16.cont [4/8] 0, 128
    %265 = vxpose.xlu0.c.b16.cont [5/8] 0, 128
    %266 = vxpose.xlu0.c.b16.cont [6/8] 0, 128
    %267 = vxpose.xlu0.c.b16.cont [7/8] 0, 128
    %268 = vxpose.xlu0.c.b16.end [8/8] 0, 128
    %v269 = vpop.trf.xlu0
    %v270 = vpop.trf.xlu0
    %v271 = vpop.trf.xlu0
    %v272 = vpop.trf.xlu0
    %v273 = vpop.trf.xlu0
    %v274 = vpop.trf.xlu0
    %v275 = vpop.trf.xlu0
    %v276 = vpop.trf.xlu0
    %277 = vxpose.xlu0.c.b16.start [1/8] %v201, 128
    %278 = vxpose.xlu0.c.b16.cont [2/8] 0, 128
    %279 = vxpose.xlu0.c.b16.cont [3/8] 0, 128
    %280 = vxpose.xlu0.c.b16.cont [4/8] 0, 128
    %281 = vxpose.xlu0.c.b16.cont [5/8] 0, 128
    %282 = vxpose.xlu0.c.b16.cont [6/8] 0, 128
    %283 = vxpose.xlu0.c.b16.cont [7/8] 0, 128
    %284 = vxpose.xlu0.c.b16.end [8/8] 0, 128
    %v285 = vpop.trf.xlu0
    %v286 = vpop.trf.xlu0
    %v287 = vpop.trf.xlu0
    %v288 = vpop.trf.xlu0
    %v289 = vpop.trf.xlu0
    %v290 = vpop.trf.xlu0
    %v291 = vpop.trf.xlu0
    %v292 = vpop.trf.xlu0
    %293 = vxpose.xlu0.c.b16.start [1/8] %v202, 128
    %294 = vxpose.xlu0.c.b16.cont [2/8] 0, 128
    %295 = vxpose.xlu0.c.b16.cont [3/8] 0, 128
    %296 = vxpose.xlu0.c.b16.cont [4/8] 0, 128
    %297 = vxpose.xlu0.c.b16.cont [5/8] 0, 128
    %298 = vxpose.xlu0.c.b16.cont [6/8] 0, 128
    %299 = vxpose.xlu0.c.b16.cont [7/8] 0, 128
    %300 = vxpose.xlu0.c.b16.end [8/8] 0, 128
    %v301 = vpop.trf.xlu0
    %v302 = vpop.trf.xlu0
    %v303 = vpop.trf.xlu0
    %v304 = vpop.trf.xlu0
    %v305 = vpop.trf.xlu0
    %v306 = vpop.trf.xlu0
    %v307 = vpop.trf.xlu0
    %v308 = vpop.trf.xlu0
    %309 = vxpose.xlu0.c.b16.start [1/8] %v203, 128
    %310 = vxpose.xlu0.c.b16.cont [2/8] 0, 128
    %311 = vxpose.xlu0.c.b16.cont [3/8] 0, 128
    %312 = vxpose.xlu0.c.b16.cont [4/8] 0, 128
    %313 = vxpose.xlu0.c.b16.cont [5/8] 0, 128
    %314 = vxpose.xlu0.c.b16.cont [6/8] 0, 128
    %315 = vxpose.xlu0.c.b16.cont [7/8] 0, 128
    %316 = vxpose.xlu0.c.b16.end [8/8] 0, 128
    %v317 = vpop.trf.xlu0
    %v318 = vpop.trf.xlu0
    %v319 = vpop.trf.xlu0
    %v320 = vpop.trf.xlu0
    %v321 = vpop.trf.xlu0
    %v322 = vpop.trf.xlu0
    %v323 = vpop.trf.xlu0
    %v324 = vpop.trf.xlu0
    %325 = vxpose.xlu0.c.b16.start [1/8] %v204, 128
    %326 = vxpose.xlu0.c.b16.cont [2/8] 0, 128
    %327 = vxpose.xlu0.c.b16.cont [3/8] 0, 128
    %328 = vxpose.xlu0.c.b16.cont [4/8] 0, 128
    %329 = vxpose.xlu0.c.b16.cont [5/8] 0, 128
    %330 = vxpose.xlu0.c.b16.cont [6/8] 0, 128
    %331 = vxpose.xlu0.c.b16.cont [7/8] 0, 128
    %332 = vxpose.xlu0.c.b16.end [8/8] 0, 128
    %v333 = vpop.trf.xlu0
    %v334 = vpop.trf.xlu0
    %v335 = vpop.trf.xlu0
    %v336 = vpop.trf.xlu0
    %v337 = vpop.trf.xlu0
    %v338 = vpop.trf.xlu0
    %v339 = vpop.trf.xlu0
    %v340 = vpop.trf.xlu0
    %v343 = vunpack.c.l.b16 %v151
    %v344 = vunpack.c.l.b16 %v152
    %v345 = vpack.c.b16 %v343, %v343
    %v346 = vpack.c.b16 %v344, %v344
    %347 = vrot.lane.b32.xlu0 %v345, 96
    %v348 = vpop.permute.xlu0 %347
    %349 = vrot.lane.b32.xlu0 %v346, 96
    %v350 = vpop.permute.xlu0 %349
    %353 = vxpose.xlu0.c.b16.start [1/8] %v348, 128
    %354 = vxpose.xlu0.c.b16.cont [2/8] 0, 128
    %355 = vxpose.xlu0.c.b16.cont [3/8] 0, 128
    %356 = vxpose.xlu0.c.b16.cont [4/8] 0, 128
    %357 = vxpose.xlu0.c.b16.cont [5/8] 0, 128
    %358 = vxpose.xlu0.c.b16.cont [6/8] 0, 128
    %359 = vxpose.xlu0.c.b16.cont [7/8] 0, 128
    %360 = vxpose.xlu0.c.b16.end [8/8] 0, 128
    %v361 = vpop.trf.xlu0
    %v362 = vpop.trf.xlu0
    %v363 = vpop.trf.xlu0
    %v364 = vpop.trf.xlu0
    %v365 = vpop.trf.xlu0
    %v366 = vpop.trf.xlu0
    %v367 = vpop.trf.xlu0
    %v368 = vpop.trf.xlu0
    %369 = vxpose.xlu0.c.b16.start [1/8] %v350, 128
    %370 = vxpose.xlu0.c.b16.cont [2/8] 0, 128
    %371 = vxpose.xlu0.c.b16.cont [3/8] 0, 128
    %372 = vxpose.xlu0.c.b16.cont [4/8] 0, 128
    %373 = vxpose.xlu0.c.b16.cont [5/8] 0, 128
    %374 = vxpose.xlu0.c.b16.cont [6/8] 0, 128
    %375 = vxpose.xlu0.c.b16.cont [7/8] 0, 128
    %376 = vxpose.xlu0.c.b16.end [8/8] 0, 128
    %v377 = vpop.trf.xlu0
    %v378 = vpop.trf.xlu0
    %v379 = vpop.trf.xlu0
    %v380 = vpop.trf.xlu0
    %v381 = vpop.trf.xlu0
    %v382 = vpop.trf.xlu0
    %v383 = vpop.trf.xlu0
    %v384 = vpop.trf.xlu0
    %v389 = vunpack.c.l.b16 %v361
    %v390 = vunpack.c.h.b16 %v361
    %v391 = vunpack.c.l.b16 %v362
    %v392 = vunpack.c.h.b16 %v362
    %v393 = vunpack.c.l.b16 %v377
    %v394 = vunpack.c.h.b16 %v377
    %v395 = vunpack.c.l.b16 %v378
    %v396 = vunpack.c.h.b16 %v378
    %v397 = vpack.c.b16 %v389, %v389
    %v398 = vpack.c.b16 %v390, %v390
    %v399 = vpack.c.b16 %v391, %v391
    %v400 = vpack.c.b16 %v392, %v392
    %v401 = vpack.c.b16 %v393, %v393
    %v402 = vpack.c.b16 %v394, %v394
    %v403 = vpack.c.b16 %v395, %v395
    %v404 = vpack.c.b16 %v396, %v396
    %405 = vrot.lane.b32.xlu0 %v345, 64
    %v406 = vpop.permute.xlu0 %405
    %407 = vrot.lane.b32.xlu0 %v346, 64
    %v408 = vpop.permute.xlu0 %407
    %411 = vxpose.xlu0.c.b16.start [1/8] %v406, 128
    %412 = vxpose.xlu0.c.b16.cont [2/8] 0, 128
    %413 = vxpose.xlu0.c.b16.cont [3/8] 0, 128
    %414 = vxpose.xlu0.c.b16.cont [4/8] 0, 128
    %415 = vxpose.xlu0.c.b16.cont [5/8] 0, 128
    %416 = vxpose.xlu0.c.b16.cont [6/8] 0, 128
    %417 = vxpose.xlu0.c.b16.cont [7/8] 0, 128
    %418 = vxpose.xlu0.c.b16.end [8/8] 0, 128
    %v419 = vpop.trf.xlu0
    %v420 = vpop.trf.xlu0
    %v421 = vpop.trf.xlu0
    %v422 = vpop.trf.xlu0
    %v423 = vpop.trf.xlu0
    %v424 = vpop.trf.xlu0
    %v425 = vpop.trf.xlu0
    %v426 = vpop.trf.xlu0
    %427 = vxpose.xlu0.c.b16.start [1/8] %v408, 128
    %428 = vxpose.xlu0.c.b16.cont [2/8] 0, 128
    %429 = vxpose.xlu0.c.b16.cont [3/8] 0, 128
    %430 = vxpose.xlu0.c.b16.cont [4/8] 0, 128
    %431 = vxpose.xlu0.c.b16.cont [5/8] 0, 128
    %432 = vxpose.xlu0.c.b16.cont [6/8] 0, 128
    %433 = vxpose.xlu0.c.b16.cont [7/8] 0, 128
    %434 = vxpose.xlu0.c.b16.end [8/8] 0, 128
    %v435 = vpop.trf.xlu0
    %v436 = vpop.trf.xlu0
    %v437 = vpop.trf.xlu0
    %v438 = vpop.trf.xlu0
    %v439 = vpop.trf.xlu0
    %v440 = vpop.trf.xlu0
    %v441 = vpop.trf.xlu0
    %v442 = vpop.trf.xlu0
    %v447 = vunpack.c.l.b16 %v419
    %v448 = vunpack.c.h.b16 %v419
    %v449 = vunpack.c.l.b16 %v420
    %v450 = vunpack.c.h.b16 %v420
    %v451 = vunpack.c.l.b16 %v435
    %v452 = vunpack.c.h.b16 %v435
    %v453 = vunpack.c.l.b16 %v436
    %v454 = vunpack.c.h.b16 %v436
    %v455 = vpack.c.b16 %v447, %v447
    %v456 = vpack.c.b16 %v448, %v448
    %v457 = vpack.c.b16 %v449, %v449
    %v458 = vpack.c.b16 %v450, %v450
    %v459 = vpack.c.b16 %v451, %v451
    %v460 = vpack.c.b16 %v452, %v452
    %v461 = vpack.c.b16 %v453, %v453
    %v462 = vpack.c.b16 %v454, %v454
    %vm463 = vcmask 64512
    %v465 = vsel %vm463, %v221, 0
    %vm467 = vcmask 1043456
    %v469 = vsel %vm467, %v397, 0
    %471 = vmatpush.bf16.msra.mxu0 0
    %472 = vmatpush.bf16.msra.mxu0 0
    %473 = vmatpush.bf16.msra.mxu0 0
    %474 = vmatpush.bf16.msra.mxu0 0
    %475 = vmatpush.bf16.msra.mxu0 0
    %476 = vmatpush.bf16.msra.mxu0 0
    %477 = vmatpush.bf16.msra.mxu0 0
    %478 = vmatpush.bf16.msra.mxu0 %v469
    %479 = vmatmul.bf16.gmra.mxu0 %v465
    %v480 = vpop.f32.mrf.mxu0
    %v481 = vadd.f32 0.0, %v480
    %v482 = vpop.f32.mrf.mxu0
    %483 = vdwg.mxu0
    %v485 = vsel %vm463, %v237, 0
    %v488 = vsel %vm467, %v398, 0
    %490 = vmatpush.bf16.msra.mxu0 0
    %491 = vmatpush.bf16.msra.mxu0 0
    %492 = vmatpush.bf16.msra.mxu0 0
    %493 = vmatpush.bf16.msra.mxu0 0
    %494 = vmatpush.bf16.msra.mxu0 0
    %495 = vmatpush.bf16.msra.mxu0 0
    %496 = vmatpush.bf16.msra.mxu0 0
    %497 = vmatpush.bf16.msra.mxu0 %v488
    %498 = vmatmul.bf16.gmra.mxu0 %v485
    %v499 = vpop.f32.mrf.mxu0
    %v500 = vadd.f32 0.0, %v499
    %v501 = vpop.f32.mrf.mxu0
    %502 = vdwg.mxu0
    %v504 = vsel %vm463, %v253, 0
    %v507 = vsel %vm467, %v399, 0
    %509 = vmatpush.bf16.msra.mxu0 0
    %510 = vmatpush.bf16.msra.mxu0 0
    %511 = vmatpush.bf16.msra.mxu0 0
    %512 = vmatpush.bf16.msra.mxu0 0
    %513 = vmatpush.bf16.msra.mxu0 0
    %514 = vmatpush.bf16.msra.mxu0 0
    %515 = vmatpush.bf16.msra.mxu0 0
    %516 = vmatpush.bf16.msra.mxu0 %v507
    %517 = vmatmul.bf16.gmra.mxu0 %v504
    %v518 = vpop.f32.mrf.mxu0
    %v519 = vadd.f32 0.0, %v518
    %v520 = vpop.f32.mrf.mxu0
    %521 = vdwg.mxu0
    %v523 = vsel %vm463, %v269, 0
    %v526 = vsel %vm467, %v400, 0
    %528 = vmatpush.bf16.msra.mxu0 0
    %529 = vmatpush.bf16.msra.mxu0 0
    %530 = vmatpush.bf16.msra.mxu0 0
    %531 = vmatpush.bf16.msra.mxu0 0
    %532 = vmatpush.bf16.msra.mxu0 0
    %533 = vmatpush.bf16.msra.mxu0 0
    %534 = vmatpush.bf16.msra.mxu0 0
    %535 = vmatpush.bf16.msra.mxu0 %v526
    %536 = vmatmul.bf16.gmra.mxu0 %v523
    %v537 = vpop.f32.mrf.mxu0
    %v538 = vadd.f32 0.0, %v537
    %v539 = vpop.f32.mrf.mxu0
    %540 = vdwg.mxu0
    %v542 = vsel %vm463, %v285, 0
    %v545 = vsel %vm467, %v401, 0
    %547 = vmatpush.bf16.msra.mxu0 0
    %548 = vmatpush.bf16.msra.mxu0 0
    %549 = vmatpush.bf16.msra.mxu0 0
    %550 = vmatpush.bf16.msra.mxu0 0
    %551 = vmatpush.bf16.msra.mxu0 0
    %552 = vmatpush.bf16.msra.mxu0 0
    %553 = vmatpush.bf16.msra.mxu0 0
    %554 = vmatpush.bf16.msra.mxu0 %v545
    %555 = vmatmul.bf16.gmra.mxu0 %v542
    %v556 = vpop.f32.mrf.mxu0
    %v557 = vadd.f32 0.0, %v556
    %v558 = vpop.f32.mrf.mxu0
    %559 = vdwg.mxu0
    %v561 = vsel %vm463, %v301, 0
    %v564 = vsel %vm467, %v402, 0
    %566 = vmatpush.bf16.msra.mxu0 0
    %567 = vmatpush.bf16.msra.mxu0 0
    %568 = vmatpush.bf16.msra.mxu0 0
    %569 = vmatpush.bf16.msra.mxu0 0
    %570 = vmatpush.bf16.msra.mxu0 0
    %571 = vmatpush.bf16.msra.mxu0 0
    %572 = vmatpush.bf16.msra.mxu0 0
    %573 = vmatpush.bf16.msra.mxu0 %v564
    %574 = vmatmul.bf16.gmra.mxu0 %v561
    %v575 = vpop.f32.mrf.mxu0
    %v576 = vadd.f32 0.0, %v575
    %v577 = vpop.f32.mrf.mxu0
    %578 = vdwg.mxu0
    %v580 = vsel %vm463, %v317, 0
    %v583 = vsel %vm467, %v403, 0
    %585 = vmatpush.bf16.msra.mxu0 0
    %586 = vmatpush.bf16.msra.mxu0 0
    %587 = vmatpush.bf16.msra.mxu0 0
    %588 = vmatpush.bf16.msra.mxu0 0
    %589 = vmatpush.bf16.msra.mxu0 0
    %590 = vmatpush.bf16.msra.mxu0 0
    %591 = vmatpush.bf16.msra.mxu0 0
    %592 = vmatpush.bf16.msra.mxu0 %v583
    %593 = vmatmul.bf16.gmra.mxu0 %v580
    %v594 = vpop.f32.mrf.mxu0
    %v595 = vadd.f32 0.0, %v594
    %v596 = vpop.f32.mrf.mxu0
    %597 = vdwg.mxu0
    %v599 = vsel %vm463, %v333, 0
    %v602 = vsel %vm467, %v404, 0
    %604 = vmatpush.bf16.msra.mxu0 0
    %605 = vmatpush.bf16.msra.mxu0 0
    %606 = vmatpush.bf16.msra.mxu0 0
    %607 = vmatpush.bf16.msra.mxu0 0
    %608 = vmatpush.bf16.msra.mxu0 0
    %609 = vmatpush.bf16.msra.mxu0 0
    %610 = vmatpush.bf16.msra.mxu0 0
    %611 = vmatpush.bf16.msra.mxu0 %v602
    %612 = vmatmul.bf16.gmra.mxu0 %v599
    %v613 = vpop.f32.mrf.mxu0
    %v614 = vadd.f32 0.0, %v613
    %v615 = vpop.f32.mrf.mxu0
    %616 = vdwg.mxu0
    %v617 = vsel %vm463, %v481, -inf
    %618 = vmax.xlane.f32.xlu0 %v617
    %v619 = vpop.xlane.xlu0 %618
    %v620 = vsel %vm463, %v500, -inf
    %621 = vmax.xlane.f32.xlu0 %v620
    %v622 = vpop.xlane.xlu0 %621
    %v623 = vsel %vm463, %v519, -inf
    %624 = vmax.xlane.f32.xlu0 %v623
    %v625 = vpop.xlane.xlu0 %624
    %v626 = vsel %vm463, %v538, -inf
    %627 = vmax.xlane.f32.xlu0 %v626
    %v628 = vpop.xlane.xlu0 %627
    %v629 = vsel %vm463, %v557, -inf
    %630 = vmax.xlane.f32.xlu0 %v629
    %v631 = vpop.xlane.xlu0 %630
    %v632 = vsel %vm463, %v576, -inf
    %633 = vmax.xlane.f32.xlu0 %v632
    %v634 = vpop.xlane.xlu0 %633
    %v635 = vsel %vm463, %v595, -inf
    %636 = vmax.xlane.f32.xlu0 %v635
    %v637 = vpop.xlane.xlu0 %636
    %v638 = vsel %vm463, %v614, -inf
    %639 = vmax.xlane.f32.xlu0 %v638
    %v640 = vpop.xlane.xlu0 %639
    %v641 = vsub.f32 %v481, %v619
    %v642 = vsub.f32 %v500, %v622
    %v643 = vsub.f32 %v519, %v625
    %v644 = vsub.f32 %v538, %v628
    %v645 = vsub.f32 %v557, %v631
    %v646 = vsub.f32 %v576, %v634
    %v647 = vsub.f32 %v595, %v637
    %v648 = vsub.f32 %v614, %v640
    %v649 = vmul.f32 %v641, 1.442695
    %v650 = vpow.pop %v649
    %v651 = vmul.f32 %v642, 1.442695
    %v652 = vpow.pop %v651
    %v653 = vmul.f32 %v643, 1.442695
    %v654 = vpow.pop %v653
    %v655 = vmul.f32 %v644, 1.442695
    %v656 = vpow.pop %v655
    %v657 = vmul.f32 %v645, 1.442695
    %v658 = vpow.pop %v657
    %v659 = vmul.f32 %v646, 1.442695
    %v660 = vpow.pop %v659
    %v661 = vmul.f32 %v647, 1.442695
    %v662 = vpow.pop %v661
    %v663 = vmul.f32 %v648, 1.442695
    %v664 = vpow.pop %v663
    %v665 = vsel %vm463, %v650, 0.0
    %666 = vadd.xlane.f32.xlu0 %v665
    %v667 = vpop.xlane.xlu0 %666
    %v668 = vsel %vm463, %v652, 0.0
    %669 = vadd.xlane.f32.xlu0 %v668
    %v670 = vpop.xlane.xlu0 %669
    %v671 = vsel %vm463, %v654, 0.0
    %672 = vadd.xlane.f32.xlu0 %v671
    %v673 = vpop.xlane.xlu0 %672
    %v674 = vsel %vm463, %v656, 0.0
    %675 = vadd.xlane.f32.xlu0 %v674
    %v676 = vpop.xlane.xlu0 %675
    %v677 = vsel %vm463, %v658, 0.0
    %678 = vadd.xlane.f32.xlu0 %v677
    %v679 = vpop.xlane.xlu0 %678
    %v680 = vsel %vm463, %v660, 0.0
    %681 = vadd.xlane.f32.xlu0 %v680
    %v682 = vpop.xlane.xlu0 %681
    %v683 = vsel %vm463, %v662, 0.0
    %684 = vadd.xlane.f32.xlu0 %v683
    %v685 = vpop.xlane.xlu0 %684
    %v686 = vsel %vm463, %v664, 0.0
    %687 = vadd.xlane.f32.xlu0 %v686
    %v688 = vpop.xlane.xlu0 %687
    %v689 = vrcp.pop %v667
    %v690 = vrcp.pop %v670
    %v691 = vrcp.pop %v673
    %v692 = vrcp.pop %v676
    %v693 = vrcp.pop %v679
    %v694 = vrcp.pop %v682
    %v695 = vrcp.pop %v685
    %v696 = vrcp.pop %v688
    %v697 = vmul.f32 %v650, %v689
    %v698 = vmul.f32 %v652, %v690
    %v699 = vmul.f32 %v654, %v691
    %v700 = vmul.f32 %v656, %v692
    %v701 = vmul.f32 %v658, %v693
    %v702 = vmul.f32 %v660, %v694
    %v703 = vmul.f32 %v662, %v695
    %v704 = vmul.f32 %v664, %v696
    %v705 = vpack.c.bf16 %v697, %v697
    %v706 = vpack.c.bf16 %v698, %v698
    %v707 = vpack.c.bf16 %v699, %v699
    %v708 = vpack.c.bf16 %v700, %v700
    %v709 = vpack.c.bf16 %v701, %v701
    %v710 = vpack.c.bf16 %v702, %v702
    %v711 = vpack.c.bf16 %v703, %v703
    %v712 = vpack.c.bf16 %v704, %v704
    %v714 = vsel %vm463, %v705, 0
    %v717 = vsel %vm463, %v455, 0
    %719 = vmatpush.bf16.xpose.msra.mxu0 0
    %720 = vmatpush.bf16.xpose.msra.mxu0 0
    %721 = vmatpush.bf16.xpose.msra.mxu0 0
    %722 = vmatpush.bf16.xpose.msra.mxu0 0
    %723 = vmatpush.bf16.xpose.msra.mxu0 0
    %724 = vmatpush.bf16.xpose.msra.mxu0 0
    %725 = vmatpush.bf16.xpose.msra.mxu0 0
    %726 = vmatpush.bf16.xpose.msra.mxu0 %v717
    %727 = vmatmul.bf16.gmra.mxu0 %v714
    %v728 = vpop.f32.mrf.mxu0
    %v729 = vadd.f32 0.0, %v728
    %v730 = vpop.f32.mrf.mxu0
    %731 = vdwg.mxu0
    %v733 = vsel %vm463, %v706, 0
    %v736 = vsel %vm463, %v456, 0
    %738 = vmatpush.bf16.xpose.msra.mxu0 0
    %739 = vmatpush.bf16.xpose.msra.mxu0 0
    %740 = vmatpush.bf16.xpose.msra.mxu0 0
    %741 = vmatpush.bf16.xpose.msra.mxu0 0
    %742 = vmatpush.bf16.xpose.msra.mxu0 0
    %743 = vmatpush.bf16.xpose.msra.mxu0 0
    %744 = vmatpush.bf16.xpose.msra.mxu0 0
    %745 = vmatpush.bf16.xpose.msra.mxu0 %v736
    %746 = vmatmul.bf16.gmra.mxu0 %v733
    %v747 = vpop.f32.mrf.mxu0
    %v748 = vadd.f32 0.0, %v747
    %v749 = vpop.f32.mrf.mxu0
    %750 = vdwg.mxu0
    %v752 = vsel %vm463, %v707, 0
    %v755 = vsel %vm463, %v457, 0
    %757 = vmatpush.bf16.xpose.msra.mxu0 0
    %758 = vmatpush.bf16.xpose.msra.mxu0 0
    %759 = vmatpush.bf16.xpose.msra.mxu0 0
    %760 = vmatpush.bf16.xpose.msra.mxu0 0
    %761 = vmatpush.bf16.xpose.msra.mxu0 0
    %762 = vmatpush.bf16.xpose.msra.mxu0 0
    %763 = vmatpush.bf16.xpose.msra.mxu0 0
    %764 = vmatpush.bf16.xpose.msra.mxu0 %v755
    %765 = vmatmul.bf16.gmra.mxu0 %v752
    %v766 = vpop.f32.mrf.mxu0
    %v767 = vadd.f32 0.0, %v766
    %v768 = vpop.f32.mrf.mxu0
    %769 = vdwg.mxu0
    %v771 = vsel %vm463, %v708, 0
    %v774 = vsel %vm463, %v458, 0
    %776 = vmatpush.bf16.xpose.msra.mxu0 0
    %777 = vmatpush.bf16.xpose.msra.mxu0 0
    %778 = vmatpush.bf16.xpose.msra.mxu0 0
    %779 = vmatpush.bf16.xpose.msra.mxu0 0
    %780 = vmatpush.bf16.xpose.msra.mxu0 0
    %781 = vmatpush.bf16.xpose.msra.mxu0 0
    %782 = vmatpush.bf16.xpose.msra.mxu0 0
    %783 = vmatpush.bf16.xpose.msra.mxu0 %v774
    %784 = vmatmul.bf16.gmra.mxu0 %v771
    %v785 = vpop.f32.mrf.mxu0
    %v786 = vadd.f32 0.0, %v785
    %v787 = vpop.f32.mrf.mxu0
    %788 = vdwg.mxu0
    %v790 = vsel %vm463, %v709, 0
    %v793 = vsel %vm463, %v459, 0
    %795 = vmatpush.bf16.xpose.msra.mxu0 0
    %796 = vmatpush.bf16.xpose.msra.mxu0 0
    %797 = vmatpush.bf16.xpose.msra.mxu0 0
    %798 = vmatpush.bf16.xpose.msra.mxu0 0
    %799 = vmatpush.bf16.xpose.msra.mxu0 0
    %800 = vmatpush.bf16.xpose.msra.mxu0 0
    %801 = vmatpush.bf16.xpose.msra.mxu0 0
    %802 = vmatpush.bf16.xpose.msra.mxu0 %v793
    %803 = vmatmul.bf16.gmra.mxu0 %v790
    %v804 = vpop.f32.mrf.mxu0
    %v805 = vadd.f32 0.0, %v804
    %v806 = vpop.f32.mrf.mxu0
    %807 = vdwg.mxu0
    %v809 = vsel %vm463, %v710, 0
    %v812 = vsel %vm463, %v460, 0
    %814 = vmatpush.bf16.xpose.msra.mxu0 0
    %815 = vmatpush.bf16.xpose.msra.mxu0 0
    %816 = vmatpush.bf16.xpose.msra.mxu0 0
    %817 = vmatpush.bf16.xpose.msra.mxu0 0
    %818 = vmatpush.bf16.xpose.msra.mxu0 0
    %819 = vmatpush.bf16.xpose.msra.mxu0 0
    %820 = vmatpush.bf16.xpose.msra.mxu0 0
    %821 = vmatpush.bf16.xpose.msra.mxu0 %v812
    %822 = vmatmul.bf16.gmra.mxu0 %v809
    %v823 = vpop.f32.mrf.mxu0
    %v824 = vadd.f32 0.0, %v823
    %v825 = vpop.f32.mrf.mxu0
    %826 = vdwg.mxu0
    %v828 = vsel %vm463, %v711, 0
    %v831 = vsel %vm463, %v461, 0
    %833 = vmatpush.bf16.xpose.msra.mxu0 0
    %834 = vmatpush.bf16.xpose.msra.mxu0 0
    %835 = vmatpush.bf16.xpose.msra.mxu0 0
    %836 = vmatpush.bf16.xpose.msra.mxu0 0
    %837 = vmatpush.bf16.xpose.msra.mxu0 0
    %838 = vmatpush.bf16.xpose.msra.mxu0 0
    %839 = vmatpush.bf16.xpose.msra.mxu0 0
    %840 = vmatpush.bf16.xpose.msra.mxu0 %v831
    %841 = vmatmul.bf16.gmra.mxu0 %v828
    %v842 = vpop.f32.mrf.mxu0
    %v843 = vadd.f32 0.0, %v842
    %v844 = vpop.f32.mrf.mxu0
    %845 = vdwg.mxu0
    %v847 = vsel %vm463, %v712, 0
    %v850 = vsel %vm463, %v462, 0
    %852 = vmatpush.bf16.xpose.msra.mxu0 0
    %853 = vmatpush.bf16.xpose.msra.mxu0 0
    %854 = vmatpush.bf16.xpose.msra.mxu0 0
    %855 = vmatpush.bf16.xpose.msra.mxu0 0
    %856 = vmatpush.bf16.xpose.msra.mxu0 0
    %857 = vmatpush.bf16.xpose.msra.mxu0 0
    %858 = vmatpush.bf16.xpose.msra.mxu0 0
    %859 = vmatpush.bf16.xpose.msra.mxu0 %v850
    %860 = vmatmul.bf16.gmra.mxu0 %v847
    %v861 = vpop.f32.mrf.mxu0
    %v862 = vadd.f32 0.0, %v861
    %v863 = vpop.f32.mrf.mxu0
    %864 = vdwg.mxu0
    %v865 = vpack.c.bf16 %v729, %v729
    %v866 = vpack.c.bf16 %v748, %v748
    %v867 = vpack.c.bf16 %v767, %v767
    %v868 = vpack.c.bf16 %v786, %v786
    %v869 = vpack.c.bf16 %v805, %v805
    %v870 = vpack.c.bf16 %v824, %v824
    %v871 = vpack.c.bf16 %v843, %v843
    %v872 = vpack.c.bf16 %v862, %v862
    %873 = vxpose.xlu0.c.b16.start [1/8] %v865, 128
    %874 = vxpose.xlu0.c.b16.cont [2/8] 0, 128
    %875 = vxpose.xlu0.c.b16.cont [3/8] 0, 128
    %876 = vxpose.xlu0.c.b16.cont [4/8] 0, 128
    %877 = vxpose.xlu0.c.b16.cont [5/8] 0, 128
    %878 = vxpose.xlu0.c.b16.cont [6/8] 0, 128
    %879 = vxpose.xlu0.c.b16.cont [7/8] 0, 128
    %880 = vxpose.xlu0.c.b16.end [8/8] 0, 128
    %v881 = vpop.trf.xlu0
    %v882 = vpop.trf.xlu0
    %v883 = vpop.trf.xlu0
    %v884 = vpop.trf.xlu0
    %v885 = vpop.trf.xlu0
    %v886 = vpop.trf.xlu0
    %v887 = vpop.trf.xlu0
    %v888 = vpop.trf.xlu0
    %889 = vxpose.xlu0.c.b16.start [1/8] %v866, 128
    %890 = vxpose.xlu0.c.b16.cont [2/8] 0, 128
    %891 = vxpose.xlu0.c.b16.cont [3/8] 0, 128
    %892 = vxpose.xlu0.c.b16.cont [4/8] 0, 128
    %893 = vxpose.xlu0.c.b16.cont [5/8] 0, 128
    %894 = vxpose.xlu0.c.b16.cont [6/8] 0, 128
    %895 = vxpose.xlu0.c.b16.cont [7/8] 0, 128
    %896 = vxpose.xlu0.c.b16.end [8/8] 0, 128
    %v897 = vpop.trf.xlu0
    %v898 = vpop.trf.xlu0
    %v899 = vpop.trf.xlu0
    %v900 = vpop.trf.xlu0
    %v901 = vpop.trf.xlu0
    %v902 = vpop.trf.xlu0
    %v903 = vpop.trf.xlu0
    %v904 = vpop.trf.xlu0
    %905 = vxpose.xlu0.c.b16.start [1/8] %v867, 128
    %906 = vxpose.xlu0.c.b16.cont [2/8] 0, 128
    %907 = vxpose.xlu0.c.b16.cont [3/8] 0, 128
    %908 = vxpose.xlu0.c.b16.cont [4/8] 0, 128
    %909 = vxpose.xlu0.c.b16.cont [5/8] 0, 128
    %910 = vxpose.xlu0.c.b16.cont [6/8] 0, 128
    %911 = vxpose.xlu0.c.b16.cont [7/8] 0, 128
    %912 = vxpose.xlu0.c.b16.end [8/8] 0, 128
    %v913 = vpop.trf.xlu0
    %v914 = vpop.trf.xlu0
    %v915 = vpop.trf.xlu0
    %v916 = vpop.trf.xlu0
    %v917 = vpop.trf.xlu0
    %v918 = vpop.trf.xlu0
    %v919 = vpop.trf.xlu0
    %v920 = vpop.trf.xlu0
    %921 = vxpose.xlu0.c.b16.start [1/8] %v868, 128
    %922 = vxpose.xlu0.c.b16.cont [2/8] 0, 128
    %923 = vxpose.xlu0.c.b16.cont [3/8] 0, 128
    %924 = vxpose.xlu0.c.b16.cont [4/8] 0, 128
    %925 = vxpose.xlu0.c.b16.cont [5/8] 0, 128
    %926 = vxpose.xlu0.c.b16.cont [6/8] 0, 128
    %927 = vxpose.xlu0.c.b16.cont [7/8] 0, 128
    %928 = vxpose.xlu0.c.b16.end [8/8] 0, 128
    %v929 = vpop.trf.xlu0
    %v930 = vpop.trf.xlu0
    %v931 = vpop.trf.xlu0
    %v932 = vpop.trf.xlu0
    %v933 = vpop.trf.xlu0
    %v934 = vpop.trf.xlu0
    %v935 = vpop.trf.xlu0
    %v936 = vpop.trf.xlu0
    %937 = vxpose.xlu0.c.b16.start [1/8] %v869, 128
    %938 = vxpose.xlu0.c.b16.cont [2/8] 0, 128
    %939 = vxpose.xlu0.c.b16.cont [3/8] 0, 128
    %940 = vxpose.xlu0.c.b16.cont [4/8] 0, 128
    %941 = vxpose.xlu0.c.b16.cont [5/8] 0, 128
    %942 = vxpose.xlu0.c.b16.cont [6/8] 0, 128
    %943 = vxpose.xlu0.c.b16.cont [7/8] 0, 128
    %944 = vxpose.xlu0.c.b16.end [8/8] 0, 128
    %v945 = vpop.trf.xlu0
    %v946 = vpop.trf.xlu0
    %v947 = vpop.trf.xlu0
    %v948 = vpop.trf.xlu0
    %v949 = vpop.trf.xlu0
    %v950 = vpop.trf.xlu0
    %v951 = vpop.trf.xlu0
    %v952 = vpop.trf.xlu0
    %953 = vxpose.xlu0.c.b16.start [1/8] %v870, 128
    %954 = vxpose.xlu0.c.b16.cont [2/8] 0, 128
    %955 = vxpose.xlu0.c.b16.cont [3/8] 0, 128
    %956 = vxpose.xlu0.c.b16.cont [4/8] 0, 128
    %957 = vxpose.xlu0.c.b16.cont [5/8] 0, 128
    %958 = vxpose.xlu0.c.b16.cont [6/8] 0, 128
    %959 = vxpose.xlu0.c.b16.cont [7/8] 0, 128
    %960 = vxpose.xlu0.c.b16.end [8/8] 0, 128
    %v961 = vpop.trf.xlu0
    %v962 = vpop.trf.xlu0
    %v963 = vpop.trf.xlu0
    %v964 = vpop.trf.xlu0
    %v965 = vpop.trf.xlu0
    %v966 = vpop.trf.xlu0
    %v967 = vpop.trf.xlu0
    %v968 = vpop.trf.xlu0
    %969 = vxpose.xlu0.c.b16.start [1/8] %v871, 128
    %970 = vxpose.xlu0.c.b16.cont [2/8] 0, 128
    %971 = vxpose.xlu0.c.b16.cont [3/8] 0, 128
    %972 = vxpose.xlu0.c.b16.cont [4/8] 0, 128
    %973 = vxpose.xlu0.c.b16.cont [5/8] 0, 128
    %974 = vxpose.xlu0.c.b16.cont [6/8] 0, 128
    %975 = vxpose.xlu0.c.b16.cont [7/8] 0, 128
    %976 = vxpose.xlu0.c.b16.end [8/8] 0, 128
    %v977 = vpop.trf.xlu0
    %v978 = vpop.trf.xlu0
    %v979 = vpop.trf.xlu0
    %v980 = vpop.trf.xlu0
    %v981 = vpop.trf.xlu0
    %v982 = vpop.trf.xlu0
    %v983 = vpop.trf.xlu0
    %v984 = vpop.trf.xlu0
    %985 = vxpose.xlu0.c.b16.start [1/8] %v872, 128
    %986 = vxpose.xlu0.c.b16.cont [2/8] 0, 128
    %987 = vxpose.xlu0.c.b16.cont [3/8] 0, 128
    %988 = vxpose.xlu0.c.b16.cont [4/8] 0, 128
    %989 = vxpose.xlu0.c.b16.cont [5/8] 0, 128
    %990 = vxpose.xlu0.c.b16.cont [6/8] 0, 128
    %991 = vxpose.xlu0.c.b16.cont [7/8] 0, 128
    %992 = vxpose.xlu0.c.b16.end [8/8] 0, 128
    %v993 = vpop.trf.xlu0
    %v994 = vpop.trf.xlu0
    %v995 = vpop.trf.xlu0
    %v996 = vpop.trf.xlu0
    %v997 = vpop.trf.xlu0
    %v998 = vpop.trf.xlu0
    %v999 = vpop.trf.xlu0
    %v1000 = vpop.trf.xlu0
    %v1009 = vunpack.c.l.b16 %v881
    %v1010 = vunpack.c.l.b16 %v897
    %v1011 = vunpack.c.l.b16 %v913
    %v1012 = vunpack.c.l.b16 %v929
    %v1013 = vunpack.c.l.b16 %v945
    %v1014 = vunpack.c.l.b16 %v961
    %v1015 = vunpack.c.l.b16 %v977
    %v1016 = vunpack.c.l.b16 %v993
    %v1017 = vpack.c.b16 %v1010, %v1009
    %v1018 = vpack.c.b16 %v1012, %v1011
    %v1019 = vpack.c.b16 %v1014, %v1013
    %v1020 = vpack.c.b16 %v1016, %v1015
    %1025 = vxpose.xlu0.c.b16.start [1/8] %v1017, 128
    %1026 = vxpose.xlu0.c.b16.cont [2/8] %v1018, 128
    %1027 = vxpose.xlu0.c.b16.cont [3/8] 0, 128
    %1028 = vxpose.xlu0.c.b16.cont [4/8] 0, 128
    %1029 = vxpose.xlu0.c.b16.cont [5/8] 0, 128
    %1030 = vxpose.xlu0.c.b16.cont [6/8] 0, 128
    %1031 = vxpose.xlu0.c.b16.cont [7/8] 0, 128
    %1032 = vxpose.xlu0.c.b16.end [8/8] 0, 128
    %v1033 = vpop.trf.xlu0
    %v1034 = vpop.trf.xlu0
    %v1035 = vpop.trf.xlu0
    %v1036 = vpop.trf.xlu0
    %v1037 = vpop.trf.xlu0
    %v1038 = vpop.trf.xlu0
    %v1039 = vpop.trf.xlu0
    %v1040 = vpop.trf.xlu0
    %1041 = vxpose.xlu0.c.b16.start [1/8] %v1019, 128
    %1042 = vxpose.xlu0.c.b16.cont [2/8] %v1020, 128
    %1043 = vxpose.xlu0.c.b16.cont [3/8] 0, 128
    %1044 = vxpose.xlu0.c.b16.cont [4/8] 0, 128
    %1045 = vxpose.xlu0.c.b16.cont [5/8] 0, 128
    %1046 = vxpose.xlu0.c.b16.cont [6/8] 0, 128
    %1047 = vxpose.xlu0.c.b16.cont [7/8] 0, 128
    %1048 = vxpose.xlu0.c.b16.end [8/8] 0, 128
    %v1049 = vpop.trf.xlu0
    %v1050 = vpop.trf.xlu0
    %v1051 = vpop.trf.xlu0
    %v1052 = vpop.trf.xlu0
    %v1053 = vpop.trf.xlu0
    %v1054 = vpop.trf.xlu0
    %v1055 = vpop.trf.xlu0
    %v1056 = vpop.trf.xlu0
    %v1057 = vld [vmem:[%s5] sm:$0xf]
    %v1058 = vld [vmem:[%s5 + $0x4] sm:$0xf]
    %v1059 = vld [vmem:[%s5 + $0x8] sm:$0xf]
    %v1060 = vld [vmem:[%s5 + $0xc] sm:$0xf]
    %v1061 = vld [vmem:[%s6] sm:$0x1]
    %v1063 = vperm.slane %v1061, 0
    %v1067 = vunpack.c.l.b16 %v1033
    %v1068 = vunpack.c.l.b16 %v1049
    %v1069 = vpack.c.b16 %v1068, %v1067
    %v1074 = vunpack.c.l.b16 %v1057
    %v1075 = vunpack.c.l.b16 %v1058
    %v1076 = vunpack.c.l.b16 %v1059
    %v1077 = vunpack.c.l.b16 %v1060
    %v1078 = vpack.c.b16 %v1075, %v1074
    %v1079 = vpack.c.b16 %v1077, %v1076
    %v1083 = vsel %vm51, %v1069, 0
    %1085 = vmatpush.bf16.msra.mxu0 0
    %1086 = vmatpush.bf16.msra.mxu0 0
    %1087 = vmatpush.bf16.msra.mxu0 0
    %1088 = vmatpush.bf16.msra.mxu0 0
    %1089 = vmatpush.bf16.msra.mxu0 0
    %1090 = vmatpush.bf16.msra.mxu0 0
    %1091 = vmatpush.bf16.msra.mxu0 %v1079
    %1092 = vmatpush.bf16.msra.mxu0 %v1078
    %1093 = vmatmul.bf16.gmra.mxu0 %v1083
    %v1094 = vpop.f32.mrf.mxu0
    %v1095 = vadd.f32 %v1063, %v1094
    %v1096 = vpop.f32.mrf.mxu0
    %v1097 = vadd.f32 %v1063, %v1096
    %1098 = vdwg.mxu0
    %v1099 = vadd.f32 %v47, %v1095
    %v1100 = vadd.f32 %v48, %v1097
    %v1101 = vld [vmem:[%s7] sm:$0x1]
    %v1102 = vld [vmem:[%s8] sm:$0x1]
    %v1103 = vsel %vm51, %v1099, 0.0
    %1104 = vadd.xlane.f32.xlu0 %v1103
    %v1105 = vpop.xlane.xlu0 %1104
    %v1106 = vsel %vm51, %v1100, 0.0
    %1107 = vadd.xlane.f32.xlu0 %v1106
    %v1108 = vpop.xlane.xlu0 %1107
    %v1109 = vmul.f32 %v1105, %v64
    %v1110 = vmul.f32 %v1108, %v64
    %v1111 = vsub.f32 %v1099, %v1109
    %v1112 = vsub.f32 %v1100, %v1110
    %v1113 = vmul.f32 %v1111, %v1111
    %v1114 = vmul.f32 %v1112, %v1112
    %v1115 = vsel %vm51, %v1113, 0.0
    %1116 = vadd.xlane.f32.xlu0 %v1115
    %v1117 = vpop.xlane.xlu0 %1116
    %v1118 = vsel %vm51, %v1114, 0.0
    %1119 = vadd.xlane.f32.xlu0 %v1118
    %v1120 = vpop.xlane.xlu0 %1119
    %v1121 = vmul.f32 %v1117, %v64
    %v1122 = vmul.f32 %v1120, %v64
    %v1123 = vadd.f32 %v1121, 1e-05
    %v1124 = vadd.f32 %v1122, 1e-05
    %v1125 = vrsqrt.pop %v1123
    %v1126 = vmul.f32 %v1125, %v1123
    %v1127 = vmul.f32 %v1126, %v1125
    %v1128 = vmul.f32 0.5, %v1127
    %v1129 = vsub.f32 1.5, %v1128
    %v1130 = vmul.f32 %v1125, %v1129
    %vm1131 = vweird.f32 %v1123
    %vm1132 = vweird.f32 %v1125
    %vm1133 = vmor %vm1131, %vm1132
    %v1134 = vsel %vm1133, %v1125, %v1130
    %v1135 = vrsqrt.pop %v1124
    %v1136 = vmul.f32 %v1135, %v1124
    %v1137 = vmul.f32 %v1136, %v1135
    %v1138 = vmul.f32 0.5, %v1137
    %v1139 = vsub.f32 1.5, %v1138
    %v1140 = vmul.f32 %v1135, %v1139
    %vm1141 = vweird.f32 %v1124
    %vm1142 = vweird.f32 %v1135
    %vm1143 = vmor %vm1141, %vm1142
    %v1144 = vsel %vm1143, %v1135, %v1140
    %v1145 = vmul.f32 %v1111, %v1134
    %v1146 = vmul.f32 %v1112, %v1144
    %v1148 = vperm.slane %v1101, 0
    %v1150 = vmul.f32 %v1145, %v1148
    %v1151 = vmul.f32 %v1146, %v1148
    %v1153 = vperm.slane %v1102, 0
    %v1155 = vadd.f32 %v1150, %v1153
    %v1156 = vadd.f32 %v1151, %v1153
    %v1157 = vpack.c.bf16 %v1156, %v1155
    %v1158 = vld [vmem:[%s9] sm:$0xf]
    %v1159 = vld [vmem:[%s9 + $0x4] sm:$0xf]
    %v1160 = vld [vmem:[%s9 + $0x8] sm:$0xf]
    %v1161 = vld [vmem:[%s9 + $0xc] sm:$0xf]
    %v1162 = vld [vmem:[%s10] sm:$0x1]
    %v1164 = vperm.slane %v1162, 0
    %v1170 = vunpack.c.l.b16 %v1158
    %v1171 = vunpack.c.l.b16 %v1159
    %v1172 = vunpack.c.l.b16 %v1160
    %v1173 = vunpack.c.l.b16 %v1161
    %v1174 = vpack.c.b16 %v1171, %v1170
    %v1175 = vpack.c.b16 %v1173, %v1172
    %v1179 = vsel %vm51, %v1157, 0
    %1181 = vmatpush.bf16.msra.mxu0 0
    %1182 = vmatpush.bf16.msra.mxu0 0
    %1183 = vmatpush.bf16.msra.mxu0 0
    %1184 = vmatpush.bf16.msra.mxu0 0
    %1185 = vmatpush.bf16.msra.mxu0 0
    %1186 = vmatpush.bf16.msra.mxu0 0
    %1187 = vmatpush.bf16.msra.mxu0 %v1175
    %1188 = vmatpush.bf16.msra.mxu0 %v1174
    %1189 = vmatmul.bf16.gmra.mxu0 %v1179
    %v1190 = vpop.f32.mrf.mxu0
    %v1191 = vadd.f32 %v1164, %v1190
    %v1192 = vpop.f32.mrf.mxu0
    %v1193 = vadd.f32 %v1164, %v1192
    %1194 = vdwg.mxu0
    %v1195 = vpack.c.bf16 %v1191, %v1191
    %v1196 = vpack.c.bf16 %v1193, %v1193
    %v1197 = vunpack.c.l.bf16 %v1195
    %v1198 = vunpack.c.l.bf16 %v1196
    %v1199 = vmul.f32 %v1197, 1.703125
    %v1200 = vmul.f32 %v1198, 1.703125
    %v1201 = vpack.c.bf16 %v1199, %v1199
    %v1202 = vpack.c.bf16 %v1200, %v1200
    %v1203 = vxor.u32 %v1201, 2147516416
    %v1204 = vxor.u32 %v1202, 2147516416
    %v1205 = vunpack.c.l.bf16 %v1203
    %v1206 = vunpack.c.l.bf16 %v1204
    %v1207 = vmul.f32 %v1205, 1.442695
    %v1208 = vpow.pop %v1207
    %v1209 = vmul.f32 %v1206, 1.442695
    %v1210 = vpow.pop %v1209
    %v1211 = vpack.c.bf16 %v1208, %v1208
    %v1212 = vpack.c.bf16 %v1210, %v1210
    %v1213 = vunpack.c.l.bf16 %v1211
    %v1214 = vunpack.c.l.bf16 %v1212
    %v1215 = vadd.f32 %v1213, 1.0
    %v1216 = vadd.f32 %v1214, 1.0
    %v1217 = vpack.c.bf16 %v1215, %v1215
    %v1218 = vpack.c.bf16 %v1216, %v1216
    %v1219 = vunpack.c.h.bf16 1065369472
    %v1220 = vunpack.c.l.bf16 1065369472
    %v1221 = vunpack.c.h.bf16 %v1217
    %v1222 = vunpack.c.l.bf16 %v1217
    %v1223 = vrcp.pop %v1221
    %v1224 = vmul.f32 %v1219, %v1223
    %v1225 = vrcp.pop %v1222
    %v1226 = vmul.f32 %v1220, %v1225
    %v1227 = vpack.c.bf16 %v1224, %v1226
    %v1228 = vunpack.c.h.bf16 %v1218
    %v1229 = vunpack.c.l.bf16 %v1218
    %v1230 = vrcp.pop %v1228
    %v1231 = vmul.f32 %v1219, %v1230
    %v1232 = vrcp.pop %v1229
    %v1233 = vmul.f32 %v1220, %v1232
    %v1234 = vpack.c.bf16 %v1231, %v1233
    %v1235 = vunpack.c.l.bf16 %v1227
    %v1236 = vunpack.c.l.bf16 %v1234
    %v1237 = vmul.f32 %v1197, %v1235
    %v1238 = vmul.f32 %v1198, %v1236
    %v1239 = vpack.c.bf16 %v1238, %v1237
    %v1240 = vld [vmem:[%s11] sm:$0xf]
    %v1241 = vld [vmem:[%s11 + $0x4] sm:$0xf]
    %v1242 = vld [vmem:[%s11 + $0x8] sm:$0xf]
    %v1243 = vld [vmem:[%s11 + $0xc] sm:$0xf]
    %v1244 = vld [vmem:[%s11 + $0x10] sm:$0xf]
    %v1245 = vld [vmem:[%s11 + $0x14] sm:$0xf]
    %v1246 = vld [vmem:[%s11 + $0x18] sm:$0xf]
    %v1247 = vld [vmem:[%s11 + $0x1c] sm:$0xf]
    %v1248 = vld [vmem:[%s11 + $0x20] sm:$0xf]
    %v1249 = vld [vmem:[%s11 + $0x24] sm:$0xf]
    %v1250 = vld [vmem:[%s11 + $0x28] sm:$0xf]
    %v1251 = vld [vmem:[%s11 + $0x2c] sm:$0xf]
    %v1252 = vld [vmem:[%s11 + $0x30] sm:$0xf]
    %v1253 = vld [vmem:[%s11 + $0x34] sm:$0xf]
    %v1254 = vld [vmem:[%s11 + $0x38] sm:$0xf]
    %v1255 = vld [vmem:[%s11 + $0x3c] sm:$0xf]
    %v1256 = vld [vmem:[%s12] sm:$0x1]
    %v1258 = vperm.slane %v1256, 0
    %v1276 = vunpack.c.l.b16 %v1240
    %v1277 = vunpack.c.l.b16 %v1241
    %v1278 = vunpack.c.l.b16 %v1242
    %v1279 = vunpack.c.l.b16 %v1243
    %v1280 = vunpack.c.l.b16 %v1244
    %v1281 = vunpack.c.l.b16 %v1245
    %v1282 = vunpack.c.l.b16 %v1246
    %v1283 = vunpack.c.l.b16 %v1247
    %v1284 = vunpack.c.l.b16 %v1248
    %v1285 = vunpack.c.l.b16 %v1249
    %v1286 = vunpack.c.l.b16 %v1250
    %v1287 = vunpack.c.l.b16 %v1251
    %v1288 = vunpack.c.l.b16 %v1252
    %v1289 = vunpack.c.l.b16 %v1253
    %v1290 = vunpack.c.l.b16 %v1254
    %v1291 = vunpack.c.l.b16 %v1255
    %v1292 = vpack.c.b16 %v1277, %v1276
    %v1293 = vpack.c.b16 %v1279, %v1278
    %v1294 = vpack.c.b16 %v1281, %v1280
    %v1295 = vpack.c.b16 %v1283, %v1282
    %v1296 = vpack.c.b16 %v1285, %v1284
    %v1297 = vpack.c.b16 %v1287, %v1286
    %v1298 = vpack.c.b16 %v1289, %v1288
    %v1299 = vpack.c.b16 %v1291, %v1290
    %1308 = vmatpush.bf16.msra.mxu0 %v1299
    %1309 = vmatpush.bf16.msra.mxu0 %v1298
    %1310 = vmatpush.bf16.msra.mxu0 %v1297
    %1311 = vmatpush.bf16.msra.mxu0 %v1296
    %1312 = vmatpush.bf16.msra.mxu0 %v1295
    %1313 = vmatpush.bf16.msra.mxu0 %v1294
    %1314 = vmatpush.bf16.msra.mxu0 %v1293
    %1315 = vmatpush.bf16.msra.mxu0 %v1292
    %1316 = vmatmul.bf16.gmra.mxu0 %v1239
    %v1317 = vpop.f32.mrf.mxu0
    %v1318 = vadd.f32 %v1258, %v1317
    %v1319 = vpop.f32.mrf.mxu0
    %v1320 = vadd.f32 %v1258, %v1319
    %1321 = vdwg.mxu0
    %v1322 = vadd.f32 %v1099, %v1318
    %v1323 = vadd.f32 %v1100, %v1320
    %1324 = vst.msk [vmem:[#allocation2] sm:$0xff] %vm51, %v1322
    %1325 = vst.msk [vmem:[#allocation2 + $0x8] sm:$0xff] %vm51, %v1323
    // Predicated region
    $region54: #{tpu_custom_call.1} parent=1 // pred_check
      _
    $region55: #{tpu_custom_call.1} parent=1 // pred_check_branch
      %1327 = sbr.rel (0) target = $region57
    $region56: #{tpu_custom_call.1} parent=1 // pred_region
      %1329 = vsyncadd [#allocation3], 0
      %s1330 = sshll.u32 [#allocation2], 4
      %s1331 = int_to_ptr.vmem [resolvable:$true] %s1330
      %s1332 = sshll.u32 %s13, 4
      %s1333 = int_to_ptr.hbm [resolvable:$true] %s1332
      %1338 = dma.vmem_to_hbm [thread:$0]  %s1331, 256, %s1333, [#allocation3], 128, 128, 8
    $region57: #{tpu_custom_call.1} parent=1 // pred_fallthru
      _
    // Predicated region
    $region58: #{tpu_custom_call.1} parent=1 // pred_check
      _
    $region59: #{tpu_custom_call.1} parent=1 // pred_check_branch
      %1340 = sbr.rel (0) target = $region61
    $region60: #{tpu_custom_call.1} parent=1 // pred_region
      %1342 = dma.done [#allocation3], 256
    $region61: #{tpu_custom_call.1} parent=1 // pred_fallthru
      _
    %1343 = vsyncpa [#allocation3], 1

// kernel: tpu_custom_call.1
$region0: #{tpu_custom_call.1}
  #allocation0 [shape = 'u32[]', space=smem, size = 0x4, offset = 0x4, fixed_abs, tag = 'smem constant byte address 0x4 - core index']
  #allocation1 [shape = 'u32[72,128]{1,0:T(1,128)}', space=vmem, size = 0x9000, scoped, tag = 'internal scratch']
  %s0 = inlined_call_operand.vmem [shape: f32[2,8,32], index: 0, kind: input, shape index: {}]
  %s1 = inlined_call_operand.vmem [shape: f32[1,32], index: 1, kind: input, shape index: {}]
  %s2 = inlined_call_operand.vmem [shape: f32[1,32], index: 2, kind: input, shape index: {}]
  %s3 = inlined_call_operand.vmem [shape: bf16[32,96], index: 3, kind: input, shape index: {}]
  %s4 = inlined_call_operand.vmem [shape: f32[1,96], index: 4, kind: input, shape index: {}]
  %s5 = inlined_call_operand.vmem [shape: bf16[32,32], index: 5, kind: input, shape index: {}]
  %s6 = inlined_call_operand.vmem [shape: f32[1,32], index: 6, kind: input, shape index: {}]
  %s7 = inlined_call_operand.vmem [shape: f32[1,32], index: 7, kind: input, shape index: {}]
  %s8 = inlined_call_operand.vmem [shape: f32[1,32], index: 8, kind: input, shape index: {}]
  %s9 = inlined_call_operand.vmem [shape: bf16[32,128], index: 9, kind: input, shape index: {}]
  %s10 = inlined_call_operand.vmem [shape: f32[1,128], index: 10, kind: input, shape index: {}]
  %s11 = inlined_call_operand.vmem [shape: bf16[128,32], index: 11, kind: input, shape index: {}]
  %s12 = inlined_call_operand.vmem [shape: f32[1,32], index: 12, kind: input, shape index: {}]
  %s13 = inlined_call_operand.hbm [shape: f32[2,8,32], index: 13, kind: output, shape index: {}]
  %s14 = sld [smem:[#allocation0]]
  $region62: #{tpu_custom_call.1} parent=0
    _
  %s16 = ssub.s32 1, %s14
  %s17 = scalar_select 0, %s16, %s14
  $region1: #{tpu_custom_call.1} parent=0
    #allocation2 [shape = 'u8[8192]{0}', space=vmem, size = 0x2000, scoped, tag = 'output window, operand 0, single buffered']
    #allocation3 [shape = 's32[1]{0}', space=sflag, size = 0x4, scoped, tag = 'scoped memory for tpu_custom_call.1']
    %18 = vsyncpa [#allocation3], 0
    // Predicated region
    $region2: #{tpu_custom_call.1} parent=1 // pred_check
      _
    $region3: #{tpu_custom_call.1} parent=1 // pred_check_branch
      %20 = sbr.rel (0) target = $region5
    $region4: #{tpu_custom_call.1} parent=1 // pred_region
      _
    $region5: #{tpu_custom_call.1} parent=1 // pred_fallthru
      _
    // Predicated region
    $region6: #{tpu_custom_call.1} parent=1 // pred_check
      _
    $region7: #{tpu_custom_call.1} parent=1 // pred_check_branch
      %22 = sbr.rel (0) target = $region9
    $region8: #{tpu_custom_call.1} parent=1 // pred_region
      _
    $region9: #{tpu_custom_call.1} parent=1 // pred_fallthru
      _
    // Predicated region
    $region10: #{tpu_custom_call.1} parent=1 // pred_check
      _
    $region11: #{tpu_custom_call.1} parent=1 // pred_check_branch
      %24 = sbr.rel (0) target = $region13
    $region12: #{tpu_custom_call.1} parent=1 // pred_region
      _
    $region13: #{tpu_custom_call.1} parent=1 // pred_fallthru
      _
    // Predicated region
    $region14: #{tpu_custom_call.1} parent=1 // pred_check
      _
    $region15: #{tpu_custom_call.1} parent=1 // pred_check_branch
      %26 = sbr.rel (0) target = $region17
    $region16: #{tpu_custom_call.1} parent=1 // pred_region
      _
    $region17: #{tpu_custom_call.1} parent=1 // pred_fallthru
      _
    // Predicated region
    $region18: #{tpu_custom_call.1} parent=1 // pred_check
      _
    $region19: #{tpu_custom_call.1} parent=1 // pred_check_branch
      %28 = sbr.rel (0) target = $region21
    $region20: #{tpu_custom_call.1} parent=1 // pred_region
      _
    $region21: #{tpu_custom_call.1} parent=1 // pred_fallthru
      _
    // Predicated region
    $region22: #{tpu_custom_call.1} parent=1 // pred_check
      _
    $region23: #{tpu_custom_call.1} parent=1 // pred_check_branch
      %30 = sbr.rel (0) target = $region25
    $region24: #{tpu_custom_call.1} parent=1 // pred_region
      _
    $region25: #{tpu_custom_call.1} parent=1 // pred_fallthru
      _
    // Predicated region
    $region26: #{tpu_custom_call.1} parent=1 // pred_check
      _
    $region27: #{tpu_custom_call.1} parent=1 // pred_check_branch
      %32 = sbr.rel (0) target = $region29
    $region28: #{tpu_custom_call.1} parent=1 // pred_region
      _
    $region29: #{tpu_custom_call.1} parent=1 // pred_fallthru
      _
    // Predicated region
    $region30: #{tpu_custom_call.1} parent=1 // pred_check
      _
    $region31: #{tpu_custom_call.1} parent=1 // pred_check_branch
      %34 = sbr.rel (0) target = $region33
    $region32: #{tpu_custom_call.1} parent=1 // pred_region
      _
    $region33: #{tpu_custom_call.1} parent=1 // pred_fallthru
      _
    // Predicated region
    $region34: #{tpu_custom_call.1} parent=1 // pred_check
      _
    $region35: #{tpu_custom_call.1} parent=1 // pred_check_branch
      %36 = sbr.rel (0) target = $region37
    $region36: #{tpu_custom_call.1} parent=1 // pred_region
      _
    $region37: #{tpu_custom_call.1} parent=1 // pred_fallthru
      _
    // Predicated region
    $region38: #{tpu_custom_call.1} parent=1 // pred_check
      _
    $region39: #{tpu_custom_call.1} parent=1 // pred_check_branch
      %38 = sbr.rel (0) target = $region41
    $region40: #{tpu_custom_call.1} parent=1 // pred_region
      _
    $region41: #{tpu_custom_call.1} parent=1 // pred_fallthru
      _
    // Predicated region
    $region42: #{tpu_custom_call.1} parent=1 // pred_check
      _
    $region43: #{tpu_custom_call.1} parent=1 // pred_check_branch
      %40 = sbr.rel (0) target = $region45
    $region44: #{tpu_custom_call.1} parent=1 // pred_region
      _
    $region45: #{tpu_custom_call.1} parent=1 // pred_fallthru
      _
    // Predicated region
    $region46: #{tpu_custom_call.1} parent=1 // pred_check
      _
    $region47: #{tpu_custom_call.1} parent=1 // pred_check_branch
      %42 = sbr.rel (0) target = $region49
    $region48: #{tpu_custom_call.1} parent=1 // pred_region
      _
    $region49: #{tpu_custom_call.1} parent=1 // pred_fallthru
      _
    // Predicated region
    $region50: #{tpu_custom_call.1} parent=1 // pred_check
      _
    $region51: #{tpu_custom_call.1} parent=1 // pred_check_branch
      %44 = sbr.rel (0) target = $region53
    $region52: #{tpu_custom_call.1} parent=1 // pred_region
      _
    $region53: #{tpu_custom_call.1} parent=1 // pred_fallthru
      _
    %v47 = vld [vmem:[%s0] sm:$0xff]
    %v48 = vld [vmem:[%s0 + $0x8] sm:$0xff]
    %v49 = vld [vmem:[%s1] sm:$0x1]
    %v50 = vld [vmem:[%s2] sm:$0x1]
    %vm51 = vcmask 261120
    %v52 = vsel %vm51, %v47, 0.0
    %53 = vadd.xlane.f32.xlu0 %v52
    %v54 = vpop.xlane.xlu0 %53
    %v55 = vsel %vm51, %v48, 0.0
    %56 = vadd.xlane.f32.xlu0 %v55
    %v57 = vpop.xlane.xlu0 %56
    %v58 = vrcp.pop 32.0
    %v59 = vmul.f32 32.0, %v58
    %v60 = vsub.f32 1.0, %v59
    %v61 = vmul.f32 %v58, %v60
    %v62 = vadd.f32 %v58, %v61
    %vm63 = vweird.f32 %v58
    %v64 = vsel %vm63, %v58, %v62
    %v65 = vmul.f32 %v54, %v64
    %v66 = vmul.f32 %v57, %v64
    %v67 = vsub.f32 %v47, %v65
    %v68 = vsub.f32 %v48, %v66
    %v69 = vmul.f32 %v67, %v67
    %v70 = vmul.f32 %v68, %v68
    %v71 = vsel %vm51, %v69, 0.0
    %72 = vadd.xlane.f32.xlu0 %v71
    %v73 = vpop.xlane.xlu0 %72
    %v74 = vsel %vm51, %v70, 0.0
    %75 = vadd.xlane.f32.xlu0 %v74
    %v76 = vpop.xlane.xlu0 %75
    %v77 = vmul.f32 %v73, %v64
    %v78 = vmul.f32 %v76, %v64
    %v79 = vadd.f32 %v77, 1e-05
    %v80 = vadd.f32 %v78, 1e-05
    %v81 = vrsqrt.pop %v79
    %v82 = vmul.f32 %v81, %v79
    %v83 = vmul.f32 %v82, %v81
    %v84 = vmul.f32 0.5, %v83
    %v85 = vsub.f32 1.5, %v84
    %v86 = vmul.f32 %v81, %v85
    %vm87 = vweird.f32 %v79
    %vm88 = vweird.f32 %v81
    %vm89 = vmor %vm87, %vm88
    %v90 = vsel %vm89, %v81, %v86
    %v91 = vrsqrt.pop %v80
    %v92 = vmul.f32 %v91, %v80
    %v93 = vmul.f32 %v92, %v91
    %v94 = vmul.f32 0.5, %v93
    %v95 = vsub.f32 1.5, %v94
    %v96 = vmul.f32 %v91, %v95
    %vm97 = vweird.f32 %v80
    %vm98 = vweird.f32 %v91
    %vm99 = vmor %vm97, %vm98
    %v100 = vsel %vm99, %v91, %v96
    %v101 = vmul.f32 %v67, %v90
    %v102 = vmul.f32 %v68, %v100
    %v104 = vperm.slane %v49, 0
    %v106 = vmul.f32 %v101, %v104
    %v107 = vmul.f32 %v102, %v104
    %v109 = vperm.slane %v50, 0
    %v111 = vadd.f32 %v106, %v109
    %v112 = vadd.f32 %v107, %v109
    %v113 = vpack.c.bf16 %v112, %v111
    %v114 = vld [vmem:[%s3] sm:$0xf]
    %v115 = vld [vmem:[%s3 + $0x4] sm:$0xf]
    %v116 = vld [vmem:[%s3 + $0x8] sm:$0xf]
    %v117 = vld [vmem:[%s3 + $0xc] sm:$0xf]
    %v118 = vld [vmem:[%s4] sm:$0x1]
    %v120 = vperm.slane %v118, 0
    %v126 = vunpack.c.l.b16 %v114
    %v127 = vunpack.c.l.b16 %v115
    %v128 = vunpack.c.l.b16 %v116
    %v129 = vunpack.c.l.b16 %v117
    %v130 = vpack.c.b16 %v127, %v126
    %v131 = vpack.c.b16 %v129, %v128
    %v135 = vsel %vm51, %v113, 0
    %137 = vmatpush.bf16.msra.mxu0 0
    %138 = vmatpush.bf16.msra.mxu0 0
    %139 = vmatpush.bf16.msra.mxu0 0
    %140 = vmatpush.bf16.msra.mxu0 0
    %141 = vmatpush.bf16.msra.mxu0 0
    %142 = vmatpush.bf16.msra.mxu0 0
    %143 = vmatpush.bf16.msra.mxu0 %v131
    %144 = vmatpush.bf16.msra.mxu0 %v130
    %145 = vmatmul.bf16.gmra.mxu0 %v135
    %v146 = vpop.f32.mrf.mxu0
    %v147 = vadd.f32 %v120, %v146
    %v148 = vpop.f32.mrf.mxu0
    %v149 = vadd.f32 %v120, %v148
    %150 = vdwg.mxu0
    %v151 = vpack.c.bf16 %v147, %v147
    %v152 = vpack.c.bf16 %v149, %v149
    %153 = vxpose.xlu0.c.b16.start [1/8] %v151, 128
    %154 = vxpose.xlu0.c.b16.cont [2/8] 0, 128
    %155 = vxpose.xlu0.c.b16.cont [3/8] 0, 128
    %156 = vxpose.xlu0.c.b16.cont [4/8] 0, 128
    %157 = vxpose.xlu0.c.b16.cont [5/8] 0, 128
    %158 = vxpose.xlu0.c.b16.cont [6/8] 0, 128
    %159 = vxpose.xlu0.c.b16.cont [7/8] 0, 128
    %160 = vxpose.xlu0.c.b16.end [8/8] 0, 128
    %v161 = vpop.trf.xlu0
    %v162 = vpop.trf.xlu0
    %v163 = vpop.trf.xlu0
    %v164 = vpop.trf.xlu0
    %v165 = vpop.trf.xlu0
    %v166 = vpop.trf.xlu0
    %v167 = vpop.trf.xlu0
    %v168 = vpop.trf.xlu0
    %169 = vxpose.xlu0.c.b16.start [1/8] %v152, 128
    %170 = vxpose.xlu0.c.b16.cont [2/8] 0, 128
    %171 = vxpose.xlu0.c.b16.cont [3/8] 0, 128
    %172 = vxpose.xlu0.c.b16.cont [4/8] 0, 128
    %173 = vxpose.xlu0.c.b16.cont [5/8] 0, 128
    %174 = vxpose.xlu0.c.b16.cont [6/8] 0, 128
    %175 = vxpose.xlu0.c.b16.cont [7/8] 0, 128
    %176 = vxpose.xlu0.c.b16.end [8/8] 0, 128
    %v177 = vpop.trf.xlu0
    %v178 = vpop.trf.xlu0
    %v179 = vpop.trf.xlu0
    %v180 = vpop.trf.xlu0
    %v181 = vpop.trf.xlu0
    %v182 = vpop.trf.xlu0
    %v183 = vpop.trf.xlu0
    %v184 = vpop.trf.xlu0
    %v189 = vunpack.c.l.b16 %v161
    %v190 = vunpack.c.h.b16 %v161
    %v191 = vunpack.c.l.b16 %v162
    %v192 = vunpack.c.h.b16 %v162
    %v193 = vunpack.c.l.b16 %v177
    %v194 = vunpack.c.h.b16 %v177
    %v195 = vunpack.c.l.b16 %v178
    %v196 = vunpack.c.h.b16 %v178
    %v197 = vpack.c.b16 %v189, %v189
    %v198 = vpack.c.b16 %v190, %v190
    %v199 = vpack.c.b16 %v191, %v191
    %v200 = vpack.c.b16 %v192, %v192
    %v201 = vpack.c.b16 %v193, %v193
    %v202 = vpack.c.b16 %v194, %v194
    %v203 = vpack.c.b16 %v195, %v195
    %v204 = vpack.c.b16 %v196, %v196
    %213 = vxpose.xlu0.c.b16.start [1/8] %v197, 128
    %214 = vxpose.xlu0.c.b16.cont [2/8] 0, 128
    %215 = vxpose.xlu0.c.b16.cont [3/8] 0, 128
    %216 = vxpose.xlu0.c.b16.cont [4/8] 0, 128
    %217 = vxpose.xlu0.c.b16.cont [5/8] 0, 128
    %218 = vxpose.xlu0.c.b16.cont [6/8] 0, 128
    %219 = vxpose.xlu0.c.b16.cont [7/8] 0, 128
    %220 = vxpose.xlu0.c.b16.end [8/8] 0, 128
    %v221 = vpop.trf.xlu0
    %v222 = vpop.trf.xlu0
    %v223 = vpop.trf.xlu0
    %v224 = vpop.trf.xlu0
    %v225 = vpop.trf.xlu0
    %v226 = vpop.trf.xlu0
    %v227 = vpop.trf.xlu0
    %v228 = vpop.trf.xlu0
    %229 = vxpose.xlu0.c.b16.start [1/8] %v198, 128
    %230 = vxpose.xlu0.c.b16.cont [2/8] 0, 128
    %231 = vxpose.xlu0.c.b16.cont [3/8] 0, 128
    %232 = vxpose.xlu0.c.b16.cont [4/8] 0, 128
    %233 = vxpose.xlu0.c.b16.cont [5/8] 0, 128
    %234 = vxpose.xlu0.c.b16.cont [6/8] 0, 128
    %235 = vxpose.xlu0.c.b16.cont [7/8] 0, 128
    %236 = vxpose.xlu0.c.b16.end [8/8] 0, 128
    %v237 = vpop.trf.xlu0
    %v238 = vpop.trf.xlu0
    %v239 = vpop.trf.xlu0
    %v240 = vpop.trf.xlu0
    %v241 = vpop.trf.xlu0
    %v242 = vpop.trf.xlu0
    %v243 = vpop.trf.xlu0
    %v244 = vpop.trf.xlu0
    %245 = vxpose.xlu0.c.b16.start [1/8] %v199, 128
    %246 = vxpose.xlu0.c.b16.cont [2/8] 0, 128
    %247 = vxpose.xlu0.c.b16.cont [3/8] 0, 128
    %248 = vxpose.xlu0.c.b16.cont [4/8] 0, 128
    %249 = vxpose.xlu0.c.b16.cont [5/8] 0, 128
    %250 = vxpose.xlu0.c.b16.cont [6/8] 0, 128
    %251 = vxpose.xlu0.c.b16.cont [7/8] 0, 128
    %252 = vxpose.xlu0.c.b16.end [8/8] 0, 128
    %v253 = vpop.trf.xlu0
    %v254 = vpop.trf.xlu0
    %v255 = vpop.trf.xlu0
    %v256 = vpop.trf.xlu0
    %v257 = vpop.trf.xlu0
    %v258 = vpop.trf.xlu0
    %v259 = vpop.trf.xlu0
    %v260 = vpop.trf.xlu0
    %261 = vxpose.xlu0.c.b16.start [1/8] %v200, 128
    %262 = vxpose.xlu0.c.b16.cont [2/8] 0, 128
    %263 = vxpose.xlu0.c.b16.cont [3/8] 0, 128
    %264 = vxpose.xlu0.c.b16.cont [4/8] 0, 128
    %265 = vxpose.xlu0.c.b16.cont [5/8] 0, 128
    %266 = vxpose.xlu0.c.b16.cont [6/8] 0, 128
    %267 = vxpose.xlu0.c.b16.cont [7/8] 0, 128
    %268 = vxpose.xlu0.c.b16.end [8/8] 0, 128
    %v269 = vpop.trf.xlu0
    %v270 = vpop.trf.xlu0
    %v271 = vpop.trf.xlu0
    %v272 = vpop.trf.xlu0
    %v273 = vpop.trf.xlu0
    %v274 = vpop.trf.xlu0
    %v275 = vpop.trf.xlu0
    %v276 = vpop.trf.xlu0
    %277 = vxpose.xlu0.c.b16.start [1/8] %v201, 128
    %278 = vxpose.xlu0.c.b16.cont [2/8] 0, 128
    %279 = vxpose.xlu0.c.b16.cont [3/8] 0, 128
    %280 = vxpose.xlu0.c.b16.cont [4/8] 0, 128
    %281 = vxpose.xlu0.c.b16.cont [5/8] 0, 128
    %282 = vxpose.xlu0.c.b16.cont [6/8] 0, 128
    %283 = vxpose.xlu0.c.b16.cont [7/8] 0, 128
    %284 = vxpose.xlu0.c.b16.end [8/8] 0, 128
    %v285 = vpop.trf.xlu0
    %v286 = vpop.trf.xlu0
    %v287 = vpop.trf.xlu0
    %v288 = vpop.trf.xlu0
    %v289 = vpop.trf.xlu0
    %v290 = vpop.trf.xlu0
    %v291 = vpop.trf.xlu0
    %v292 = vpop.trf.xlu0
    %293 = vxpose.xlu0.c.b16.start [1/8] %v202, 128
    %294 = vxpose.xlu0.c.b16.cont [2/8] 0, 128
    %295 = vxpose.xlu0.c.b16.cont [3/8] 0, 128
    %296 = vxpose.xlu0.c.b16.cont [4/8] 0, 128
    %297 = vxpose.xlu0.c.b16.cont [5/8] 0, 128
    %298 = vxpose.xlu0.c.b16.cont [6/8] 0, 128
    %299 = vxpose.xlu0.c.b16.cont [7/8] 0, 128
    %300 = vxpose.xlu0.c.b16.end [8/8] 0, 128
    %v301 = vpop.trf.xlu0
    %v302 = vpop.trf.xlu0
    %v303 = vpop.trf.xlu0
    %v304 = vpop.trf.xlu0
    %v305 = vpop.trf.xlu0
    %v306 = vpop.trf.xlu0
    %v307 = vpop.trf.xlu0
    %v308 = vpop.trf.xlu0
    %309 = vxpose.xlu0.c.b16.start [1/8] %v203, 128
    %310 = vxpose.xlu0.c.b16.cont [2/8] 0, 128
    %311 = vxpose.xlu0.c.b16.cont [3/8] 0, 128
    %312 = vxpose.xlu0.c.b16.cont [4/8] 0, 128
    %313 = vxpose.xlu0.c.b16.cont [5/8] 0, 128
    %314 = vxpose.xlu0.c.b16.cont [6/8] 0, 128
    %315 = vxpose.xlu0.c.b16.cont [7/8] 0, 128
    %316 = vxpose.xlu0.c.b16.end [8/8] 0, 128
    %v317 = vpop.trf.xlu0
    %v318 = vpop.trf.xlu0
    %v319 = vpop.trf.xlu0
    %v320 = vpop.trf.xlu0
    %v321 = vpop.trf.xlu0
    %v322 = vpop.trf.xlu0
    %v323 = vpop.trf.xlu0
    %v324 = vpop.trf.xlu0
    %325 = vxpose.xlu0.c.b16.start [1/8] %v204, 128
    %326 = vxpose.xlu0.c.b16.cont [2/8] 0, 128
    %327 = vxpose.xlu0.c.b16.cont [3/8] 0, 128
    %328 = vxpose.xlu0.c.b16.cont [4/8] 0, 128
    %329 = vxpose.xlu0.c.b16.cont [5/8] 0, 128
    %330 = vxpose.xlu0.c.b16.cont [6/8] 0, 128
    %331 = vxpose.xlu0.c.b16.cont [7/8] 0, 128
    %332 = vxpose.xlu0.c.b16.end [8/8] 0, 128
    %v333 = vpop.trf.xlu0
    %v334 = vpop.trf.xlu0
    %v335 = vpop.trf.xlu0
    %v336 = vpop.trf.xlu0
    %v337 = vpop.trf.xlu0
    %v338 = vpop.trf.xlu0
    %v339 = vpop.trf.xlu0
    %v340 = vpop.trf.xlu0
    %v343 = vunpack.c.l.b16 %v151
    %v344 = vunpack.c.l.b16 %v152
    %v345 = vpack.c.b16 %v343, %v343
    %v346 = vpack.c.b16 %v344, %v344
    %347 = vrot.lane.b32.xlu0 %v345, 96
    %v348 = vpop.permute.xlu0 %347
    %349 = vrot.lane.b32.xlu0 %v346, 96
    %v350 = vpop.permute.xlu0 %349
    %353 = vxpose.xlu0.c.b16.start [1/8] %v348, 128
    %354 = vxpose.xlu0.c.b16.cont [2/8] 0, 128
    %355 = vxpose.xlu0.c.b16.cont [3/8] 0, 128
    %356 = vxpose.xlu0.c.b16.cont [4/8] 0, 128
    %357 = vxpose.xlu0.c.b16.cont [5/8] 0, 128
    %358 = vxpose.xlu0.c.b16.cont [6/8] 0, 128
    %359 = vxpose.xlu0.c.b16.cont [7/8] 0, 128
    %360 = vxpose.xlu0.c.b16.end [8/8] 0, 128
    %v361 = vpop.trf.xlu0
    %v362 = vpop.trf.xlu0
    %v363 = vpop.trf.xlu0
    %v364 = vpop.trf.xlu0
    %v365 = vpop.trf.xlu0
    %v366 = vpop.trf.xlu0
    %v367 = vpop.trf.xlu0
    %v368 = vpop.trf.xlu0
    %369 = vxpose.xlu0.c.b16.start [1/8] %v350, 128
    %370 = vxpose.xlu0.c.b16.cont [2/8] 0, 128
    %371 = vxpose.xlu0.c.b16.cont [3/8] 0, 128
    %372 = vxpose.xlu0.c.b16.cont [4/8] 0, 128
    %373 = vxpose.xlu0.c.b16.cont [5/8] 0, 128
    %374 = vxpose.xlu0.c.b16.cont [6/8] 0, 128
    %375 = vxpose.xlu0.c.b16.cont [7/8] 0, 128
    %376 = vxpose.xlu0.c.b16.end [8/8] 0, 128
    %v377 = vpop.trf.xlu0
    %v378 = vpop.trf.xlu0
    %v379 = vpop.trf.xlu0
    %v380 = vpop.trf.xlu0
    %v381 = vpop.trf.xlu0
    %v382 = vpop.trf.xlu0
    %v383 = vpop.trf.xlu0
    %v384 = vpop.trf.xlu0
    %v389 = vunpack.c.l.b16 %v361
    %v390 = vunpack.c.h.b16 %v361
    %v391 = vunpack.c.l.b16 %v362
    %v392 = vunpack.c.h.b16 %v362
    %v393 = vunpack.c.l.b16 %v377
    %v394 = vunpack.c.h.b16 %v377
    %v395 = vunpack.c.l.b16 %v378
    %v396 = vunpack.c.h.b16 %v378
    %v397 = vpack.c.b16 %v389, %v389
    %v398 = vpack.c.b16 %v390, %v390
    %v399 = vpack.c.b16 %v391, %v391
    %v400 = vpack.c.b16 %v392, %v392
    %v401 = vpack.c.b16 %v393, %v393
    %v402 = vpack.c.b16 %v394, %v394
    %v403 = vpack.c.b16 %v395, %v395
    %v404 = vpack.c.b16 %v396, %v396
    %405 = vrot.lane.b32.xlu0 %v345, 64
    %v406 = vpop.permute.xlu0 %405
    %407 = vrot.lane.b32.xlu0 %v346, 64
    %v408 = vpop.permute.xlu0 %407
    %411 = vxpose.xlu0.c.b16.start [1/8] %v406, 128
    %412 = vxpose.xlu0.c.b16.cont [2/8] 0, 128
    %413 = vxpose.xlu0.c.b16.cont [3/8] 0, 128
    %414 = vxpose.xlu0.c.b16.cont [4/8] 0, 128
    %415 = vxpose.xlu0.c.b16.cont [5/8] 0, 128
    %416 = vxpose.xlu0.c.b16.cont [6/8] 0, 128
    %417 = vxpose.xlu0.c.b16.cont [7/8] 0, 128
    %418 = vxpose.xlu0.c.b16.end [8/8] 0, 128
    %v419 = vpop.trf.xlu0
    %v420 = vpop.trf.xlu0
    %v421 = vpop.trf.xlu0
    %v422 = vpop.trf.xlu0
    %v423 = vpop.trf.xlu0
    %v424 = vpop.trf.xlu0
    %v425 = vpop.trf.xlu0
    %v426 = vpop.trf.xlu0
    %427 = vxpose.xlu0.c.b16.start [1/8] %v408, 128
    %428 = vxpose.xlu0.c.b16.cont [2/8] 0, 128
    %429 = vxpose.xlu0.c.b16.cont [3/8] 0, 128
    %430 = vxpose.xlu0.c.b16.cont [4/8] 0, 128
    %431 = vxpose.xlu0.c.b16.cont [5/8] 0, 128
    %432 = vxpose.xlu0.c.b16.cont [6/8] 0, 128
    %433 = vxpose.xlu0.c.b16.cont [7/8] 0, 128
    %434 = vxpose.xlu0.c.b16.end [8/8] 0, 128
    %v435 = vpop.trf.xlu0
    %v436 = vpop.trf.xlu0
    %v437 = vpop.trf.xlu0
    %v438 = vpop.trf.xlu0
    %v439 = vpop.trf.xlu0
    %v440 = vpop.trf.xlu0
    %v441 = vpop.trf.xlu0
    %v442 = vpop.trf.xlu0
    %v447 = vunpack.c.l.b16 %v419
    %v448 = vunpack.c.h.b16 %v419
    %v449 = vunpack.c.l.b16 %v420
    %v450 = vunpack.c.h.b16 %v420
    %v451 = vunpack.c.l.b16 %v435
    %v452 = vunpack.c.h.b16 %v435
    %v453 = vunpack.c.l.b16 %v436
    %v454 = vunpack.c.h.b16 %v436
    %v455 = vpack.c.b16 %v447, %v447
    %v456 = vpack.c.b16 %v448, %v448
    %v457 = vpack.c.b16 %v449, %v449
    %v458 = vpack.c.b16 %v450, %v450
    %v459 = vpack.c.b16 %v451, %v451
    %v460 = vpack.c.b16 %v452, %v452
    %v461 = vpack.c.b16 %v453, %v453
    %v462 = vpack.c.b16 %v454, %v454
    %vm463 = vcmask 64512
    %v465 = vsel %vm463, %v221, 0
    %vm467 = vcmask 1043456
    %v469 = vsel %vm467, %v397, 0
    %471 = vmatpush.bf16.msra.mxu0 0
    %472 = vmatpush.bf16.msra.mxu0 0
    %473 = vmatpush.bf16.msra.mxu0 0
    %474 = vmatpush.bf16.msra.mxu0 0
    %475 = vmatpush.bf16.msra.mxu0 0
    %476 = vmatpush.bf16.msra.mxu0 0
    %477 = vmatpush.bf16.msra.mxu0 0
    %478 = vmatpush.bf16.msra.mxu0 %v469
    %479 = vmatmul.bf16.gmra.mxu0 %v465
    %v480 = vpop.f32.mrf.mxu0
    %v481 = vadd.f32 0.0, %v480
    %v482 = vpop.f32.mrf.mxu0
    %483 = vdwg.mxu0
    %v485 = vsel %vm463, %v237, 0
    %v488 = vsel %vm467, %v398, 0
    %490 = vmatpush.bf16.msra.mxu0 0
    %491 = vmatpush.bf16.msra.mxu0 0
    %492 = vmatpush.bf16.msra.mxu0 0
    %493 = vmatpush.bf16.msra.mxu0 0
    %494 = vmatpush.bf16.msra.mxu0 0
    %495 = vmatpush.bf16.msra.mxu0 0
    %496 = vmatpush.bf16.msra.mxu0 0
    %497 = vmatpush.bf16.msra.mxu0 %v488
    %498 = vmatmul.bf16.gmra.mxu0 %v485
    %v499 = vpop.f32.mrf.mxu0
    %v500 = vadd.f32 0.0, %v499
    %v501 = vpop.f32.mrf.mxu0
    %502 = vdwg.mxu0
    %v504 = vsel %vm463, %v253, 0
    %v507 = vsel %vm467, %v399, 0
    %509 = vmatpush.bf16.msra.mxu0 0
    %510 = vmatpush.bf16.msra.mxu0 0
    %511 = vmatpush.bf16.msra.mxu0 0
    %512 = vmatpush.bf16.msra.mxu0 0
    %513 = vmatpush.bf16.msra.mxu0 0
    %514 = vmatpush.bf16.msra.mxu0 0
    %515 = vmatpush.bf16.msra.mxu0 0
    %516 = vmatpush.bf16.msra.mxu0 %v507
    %517 = vmatmul.bf16.gmra.mxu0 %v504
    %v518 = vpop.f32.mrf.mxu0
    %v519 = vadd.f32 0.0, %v518
    %v520 = vpop.f32.mrf.mxu0
    %521 = vdwg.mxu0
    %v523 = vsel %vm463, %v269, 0
    %v526 = vsel %vm467, %v400, 0
    %528 = vmatpush.bf16.msra.mxu0 0
    %529 = vmatpush.bf16.msra.mxu0 0
    %530 = vmatpush.bf16.msra.mxu0 0
    %531 = vmatpush.bf16.msra.mxu0 0
    %532 = vmatpush.bf16.msra.mxu0 0
    %533 = vmatpush.bf16.msra.mxu0 0
    %534 = vmatpush.bf16.msra.mxu0 0
    %535 = vmatpush.bf16.msra.mxu0 %v526
    %536 = vmatmul.bf16.gmra.mxu0 %v523
    %v537 = vpop.f32.mrf.mxu0
    %v538 = vadd.f32 0.0, %v537
    %v539 = vpop.f32.mrf.mxu0
    %540 = vdwg.mxu0
    %v542 = vsel %vm463, %v285, 0
    %v545 = vsel %vm467, %v401, 0
    %547 = vmatpush.bf16.msra.mxu0 0
    %548 = vmatpush.bf16.msra.mxu0 0
    %549 = vmatpush.bf16.msra.mxu0 0
    %550 = vmatpush.bf16.msra.mxu0 0
    %551 = vmatpush.bf16.msra.mxu0 0
    %552 = vmatpush.bf16.msra.mxu0 0
    %553 = vmatpush.bf16.msra.mxu0 0
    %554 = vmatpush.bf16.msra.mxu0 %v545
    %555 = vmatmul.bf16.gmra.mxu0 %v542
    %v556 = vpop.f32.mrf.mxu0
    %v557 = vadd.f32 0.0, %v556
    %v558 = vpop.f32.mrf.mxu0
    %559 = vdwg.mxu0
    %v561 = vsel %vm463, %v301, 0
    %v564 = vsel %vm467, %v402, 0
    %566 = vmatpush.bf16.msra.mxu0 0
    %567 = vmatpush.bf16.msra.mxu0 0
    %568 = vmatpush.bf16.msra.mxu0 0
    %569 = vmatpush.bf16.msra.mxu0 0
    %570 = vmatpush.bf16.msra.mxu0 0
    %571 = vmatpush.bf16.msra.mxu0 0
    %572 = vmatpush.bf16.msra.mxu0 0
    %573 = vmatpush.bf16.msra.mxu0 %v564
    %574 = vmatmul.bf16.gmra.mxu0 %v561
    %v575 = vpop.f32.mrf.mxu0
    %v576 = vadd.f32 0.0, %v575
    %v577 = vpop.f32.mrf.mxu0
    %578 = vdwg.mxu0
    %v580 = vsel %vm463, %v317, 0
    %v583 = vsel %vm467, %v403, 0
    %585 = vmatpush.bf16.msra.mxu0 0
    %586 = vmatpush.bf16.msra.mxu0 0
    %587 = vmatpush.bf16.msra.mxu0 0
    %588 = vmatpush.bf16.msra.mxu0 0
    %589 = vmatpush.bf16.msra.mxu0 0
    %590 = vmatpush.bf16.msra.mxu0 0
    %591 = vmatpush.bf16.msra.mxu0 0
    %592 = vmatpush.bf16.msra.mxu0 %v583
    %593 = vmatmul.bf16.gmra.mxu0 %v580
    %v594 = vpop.f32.mrf.mxu0
    %v595 = vadd.f32 0.0, %v594
    %v596 = vpop.f32.mrf.mxu0
    %597 = vdwg.mxu0
    %v599 = vsel %vm463, %v333, 0
    %v602 = vsel %vm467, %v404, 0
    %604 = vmatpush.bf16.msra.mxu0 0
    %605 = vmatpush.bf16.msra.mxu0 0
    %606 = vmatpush.bf16.msra.mxu0 0
    %607 = vmatpush.bf16.msra.mxu0 0
    %608 = vmatpush.bf16.msra.mxu0 0
    %609 = vmatpush.bf16.msra.mxu0 0
    %610 = vmatpush.bf16.msra.mxu0 0
    %611 = vmatpush.bf16.msra.mxu0 %v602
    %612 = vmatmul.bf16.gmra.mxu0 %v599
    %v613 = vpop.f32.mrf.mxu0
    %v614 = vadd.f32 0.0, %v613
    %v615 = vpop.f32.mrf.mxu0
    %616 = vdwg.mxu0
    %v617 = vsel %vm463, %v481, -inf
    %618 = vmax.xlane.f32.xlu0 %v617
    %v619 = vpop.xlane.xlu0 %618
    %v620 = vsel %vm463, %v500, -inf
    %621 = vmax.xlane.f32.xlu0 %v620
    %v622 = vpop.xlane.xlu0 %621
    %v623 = vsel %vm463, %v519, -inf
    %624 = vmax.xlane.f32.xlu0 %v623
    %v625 = vpop.xlane.xlu0 %624
    %v626 = vsel %vm463, %v538, -inf
    %627 = vmax.xlane.f32.xlu0 %v626
    %v628 = vpop.xlane.xlu0 %627
    %v629 = vsel %vm463, %v557, -inf
    %630 = vmax.xlane.f32.xlu0 %v629
    %v631 = vpop.xlane.xlu0 %630
    %v632 = vsel %vm463, %v576, -inf
    %633 = vmax.xlane.f32.xlu0 %v632
    %v634 = vpop.xlane.xlu0 %633
    %v635 = vsel %vm463, %v595, -inf
    %636 = vmax.xlane.f32.xlu0 %v635
    %v637 = vpop.xlane.xlu0 %636
    %v638 = vsel %vm463, %v614, -inf
    %639 = vmax.xlane.f32.xlu0 %v638
    %v640 = vpop.xlane.xlu0 %639
    %v641 = vsub.f32 %v481, %v619
    %v642 = vsub.f32 %v500, %v622
    %v643 = vsub.f32 %v519, %v625
    %v644 = vsub.f32 %v538, %v628
    %v645 = vsub.f32 %v557, %v631
    %v646 = vsub.f32 %v576, %v634
    %v647 = vsub.f32 %v595, %v637
    %v648 = vsub.f32 %v614, %v640
    %v649 = vmul.f32 %v641, 1.442695
    %v650 = vpow.pop %v649
    %v651 = vmul.f32 %v642, 1.442695
    %v652 = vpow.pop %v651
    %v653 = vmul.f32 %v643, 1.442695
    %v654 = vpow.pop %v653
    %v655 = vmul.f32 %v644, 1.442695
    %v656 = vpow.pop %v655
    %v657 = vmul.f32 %v645, 1.442695
    %v658 = vpow.pop %v657
    %v659 = vmul.f32 %v646, 1.442695
    %v660 = vpow.pop %v659
    %v661 = vmul.f32 %v647, 1.442695
    %v662 = vpow.pop %v661
    %v663 = vmul.f32 %v648, 1.442695
    %v664 = vpow.pop %v663
    %v665 = vsel %vm463, %v650, 0.0
    %666 = vadd.xlane.f32.xlu0 %v665
    %v667 = vpop.xlane.xlu0 %666
    %v668 = vsel %vm463, %v652, 0.0
    %669 = vadd.xlane.f32.xlu0 %v668
    %v670 = vpop.xlane.xlu0 %669
    %v671 = vsel %vm463, %v654, 0.0
    %672 = vadd.xlane.f32.xlu0 %v671
    %v673 = vpop.xlane.xlu0 %672
    %v674 = vsel %vm463, %v656, 0.0
    %675 = vadd.xlane.f32.xlu0 %v674
    %v676 = vpop.xlane.xlu0 %675
    %v677 = vsel %vm463, %v658, 0.0
    %678 = vadd.xlane.f32.xlu0 %v677
    %v679 = vpop.xlane.xlu0 %678
    %v680 = vsel %vm463, %v660, 0.0
    %681 = vadd.xlane.f32.xlu0 %v680
    %v682 = vpop.xlane.xlu0 %681
    %v683 = vsel %vm463, %v662, 0.0
    %684 = vadd.xlane.f32.xlu0 %v683
    %v685 = vpop.xlane.xlu0 %684
    %v686 = vsel %vm463, %v664, 0.0
    %687 = vadd.xlane.f32.xlu0 %v686
    %v688 = vpop.xlane.xlu0 %687
    %v689 = vrcp.pop %v667
    %v690 = vrcp.pop %v670
    %v691 = vrcp.pop %v673
    %v692 = vrcp.pop %v676
    %v693 = vrcp.pop %v679
    %v694 = vrcp.pop %v682
    %v695 = vrcp.pop %v685
    %v696 = vrcp.pop %v688
    %v697 = vmul.f32 %v650, %v689
    %v698 = vmul.f32 %v652, %v690
    %v699 = vmul.f32 %v654, %v691
    %v700 = vmul.f32 %v656, %v692
    %v701 = vmul.f32 %v658, %v693
    %v702 = vmul.f32 %v660, %v694
    %v703 = vmul.f32 %v662, %v695
    %v704 = vmul.f32 %v664, %v696
    %v705 = vpack.c.bf16 %v697, %v697
    %v706 = vpack.c.bf16 %v698, %v698
    %v707 = vpack.c.bf16 %v699, %v699
    %v708 = vpack.c.bf16 %v700, %v700
    %v709 = vpack.c.bf16 %v701, %v701
    %v710 = vpack.c.bf16 %v702, %v702
    %v711 = vpack.c.bf16 %v703, %v703
    %v712 = vpack.c.bf16 %v704, %v704
    %v714 = vsel %vm463, %v705, 0
    %v717 = vsel %vm463, %v455, 0
    %719 = vmatpush.bf16.xpose.msra.mxu0 0
    %720 = vmatpush.bf16.xpose.msra.mxu0 0
    %721 = vmatpush.bf16.xpose.msra.mxu0 0
    %722 = vmatpush.bf16.xpose.msra.mxu0 0
    %723 = vmatpush.bf16.xpose.msra.mxu0 0
    %724 = vmatpush.bf16.xpose.msra.mxu0 0
    %725 = vmatpush.bf16.xpose.msra.mxu0 0
    %726 = vmatpush.bf16.xpose.msra.mxu0 %v717
    %727 = vmatmul.bf16.gmra.mxu0 %v714
    %v728 = vpop.f32.mrf.mxu0
    %v729 = vadd.f32 0.0, %v728
    %v730 = vpop.f32.mrf.mxu0
    %731 = vdwg.mxu0
    %v733 = vsel %vm463, %v706, 0
    %v736 = vsel %vm463, %v456, 0
    %738 = vmatpush.bf16.xpose.msra.mxu0 0
    %739 = vmatpush.bf16.xpose.msra.mxu0 0
    %740 = vmatpush.bf16.xpose.msra.mxu0 0
    %741 = vmatpush.bf16.xpose.msra.mxu0 0
    %742 = vmatpush.bf16.xpose.msra.mxu0 0
    %743 = vmatpush.bf16.xpose.msra.mxu0 0
    %744 = vmatpush.bf16.xpose.msra.mxu0 0
    %745 = vmatpush.bf16.xpose.msra.mxu0 %v736
    %746 = vmatmul.bf16.gmra.mxu0 %v733
    %v747 = vpop.f32.mrf.mxu0
    %v748 = vadd.f32 0.0, %v747
    %v749 = vpop.f32.mrf.mxu0
    %750 = vdwg.mxu0
    %v752 = vsel %vm463, %v707, 0
    %v755 = vsel %vm463, %v457, 0
    %757 = vmatpush.bf16.xpose.msra.mxu0 0
    %758 = vmatpush.bf16.xpose.msra.mxu0 0
    %759 = vmatpush.bf16.xpose.msra.mxu0 0
    %760 = vmatpush.bf16.xpose.msra.mxu0 0
    %761 = vmatpush.bf16.xpose.msra.mxu0 0
    %762 = vmatpush.bf16.xpose.msra.mxu0 0
    %763 = vmatpush.bf16.xpose.msra.mxu0 0
    %764 = vmatpush.bf16.xpose.msra.mxu0 %v755
    %765 = vmatmul.bf16.gmra.mxu0 %v752
    %v766 = vpop.f32.mrf.mxu0
    %v767 = vadd.f32 0.0, %v766
    %v768 = vpop.f32.mrf.mxu0
    %769 = vdwg.mxu0
    %v771 = vsel %vm463, %v708, 0
    %v774 = vsel %vm463, %v458, 0
    %776 = vmatpush.bf16.xpose.msra.mxu0 0
    %777 = vmatpush.bf16.xpose.msra.mxu0 0
    %778 = vmatpush.bf16.xpose.msra.mxu0 0
    %779 = vmatpush.bf16.xpose.msra.mxu0 0
    %780 = vmatpush.bf16.xpose.msra.mxu0 0
    %781 = vmatpush.bf16.xpose.msra.mxu0 0
    %782 = vmatpush.bf16.xpose.msra.mxu0 0
    %783 = vmatpush.bf16.xpose.msra.mxu0 %v774
    %784 = vmatmul.bf16.gmra.mxu0 %v771
    %v785 = vpop.f32.mrf.mxu0
    %v786 = vadd.f32 0.0, %v785
    %v787 = vpop.f32.mrf.mxu0
    %788 = vdwg.mxu0
    %v790 = vsel %vm463, %v709, 0
    %v793 = vsel %vm463, %v459, 0
    %795 = vmatpush.bf16.xpose.msra.mxu0 0
    %796 = vmatpush.bf16.xpose.msra.mxu0 0
    %797 = vmatpush.bf16.xpose.msra.mxu0 0
    %798 = vmatpush.bf16.xpose.msra.mxu0 0
    %799 = vmatpush.bf16.xpose.msra.mxu0 0
    %800 = vmatpush.bf16.xpose.msra.mxu0 0
    %801 = vmatpush.bf16.xpose.msra.mxu0 0
    %802 = vmatpush.bf16.xpose.msra.mxu0 %v793
    %803 = vmatmul.bf16.gmra.mxu0 %v790
    %v804 = vpop.f32.mrf.mxu0
    %v805 = vadd.f32 0.0, %v804
    %v806 = vpop.f32.mrf.mxu0
    %807 = vdwg.mxu0
    %v809 = vsel %vm463, %v710, 0
    %v812 = vsel %vm463, %v460, 0
    %814 = vmatpush.bf16.xpose.msra.mxu0 0
    %815 = vmatpush.bf16.xpose.msra.mxu0 0
    %816 = vmatpush.bf16.xpose.msra.mxu0 0
    %817 = vmatpush.bf16.xpose.msra.mxu0 0
    %818 = vmatpush.bf16.xpose.msra.mxu0 0
    %819 = vmatpush.bf16.xpose.msra.mxu0 0
    %820 = vmatpush.bf16.xpose.msra.mxu0 0
    %821 = vmatpush.bf16.xpose.msra.mxu0 %v812
    %822 = vmatmul.bf16.gmra.mxu0 %v809
    %v823 = vpop.f32.mrf.mxu0
    %v824 = vadd.f32 0.0, %v823
    %v825 = vpop.f32.mrf.mxu0
    %826 = vdwg.mxu0
    %v828 = vsel %vm463, %v711, 0
    %v831 = vsel %vm463, %v461, 0
    %833 = vmatpush.bf16.xpose.msra.mxu0 0
    %834 = vmatpush.bf16.xpose.msra.mxu0 0
    %835 = vmatpush.bf16.xpose.msra.mxu0 0
    %836 = vmatpush.bf16.xpose.msra.mxu0 0
    %837 = vmatpush.bf16.xpose.msra.mxu0 0
    %838 = vmatpush.bf16.xpose.msra.mxu0 0
    %839 = vmatpush.bf16.xpose.msra.mxu0 0
    %840 = vmatpush.bf16.xpose.msra.mxu0 %v831
    %841 = vmatmul.bf16.gmra.mxu0 %v828
    %v842 = vpop.f32.mrf.mxu0
    %v843 = vadd.f32 0.0, %v842
    %v844 = vpop.f32.mrf.mxu0
    %845 = vdwg.mxu0
    %v847 = vsel %vm463, %v712, 0
    %v850 = vsel %vm463, %v462, 0
    %852 = vmatpush.bf16.xpose.msra.mxu0 0
    %853 = vmatpush.bf16.xpose.msra.mxu0 0
    %854 = vmatpush.bf16.xpose.msra.mxu0 0
    %855 = vmatpush.bf16.xpose.msra.mxu0 0
    %856 = vmatpush.bf16.xpose.msra.mxu0 0
    %857 = vmatpush.bf16.xpose.msra.mxu0 0
    %858 = vmatpush.bf16.xpose.msra.mxu0 0
    %859 = vmatpush.bf16.xpose.msra.mxu0 %v850
    %860 = vmatmul.bf16.gmra.mxu0 %v847
    %v861 = vpop.f32.mrf.mxu0
    %v862 = vadd.f32 0.0, %v861
    %v863 = vpop.f32.mrf.mxu0
    %864 = vdwg.mxu0
    %v865 = vpack.c.bf16 %v729, %v729
    %v866 = vpack.c.bf16 %v748, %v748
    %v867 = vpack.c.bf16 %v767, %v767
    %v868 = vpack.c.bf16 %v786, %v786
    %v869 = vpack.c.bf16 %v805, %v805
    %v870 = vpack.c.bf16 %v824, %v824
    %v871 = vpack.c.bf16 %v843, %v843
    %v872 = vpack.c.bf16 %v862, %v862
    %873 = vxpose.xlu0.c.b16.start [1/8] %v865, 128
    %874 = vxpose.xlu0.c.b16.cont [2/8] 0, 128
    %875 = vxpose.xlu0.c.b16.cont [3/8] 0, 128
    %876 = vxpose.xlu0.c.b16.cont [4/8] 0, 128
    %877 = vxpose.xlu0.c.b16.cont [5/8] 0, 128
    %878 = vxpose.xlu0.c.b16.cont [6/8] 0, 128
    %879 = vxpose.xlu0.c.b16.cont [7/8] 0, 128
    %880 = vxpose.xlu0.c.b16.end [8/8] 0, 128
    %v881 = vpop.trf.xlu0
    %v882 = vpop.trf.xlu0
    %v883 = vpop.trf.xlu0
    %v884 = vpop.trf.xlu0
    %v885 = vpop.trf.xlu0
    %v886 = vpop.trf.xlu0
    %v887 = vpop.trf.xlu0
    %v888 = vpop.trf.xlu0
    %889 = vxpose.xlu0.c.b16.start [1/8] %v866, 128
    %890 = vxpose.xlu0.c.b16.cont [2/8] 0, 128
    %891 = vxpose.xlu0.c.b16.cont [3/8] 0, 128
    %892 = vxpose.xlu0.c.b16.cont [4/8] 0, 128
    %893 = vxpose.xlu0.c.b16.cont [5/8] 0, 128
    %894 = vxpose.xlu0.c.b16.cont [6/8] 0, 128
    %895 = vxpose.xlu0.c.b16.cont [7/8] 0, 128
    %896 = vxpose.xlu0.c.b16.end [8/8] 0, 128
    %v897 = vpop.trf.xlu0
    %v898 = vpop.trf.xlu0
    %v899 = vpop.trf.xlu0
    %v900 = vpop.trf.xlu0
    %v901 = vpop.trf.xlu0
    %v902 = vpop.trf.xlu0
    %v903 = vpop.trf.xlu0
    %v904 = vpop.trf.xlu0
    %905 = vxpose.xlu0.c.b16.start [1/8] %v867, 128
    %906 = vxpose.xlu0.c.b16.cont [2/8] 0, 128
    %907 = vxpose.xlu0.c.b16.cont [3/8] 0, 128
    %908 = vxpose.xlu0.c.b16.cont [4/8] 0, 128
    %909 = vxpose.xlu0.c.b16.cont [5/8] 0, 128
    %910 = vxpose.xlu0.c.b16.cont [6/8] 0, 128
    %911 = vxpose.xlu0.c.b16.cont [7/8] 0, 128
    %912 = vxpose.xlu0.c.b16.end [8/8] 0, 128
    %v913 = vpop.trf.xlu0
    %v914 = vpop.trf.xlu0
    %v915 = vpop.trf.xlu0
    %v916 = vpop.trf.xlu0
    %v917 = vpop.trf.xlu0
    %v918 = vpop.trf.xlu0
    %v919 = vpop.trf.xlu0
    %v920 = vpop.trf.xlu0
    %921 = vxpose.xlu0.c.b16.start [1/8] %v868, 128
    %922 = vxpose.xlu0.c.b16.cont [2/8] 0, 128
    %923 = vxpose.xlu0.c.b16.cont [3/8] 0, 128
    %924 = vxpose.xlu0.c.b16.cont [4/8] 0, 128
    %925 = vxpose.xlu0.c.b16.cont [5/8] 0, 128
    %926 = vxpose.xlu0.c.b16.cont [6/8] 0, 128
    %927 = vxpose.xlu0.c.b16.cont [7/8] 0, 128
    %928 = vxpose.xlu0.c.b16.end [8/8] 0, 128
    %v929 = vpop.trf.xlu0
    %v930 = vpop.trf.xlu0
    %v931 = vpop.trf.xlu0
    %v932 = vpop.trf.xlu0
    %v933 = vpop.trf.xlu0
    %v934 = vpop.trf.xlu0
    %v935 = vpop.trf.xlu0
    %v936 = vpop.trf.xlu0
    %937 = vxpose.xlu0.c.b16.start [1/8] %v869, 128
    %938 = vxpose.xlu0.c.b16.cont [2/8] 0, 128
    %939 = vxpose.xlu0.c.b16.cont [3/8] 0, 128
    %940 = vxpose.xlu0.c.b16.cont [4/8] 0, 128
    %941 = vxpose.xlu0.c.b16.cont [5/8] 0, 128
    %942 = vxpose.xlu0.c.b16.cont [6/8] 0, 128
    %943 = vxpose.xlu0.c.b16.cont [7/8] 0, 128
    %944 = vxpose.xlu0.c.b16.end [8/8] 0, 128
    %v945 = vpop.trf.xlu0
    %v946 = vpop.trf.xlu0
    %v947 = vpop.trf.xlu0
    %v948 = vpop.trf.xlu0
    %v949 = vpop.trf.xlu0
    %v950 = vpop.trf.xlu0
    %v951 = vpop.trf.xlu0
    %v952 = vpop.trf.xlu0
    %953 = vxpose.xlu0.c.b16.start [1/8] %v870, 128
    %954 = vxpose.xlu0.c.b16.cont [2/8] 0, 128
    %955 = vxpose.xlu0.c.b16.cont [3/8] 0, 128
    %956 = vxpose.xlu0.c.b16.cont [4/8] 0, 128
    %957 = vxpose.xlu0.c.b16.cont [5/8] 0, 128
    %958 = vxpose.xlu0.c.b16.cont [6/8] 0, 128
    %959 = vxpose.xlu0.c.b16.cont [7/8] 0, 128
    %960 = vxpose.xlu0.c.b16.end [8/8] 0, 128
    %v961 = vpop.trf.xlu0
    %v962 = vpop.trf.xlu0
    %v963 = vpop.trf.xlu0
    %v964 = vpop.trf.xlu0
    %v965 = vpop.trf.xlu0
    %v966 = vpop.trf.xlu0
    %v967 = vpop.trf.xlu0
    %v968 = vpop.trf.xlu0
    %969 = vxpose.xlu0.c.b16.start [1/8] %v871, 128
    %970 = vxpose.xlu0.c.b16.cont [2/8] 0, 128
    %971 = vxpose.xlu0.c.b16.cont [3/8] 0, 128
    %972 = vxpose.xlu0.c.b16.cont [4/8] 0, 128
    %973 = vxpose.xlu0.c.b16.cont [5/8] 0, 128
    %974 = vxpose.xlu0.c.b16.cont [6/8] 0, 128
    %975 = vxpose.xlu0.c.b16.cont [7/8] 0, 128
    %976 = vxpose.xlu0.c.b16.end [8/8] 0, 128
    %v977 = vpop.trf.xlu0
    %v978 = vpop.trf.xlu0
    %v979 = vpop.trf.xlu0
    %v980 = vpop.trf.xlu0
    %v981 = vpop.trf.xlu0
    %v982 = vpop.trf.xlu0
    %v983 = vpop.trf.xlu0
    %v984 = vpop.trf.xlu0
    %985 = vxpose.xlu0.c.b16.start [1/8] %v872, 128
    %986 = vxpose.xlu0.c.b16.cont [2/8] 0, 128
    %987 = vxpose.xlu0.c.b16.cont [3/8] 0, 128
    %988 = vxpose.xlu0.c.b16.cont [4/8] 0, 128
    %989 = vxpose.xlu0.c.b16.cont [5/8] 0, 128
    %990 = vxpose.xlu0.c.b16.cont [6/8] 0, 128
    %991 = vxpose.xlu0.c.b16.cont [7/8] 0, 128
    %992 = vxpose.xlu0.c.b16.end [8/8] 0, 128
    %v993 = vpop.trf.xlu0
    %v994 = vpop.trf.xlu0
    %v995 = vpop.trf.xlu0
    %v996 = vpop.trf.xlu0
    %v997 = vpop.trf.xlu0
    %v998 = vpop.trf.xlu0
    %v999 = vpop.trf.xlu0
    %v1000 = vpop.trf.xlu0
    %v1009 = vunpack.c.l.b16 %v881
    %v1010 = vunpack.c.l.b16 %v897
    %v1011 = vunpack.c.l.b16 %v913
    %v1012 = vunpack.c.l.b16 %v929
    %v1013 = vunpack.c.l.b16 %v945
    %v1014 = vunpack.c.l.b16 %v961
    %v1015 = vunpack.c.l.b16 %v977
    %v1016 = vunpack.c.l.b16 %v993
    %v1017 = vpack.c.b16 %v1010, %v1009
    %v1018 = vpack.c.b16 %v1012, %v1011
    %v1019 = vpack.c.b16 %v1014, %v1013
    %v1020 = vpack.c.b16 %v1016, %v1015
    %1025 = vxpose.xlu0.c.b16.start [1/8] %v1017, 128
    %1026 = vxpose.xlu0.c.b16.cont [2/8] %v1018, 128
    %1027 = vxpose.xlu0.c.b16.cont [3/8] 0, 128
    %1028 = vxpose.xlu0.c.b16.cont [4/8] 0, 128
    %1029 = vxpose.xlu0.c.b16.cont [5/8] 0, 128
    %1030 = vxpose.xlu0.c.b16.cont [6/8] 0, 128
    %1031 = vxpose.xlu0.c.b16.cont [7/8] 0, 128
    %1032 = vxpose.xlu0.c.b16.end [8/8] 0, 128
    %v1033 = vpop.trf.xlu0
    %v1034 = vpop.trf.xlu0
    %v1035 = vpop.trf.xlu0
    %v1036 = vpop.trf.xlu0
    %v1037 = vpop.trf.xlu0
    %v1038 = vpop.trf.xlu0
    %v1039 = vpop.trf.xlu0
    %v1040 = vpop.trf.xlu0
    %1041 = vxpose.xlu0.c.b16.start [1/8] %v1019, 128
    %1042 = vxpose.xlu0.c.b16.cont [2/8] %v1020, 128
    %1043 = vxpose.xlu0.c.b16.cont [3/8] 0, 128
    %1044 = vxpose.xlu0.c.b16.cont [4/8] 0, 128
    %1045 = vxpose.xlu0.c.b16.cont [5/8] 0, 128
    %1046 = vxpose.xlu0.c.b16.cont [6/8] 0, 128
    %1047 = vxpose.xlu0.c.b16.cont [7/8] 0, 128
    %1048 = vxpose.xlu0.c.b16.end [8/8] 0, 128
    %v1049 = vpop.trf.xlu0
    %v1050 = vpop.trf.xlu0
    %v1051 = vpop.trf.xlu0
    %v1052 = vpop.trf.xlu0
    %v1053 = vpop.trf.xlu0
    %v1054 = vpop.trf.xlu0
    %v1055 = vpop.trf.xlu0
    %v1056 = vpop.trf.xlu0
    %v1057 = vld [vmem:[%s5] sm:$0xf]
    %v1058 = vld [vmem:[%s5 + $0x4] sm:$0xf]
    %v1059 = vld [vmem:[%s5 + $0x8] sm:$0xf]
    %v1060 = vld [vmem:[%s5 + $0xc] sm:$0xf]
    %v1061 = vld [vmem:[%s6] sm:$0x1]
    %v1063 = vperm.slane %v1061, 0
    %v1067 = vunpack.c.l.b16 %v1033
    %v1068 = vunpack.c.l.b16 %v1049
    %v1069 = vpack.c.b16 %v1068, %v1067
    %v1074 = vunpack.c.l.b16 %v1057
    %v1075 = vunpack.c.l.b16 %v1058
    %v1076 = vunpack.c.l.b16 %v1059
    %v1077 = vunpack.c.l.b16 %v1060
    %v1078 = vpack.c.b16 %v1075, %v1074
    %v1079 = vpack.c.b16 %v1077, %v1076
    %v1083 = vsel %vm51, %v1069, 0
    %1085 = vmatpush.bf16.msra.mxu0 0
    %1086 = vmatpush.bf16.msra.mxu0 0
    %1087 = vmatpush.bf16.msra.mxu0 0
    %1088 = vmatpush.bf16.msra.mxu0 0
    %1089 = vmatpush.bf16.msra.mxu0 0
    %1090 = vmatpush.bf16.msra.mxu0 0
    %1091 = vmatpush.bf16.msra.mxu0 %v1079
    %1092 = vmatpush.bf16.msra.mxu0 %v1078
    %1093 = vmatmul.bf16.gmra.mxu0 %v1083
    %v1094 = vpop.f32.mrf.mxu0
    %v1095 = vadd.f32 %v1063, %v1094
    %v1096 = vpop.f32.mrf.mxu0
    %v1097 = vadd.f32 %v1063, %v1096
    %1098 = vdwg.mxu0
    %v1099 = vadd.f32 %v47, %v1095
    %v1100 = vadd.f32 %v48, %v1097
    %v1101 = vld [vmem:[%s7] sm:$0x1]
    %v1102 = vld [vmem:[%s8] sm:$0x1]
    %v1103 = vsel %vm51, %v1099, 0.0
    %1104 = vadd.xlane.f32.xlu0 %v1103
    %v1105 = vpop.xlane.xlu0 %1104
    %v1106 = vsel %vm51, %v1100, 0.0
    %1107 = vadd.xlane.f32.xlu0 %v1106
    %v1108 = vpop.xlane.xlu0 %1107
    %v1109 = vmul.f32 %v1105, %v64
    %v1110 = vmul.f32 %v1108, %v64
    %v1111 = vsub.f32 %v1099, %v1109
    %v1112 = vsub.f32 %v1100, %v1110
    %v1113 = vmul.f32 %v1111, %v1111
    %v1114 = vmul.f32 %v1112, %v1112
    %v1115 = vsel %vm51, %v1113, 0.0
    %1116 = vadd.xlane.f32.xlu0 %v1115
    %v1117 = vpop.xlane.xlu0 %1116
    %v1118 = vsel %vm51, %v1114, 0.0
    %1119 = vadd.xlane.f32.xlu0 %v1118
    %v1120 = vpop.xlane.xlu0 %1119
    %v1121 = vmul.f32 %v1117, %v64
    %v1122 = vmul.f32 %v1120, %v64
    %v1123 = vadd.f32 %v1121, 1e-05
    %v1124 = vadd.f32 %v1122, 1e-05
    %v1125 = vrsqrt.pop %v1123
    %v1126 = vmul.f32 %v1125, %v1123
    %v1127 = vmul.f32 %v1126, %v1125
    %v1128 = vmul.f32 0.5, %v1127
    %v1129 = vsub.f32 1.5, %v1128
    %v1130 = vmul.f32 %v1125, %v1129
    %vm1131 = vweird.f32 %v1123
    %vm1132 = vweird.f32 %v1125
    %vm1133 = vmor %vm1131, %vm1132
    %v1134 = vsel %vm1133, %v1125, %v1130
    %v1135 = vrsqrt.pop %v1124
    %v1136 = vmul.f32 %v1135, %v1124
    %v1137 = vmul.f32 %v1136, %v1135
    %v1138 = vmul.f32 0.5, %v1137
    %v1139 = vsub.f32 1.5, %v1138
    %v1140 = vmul.f32 %v1135, %v1139
    %vm1141 = vweird.f32 %v1124
    %vm1142 = vweird.f32 %v1135
    %vm1143 = vmor %vm1141, %vm1142
    %v1144 = vsel %vm1143, %v1135, %v1140
    %v1145 = vmul.f32 %v1111, %v1134
    %v1146 = vmul.f32 %v1112, %v1144
    %v1148 = vperm.slane %v1101, 0
    %v1150 = vmul.f32 %v1145, %v1148
    %v1151 = vmul.f32 %v1146, %v1148
    %v1153 = vperm.slane %v1102, 0
    %v1155 = vadd.f32 %v1150, %v1153
    %v1156 = vadd.f32 %v1151, %v1153
    %v1157 = vpack.c.bf16 %v1156, %v1155
    %v1158 = vld [vmem:[%s9] sm:$0xf]
    %v1159 = vld [vmem:[%s9 + $0x4] sm:$0xf]
    %v1160 = vld [vmem:[%s9 + $0x8] sm:$0xf]
    %v1161 = vld [vmem:[%s9 + $0xc] sm:$0xf]
    %v1162 = vld [vmem:[%s10] sm:$0x1]
    %v1164 = vperm.slane %v1162, 0
    %v1170 = vunpack.c.l.b16 %v1158
    %v1171 = vunpack.c.l.b16 %v1159
    %v1172 = vunpack.c.l.b16 %v1160
    %v1173 = vunpack.c.l.b16 %v1161
    %v1174 = vpack.c.b16 %v1171, %v1170
    %v1175 = vpack.c.b16 %v1173, %v1172
    %v1179 = vsel %vm51, %v1157, 0
    %1181 = vmatpush.bf16.msra.mxu0 0
    %1182 = vmatpush.bf16.msra.mxu0 0
    %1183 = vmatpush.bf16.msra.mxu0 0
    %1184 = vmatpush.bf16.msra.mxu0 0
    %1185 = vmatpush.bf16.msra.mxu0 0
    %1186 = vmatpush.bf16.msra.mxu0 0
    %1187 = vmatpush.bf16.msra.mxu0 %v1175
    %1188 = vmatpush.bf16.msra.mxu0 %v1174
    %1189 = vmatmul.bf16.gmra.mxu0 %v1179
    %v1190 = vpop.f32.mrf.mxu0
    %v1191 = vadd.f32 %v1164, %v1190
    %v1192 = vpop.f32.mrf.mxu0
    %v1193 = vadd.f32 %v1164, %v1192
    %1194 = vdwg.mxu0
    %v1195 = vpack.c.bf16 %v1191, %v1191
    %v1196 = vpack.c.bf16 %v1193, %v1193
    %v1197 = vunpack.c.l.bf16 %v1195
    %v1198 = vunpack.c.l.bf16 %v1196
    %v1199 = vmul.f32 %v1197, 1.703125
    %v1200 = vmul.f32 %v1198, 1.703125
    %v1201 = vpack.c.bf16 %v1199, %v1199
    %v1202 = vpack.c.bf16 %v1200, %v1200
    %v1203 = vxor.u32 %v1201, 2147516416
    %v1204 = vxor.u32 %v1202, 2147516416
    %v1205 = vunpack.c.l.bf16 %v1203
    %v1206 = vunpack.c.l.bf16 %v1204
    %v1207 = vmul.f32 %v1205, 1.442695
    %v1208 = vpow.pop %v1207
    %v1209 = vmul.f32 %v1206, 1.442695
    %v1210 = vpow.pop %v1209
    %v1211 = vpack.c.bf16 %v1208, %v1208
    %v1212 = vpack.c.bf16 %v1210, %v1210
    %v1213 = vunpack.c.l.bf16 %v1211
    %v1214 = vunpack.c.l.bf16 %v1212
    %v1215 = vadd.f32 %v1213, 1.0
    %v1216 = vadd.f32 %v1214, 1.0
    %v1217 = vpack.c.bf16 %v1215, %v1215
    %v1218 = vpack.c.bf16 %v1216, %v1216
    %v1219 = vunpack.c.h.bf16 1065369472
    %v1220 = vunpack.c.l.bf16 1065369472
    %v1221 = vunpack.c.h.bf16 %v1217
    %v1222 = vunpack.c.l.bf16 %v1217
    %v1223 = vrcp.pop %v1221
    %v1224 = vmul.f32 %v1219, %v1223
    %v1225 = vrcp.pop %v1222
    %v1226 = vmul.f32 %v1220, %v1225
    %v1227 = vpack.c.bf16 %v1224, %v1226
    %v1228 = vunpack.c.h.bf16 %v1218
    %v1229 = vunpack.c.l.bf16 %v1218
    %v1230 = vrcp.pop %v1228
    %v1231 = vmul.f32 %v1219, %v1230
    %v1232 = vrcp.pop %v1229
    %v1233 = vmul.f32 %v1220, %v1232
    %v1234 = vpack.c.bf16 %v1231, %v1233
    %v1235 = vunpack.c.l.bf16 %v1227
    %v1236 = vunpack.c.l.bf16 %v1234
    %v1237 = vmul.f32 %v1197, %v1235
    %v1238 = vmul.f32 %v1198, %v1236
    %v1239 = vpack.c.bf16 %v1238, %v1237
    %v1240 = vld [vmem:[%s11] sm:$0xf]
    %v1241 = vld [vmem:[%s11 + $0x4] sm:$0xf]
    %v1242 = vld [vmem:[%s11 + $0x8] sm:$0xf]
    %v1243 = vld [vmem:[%s11 + $0xc] sm:$0xf]
    %v1244 = vld [vmem:[%s11 + $0x10] sm:$0xf]
    %v1245 = vld [vmem:[%s11 + $0x14] sm:$0xf]
    %v1246 = vld [vmem:[%s11 + $0x18] sm:$0xf]
    %v1247 = vld [vmem:[%s11 + $0x1c] sm:$0xf]
    %v1248 = vld [vmem:[%s11 + $0x20] sm:$0xf]
    %v1249 = vld [vmem:[%s11 + $0x24] sm:$0xf]
    %v1250 = vld [vmem:[%s11 + $0x28] sm:$0xf]
    %v1251 = vld [vmem:[%s11 + $0x2c] sm:$0xf]
    %v1252 = vld [vmem:[%s11 + $0x30] sm:$0xf]
    %v1253 = vld [vmem:[%s11 + $0x34] sm:$0xf]
    %v1254 = vld [vmem:[%s11 + $0x38] sm:$0xf]
    %v1255 = vld [vmem:[%s11 + $0x3c] sm:$0xf]
    %v1256 = vld [vmem:[%s12] sm:$0x1]
    %v1258 = vperm.slane %v1256, 0
    %v1276 = vunpack.c.l.b16 %v1240
    %v1277 = vunpack.c.l.b16 %v1241
    %v1278 = vunpack.c.l.b16 %v1242
    %v1279 = vunpack.c.l.b16 %v1243
    %v1280 = vunpack.c.l.b16 %v1244
    %v1281 = vunpack.c.l.b16 %v1245
    %v1282 = vunpack.c.l.b16 %v1246
    %v1283 = vunpack.c.l.b16 %v1247
    %v1284 = vunpack.c.l.b16 %v1248
    %v1285 = vunpack.c.l.b16 %v1249
    %v1286 = vunpack.c.l.b16 %v1250
    %v1287 = vunpack.c.l.b16 %v1251
    %v1288 = vunpack.c.l.b16 %v1252
    %v1289 = vunpack.c.l.b16 %v1253
    %v1290 = vunpack.c.l.b16 %v1254
    %v1291 = vunpack.c.l.b16 %v1255
    %v1292 = vpack.c.b16 %v1277, %v1276
    %v1293 = vpack.c.b16 %v1279, %v1278
    %v1294 = vpack.c.b16 %v1281, %v1280
    %v1295 = vpack.c.b16 %v1283, %v1282
    %v1296 = vpack.c.b16 %v1285, %v1284
    %v1297 = vpack.c.b16 %v1287, %v1286
    %v1298 = vpack.c.b16 %v1289, %v1288
    %v1299 = vpack.c.b16 %v1291, %v1290
    %1308 = vmatpush.bf16.msra.mxu0 %v1299
    %1309 = vmatpush.bf16.msra.mxu0 %v1298
    %1310 = vmatpush.bf16.msra.mxu0 %v1297
    %1311 = vmatpush.bf16.msra.mxu0 %v1296
    %1312 = vmatpush.bf16.msra.mxu0 %v1295
    %1313 = vmatpush.bf16.msra.mxu0 %v1294
    %1314 = vmatpush.bf16.msra.mxu0 %v1293
    %1315 = vmatpush.bf16.msra.mxu0 %v1292
    %1316 = vmatmul.bf16.gmra.mxu0 %v1239
    %v1317 = vpop.f32.mrf.mxu0
    %v1318 = vadd.f32 %v1258, %v1317
    %v1319 = vpop.f32.mrf.mxu0
    %v1320 = vadd.f32 %v1258, %v1319
    %1321 = vdwg.mxu0
    %v1322 = vadd.f32 %v1099, %v1318
    %v1323 = vadd.f32 %v1100, %v1320
    %1324 = vst.msk [vmem:[#allocation2] sm:$0xff] %vm51, %v1322
    %1325 = vst.msk [vmem:[#allocation2 + $0x8] sm:$0xff] %vm51, %v1323
    // Predicated region
    $region54: #{tpu_custom_call.1} parent=1 // pred_check
      _
    $region55: #{tpu_custom_call.1} parent=1 // pred_check_branch
      %1327 = sbr.rel (0) target = $region57
    $region56: #{tpu_custom_call.1} parent=1 // pred_region
      %1329 = vsyncadd [#allocation3], 0
      %s1330 = sshll.u32 [#allocation2], 4
      %s1331 = int_to_ptr.vmem [resolvable:$true] %s1330
      %s1332 = sshll.u32 %s13, 4
      %s1333 = int_to_ptr.hbm [resolvable:$true] %s1332
      %1338 = dma.vmem_to_hbm [thread:$0]  %s1331, 256, %s1333, [#allocation3], 128, 128, 8
    $region57: #{tpu_custom_call.1} parent=1 // pred_fallthru
      _
    // Predicated region
    $region58: #{tpu_custom_call.1} parent=1 // pred_check
      _
    $region59: #{tpu_custom_call.1} parent=1 // pred_check_branch
      %1340 = sbr.rel (0) target = $region61
    $region60: #{tpu_custom_call.1} parent=1 // pred_region
      %1342 = dma.done [#allocation3], 256
    $region61: #{tpu_custom_call.1} parent=1 // pred_fallthru
      _
    %1343 = vsyncpa [#allocation3], 1

</llo_original>
